<compile_context>
chip_gen: v7x
topology: tpu7x:2x2x1
jax: 0.10.0
libtpu: 0.0.40
codegen_flags: <defaults>
</compile_context>

<pallas_src>
import functools

import jax
import jax.numpy as jnp
from jax.experimental import pallas as pl
from jax.experimental.pallas import tpu as pltpu

# ----------------------- small synthetic GPT-2 config -----------------------
VOCAB = 128
D_MODEL = 32
N_HEAD = 4
D_HEAD = D_MODEL // N_HEAD
N_LAYER = 2
MAX_LEN = 16          # "max_length" of generate (kept small)
PROMPT_LEN = 8
BATCH = 2
EOS_ID = VOCAB - 1    # pad_token = eos_token, like the original module
LN_EPS = 1e-5

_WEIGHT_NAMES = (
    "ln1_g", "ln1_b", "w_qkv", "b_qkv", "w_proj", "b_proj",
    "ln2_g", "ln2_b", "w_fc", "b_fc", "w_out", "b_out",
    "lnf_g", "lnf_b", "lm_head",
)


# ------------------------------ fused Pallas kernel ------------------------------
def _gpt2_fused_kernel(
    h0_ref, sel_ref,
    ln1_g_ref, ln1_b_ref, w_qkv_ref, b_qkv_ref, w_proj_ref, b_proj_ref,
    ln2_g_ref, ln2_b_ref, w_fc_ref, b_fc_ref, w_out_ref, b_out_ref,
    lnf_g_ref, lnf_b_ref, lm_head_ref,
    out_ref,
):
    """Whole GPT-2 forward for one batch row; writes logits of the selected
    decode position only (lane-dense, VOCAB=128)."""
    h = h0_ref[0]                                   # (T, D)
    T, D = h.shape

    # Causal mask: built ONCE per kernel invocation (not per head / per call).
    row = jax.lax.broadcasted_iota(jnp.int32, (T, T), 0)
    col = jax.lax.broadcasted_iota(jnp.int32, (T, T), 1)
    causal = col <= row
    neg_inf = jnp.float32(-1e30)
    scale = jnp.float32(1.0 / (D_HEAD ** 0.5))

    def layer_norm(x, g, b):
        mean = jnp.mean(x, axis=-1, keepdims=True)
        xc = x - mean
        var = jnp.mean(xc * xc, axis=-1, keepdims=True)
        return xc * jax.lax.rsqrt(var + LN_EPS) * g + b

    # Both transformer layers unrolled inside one kernel: activations never
    # leave VMEM/vregs between layers.
    for li in range(N_LAYER):
        # ---- causal multi-head self-attention ----
        a = layer_norm(h, ln1_g_ref[li], ln1_b_ref[li])                     # (T, D)
        qkv = jnp.dot(a, w_qkv_ref[li],
                      preferred_element_type=jnp.float32) + b_qkv_ref[li]   # (T, 3D)
        q = qkv[:, 0 * D:1 * D]
        k = qkv[:, 1 * D:2 * D]
        v = qkv[:, 2 * D:3 * D]
        w_proj = w_proj_ref[li]                                             # (D, D)
        attn = jnp.zeros((T, D), jnp.float32)
        for hh in range(N_HEAD):                     # static unroll, all in one call
            lo, hi = hh * D_HEAD, (hh + 1) * D_HEAD
            qh, kh, vh = q[:, lo:hi], k[:, lo:hi], v[:, lo:hi]              # (T, Dh)
            s = jax.lax.dot_general(
                qh, kh, (((1,), (1,)), ((), ())),
                preferred_element_type=jnp.float32) * scale                 # (T, T)
            s = jnp.where(causal, s, neg_inf)
            m = jnp.max(s, axis=-1, keepdims=True)
            p = jnp.exp(s - m)
            l = jnp.sum(p, axis=-1, keepdims=True)
            p = p * pl.reciprocal(l, approx=True)                           # EUP slot
            oh = jnp.dot(p, vh, preferred_element_type=jnp.float32)         # (T, Dh)
            # fuse the head-concat into the output projection
            attn = attn + jnp.dot(oh, w_proj[lo:hi, :],
                                  preferred_element_type=jnp.float32)
        h = h + attn + b_proj_ref[li]

        # ---- MLP ----
        a2 = layer_norm(h, ln2_g_ref[li], ln2_b_ref[li])
        ff = jnp.dot(a2, w_fc_ref[li],
                     preferred_element_type=jnp.float32) + b_fc_ref[li]     # (T, 4D)
        ff = jax.nn.gelu(ff, approximate=True)       # tanh approx == GPT-2 gelu_new
        h = h + jnp.dot(ff, w_out_ref[li],
                        preferred_element_type=jnp.float32) + b_out_ref[li]

    hN = layer_norm(h, lnf_g_ref[...], lnf_b_ref[...])                      # (T, D)
    # Select ONLY the current decode row (pos-1) before the lm_head matmul.
    last = jnp.sum(hN * sel_ref[...], axis=0, keepdims=True)                # (1, D)
    out_ref[0] = jnp.dot(last, lm_head_ref[...],
                         preferred_element_type=jnp.float32)                # (1, VOCAB)


def gpt2_step_logits(h0, sel, weights):
    """h0: (B, T, D) embedded tokens; sel: (T, 1) one-hot row selector.
    Returns logits (B, VOCAB) for the selected position — one fused kernel call."""
    B, T, D = h0.shape
    V = weights[-1].shape[-1]
    in_specs = [
        pl.BlockSpec((1, T, D), lambda b: (b, 0, 0)),     # per-batch activation row
        pl.BlockSpec((T, 1), lambda b: (0, 0)),           # shared row selector
    ] + [
        # whole weight arrays, VMEM-resident, same block every grid step
        pl.BlockSpec(w.shape, (lambda b, n=w.ndim: (0,) * n))
        for w in weights
    ]
    out = pl.pallas_call(
        _gpt2_fused_kernel,
        out_shape=jax.ShapeDtypeStruct((B, 1, V), jnp.float32),
        grid=(B,),
        in_specs=in_specs,
        out_specs=pl.BlockSpec((1, 1, V), lambda b: (b, 0, 0)),
        compiler_params=pltpu.CompilerParams(
            dimension_semantics=("parallel",)),           # 2 TCs on v7x
    )(h0, sel, *weights)
    return out[:, 0, :]                                   # (B, VOCAB)


# --------------------------- model parameter setup ---------------------------
def init_params(key):
    def nrm(k, shape, scale=0.02):
        return scale * jax.random.normal(k, shape, dtype=jnp.float32)

    k_wte, k_wpe, k_q, k_p, k_f, k_o = jax.random.split(key, 6)
    wte = nrm(k_wte, (VOCAB, D_MODEL))

    def stack(ks, shape):
        return jnp.stack([nrm(kk, shape) for kk in ks])

    return {
        "wte": wte,
        "wpe": nrm(k_wpe, (MAX_LEN, D_MODEL)),
        "lm_head": wte.T,   # tied output embedding, transposed ONCE (never per step)
        "ln1_g": jnp.ones((N_LAYER, 1, D_MODEL), jnp.float32),
        "ln1_b": jnp.zeros((N_LAYER, 1, D_MODEL), jnp.float32),
        "w_qkv": stack(jax.random.split(k_q, N_LAYER), (D_MODEL, 3 * D_MODEL)),
        "b_qkv": jnp.zeros((N_LAYER, 1, 3 * D_MODEL), jnp.float32),
        "w_proj": stack(jax.random.split(k_p, N_LAYER), (D_MODEL, D_MODEL)),
        "b_proj": jnp.zeros((N_LAYER, 1, D_MODEL), jnp.float32),
        "ln2_g": jnp.ones((N_LAYER, 1, D_MODEL), jnp.float32),
        "ln2_b": jnp.zeros((N_LAYER, 1, D_MODEL), jnp.float32),
        "w_fc": stack(jax.random.split(k_f, N_LAYER), (D_MODEL, 4 * D_MODEL)),
        "b_fc": jnp.zeros((N_LAYER, 1, 4 * D_MODEL), jnp.float32),
        "w_out": stack(jax.random.split(k_o, N_LAYER), (4 * D_MODEL, D_MODEL)),
        "b_out": jnp.zeros((N_LAYER, 1, D_MODEL), jnp.float32),
        "lnf_g": jnp.ones((1, D_MODEL), jnp.float32),
        "lnf_b": jnp.zeros((1, D_MODEL), jnp.float32),
    }


# ------------------------------- generation ----------------------------------
@functools.partial(jax.jit, static_argnames=("max_len",))
def generate(params, prompt, max_len=MAX_LEN):
    """Greedy (num_beams=1) generation fully inside one jit: a single
    lax.fori_loop over decode positions, one fused Pallas kernel per step.
    Returns (generated ids (B, max_len), probs of each generated token)."""
    B, L0 = prompt.shape
    tokens = jnp.full((B, max_len), EOS_ID, dtype=jnp.int32)
    tokens = tokens.at[:, :L0].set(prompt.astype(jnp.int32))
    probs = jnp.zeros((B, max_len), jnp.float32)

    wte = params["wte"]
    wpe = params["wpe"][:max_len]
    weights = tuple(params[name] for name in _WEIGHT_NAMES)
    pos_ids = jnp.arange(max_len, dtype=jnp.int32)

    # TODO(synk): full KV-cache incremental decode is omitted — at T=16 the
    # fused full-sequence forward is a single tiny kernel; a KV cache only
    # pays off for much larger max_len.
    def body(pos, carry):
        tokens, probs = carry
        h0 = wte[tokens] + wpe[None, :, :]                              # (B, T, D)
        sel = (pos_ids == (pos - 1)).astype(jnp.float32)[:, None]       # (T, 1)
        logits = gpt2_step_logits(h0, sel, weights)                     # (B, VOCAB)
        p = jax.nn.softmax(logits, axis=-1)
        nxt = jnp.argmax(logits, axis=-1).astype(jnp.int32)             # (B,)
        p_nxt = jnp.take_along_axis(p, nxt[:, None], axis=-1)           # (B, 1)
        tokens = jax.lax.dynamic_update_slice(tokens, nxt[:, None], (0, pos))
        probs = jax.lax.dynamic_update_slice(probs, p_nxt, (0, pos))
        return tokens, probs

    tokens, probs = jax.lax.fori_loop(L0, max_len, body, (tokens, probs))
    return tokens, probs[:, L0:]


# TODO(synk): tokenize()/decode() use the pretrained GPT-2 BPE tokenizer (string ops);
# no Pallas equivalent — generation operates directly on integer token ids here.

if __name__ == "__main__":
    key = jax.random.PRNGKey(0)
    pkey, xkey = jax.random.split(key)
    params = init_params(pkey)
    # deterministic example "tokenized" prompt, analogous to self.tokenize(batch)
    x = jax.random.randint(xkey, (BATCH, PROMPT_LEN), 0, VOCAB, dtype=jnp.int32)

    generated, probs = generate(params, x, max_len=MAX_LEN)
    generated, probs = jax.block_until_ready((generated, probs))

    assert generated.shape == (BATCH, MAX_LEN)
    assert probs.shape == (BATCH, MAX_LEN - PROMPT_LEN)
    assert bool(jnp.all(jnp.isfinite(probs)))
    assert bool(jnp.all((probs > 0.0) & (probs <= 1.0)))
    print("KERNEL_OK")
</pallas_src>

<mosaic_0001>
module attributes {stable_mosaic.version = 11 : i64} {
  func.func @_gpt2_fused_kernel(%arg0: i32, %arg1: memref<1x16x32xf32, #tpu.memory_space<vmem>>, %arg2: memref<16x1xf32, #tpu.memory_space<vmem>>, %arg3: memref<2x1x32xf32, #tpu.memory_space<vmem>>, %arg4: memref<2x1x32xf32, #tpu.memory_space<vmem>>, %arg5: memref<2x32x96xf32, #tpu.memory_space<vmem>>, %arg6: memref<2x1x96xf32, #tpu.memory_space<vmem>>, %arg7: memref<2x32x32xf32, #tpu.memory_space<vmem>>, %arg8: memref<2x1x32xf32, #tpu.memory_space<vmem>>, %arg9: memref<2x1x32xf32, #tpu.memory_space<vmem>>, %arg10: memref<2x1x32xf32, #tpu.memory_space<vmem>>, %arg11: memref<2x32x128xf32, #tpu.memory_space<vmem>>, %arg12: memref<2x1x128xf32, #tpu.memory_space<vmem>>, %arg13: memref<2x128x32xf32, #tpu.memory_space<vmem>>, %arg14: memref<2x1x32xf32, #tpu.memory_space<vmem>>, %arg15: memref<1x32xf32, #tpu.memory_space<vmem>>, %arg16: memref<1x32xf32, #tpu.memory_space<vmem>>, %arg17: memref<32x128xf32, #tpu.memory_space<vmem>>, %arg18: memref<1x1x128xf32, #tpu.memory_space<vmem>>) attributes {dimension_semantics = [#tpu.dimension_semantics<parallel>], iteration_bounds = array<i64: 2>, scalar_prefetch = 0 : i64, scratch_operands = 0 : i64, tpu.core_type = #tpu.core_type<tc>, window_params = [{transform_indices = @transform_0, window_bounds = array<i64: 1, 16, 32>}, {pipeline_mode = #tpu.pipeline_mode<synchronous>, transform_indices = @transform_1, window_bounds = array<i64: 16, 1>}, {pipeline_mode = #tpu.pipeline_mode<synchronous>, transform_indices = @transform_2, window_bounds = array<i64: 2, 1, 32>}, {pipeline_mode = #tpu.pipeline_mode<synchronous>, transform_indices = @transform_3, window_bounds = array<i64: 2, 1, 32>}, {pipeline_mode = #tpu.pipeline_mode<synchronous>, transform_indices = @transform_4, window_bounds = array<i64: 2, 32, 96>}, {pipeline_mode = #tpu.pipeline_mode<synchronous>, transform_indices = @transform_5, window_bounds = array<i64: 2, 1, 96>}, {pipeline_mode = #tpu.pipeline_mode<synchronous>, transform_indices = @transform_6, window_bounds = array<i64: 2, 32, 32>}, {pipeline_mode = #tpu.pipeline_mode<synchronous>, transform_indices = @transform_7, window_bounds = array<i64: 2, 1, 32>}, {pipeline_mode = #tpu.pipeline_mode<synchronous>, transform_indices = @transform_8, window_bounds = array<i64: 2, 1, 32>}, {pipeline_mode = #tpu.pipeline_mode<synchronous>, transform_indices = @transform_9, window_bounds = array<i64: 2, 1, 32>}, {pipeline_mode = #tpu.pipeline_mode<synchronous>, transform_indices = @transform_10, window_bounds = array<i64: 2, 32, 128>}, {pipeline_mode = #tpu.pipeline_mode<synchronous>, transform_indices = @transform_11, window_bounds = array<i64: 2, 1, 128>}, {pipeline_mode = #tpu.pipeline_mode<synchronous>, transform_indices = @transform_12, window_bounds = array<i64: 2, 128, 32>}, {pipeline_mode = #tpu.pipeline_mode<synchronous>, transform_indices = @transform_13, window_bounds = array<i64: 2, 1, 32>}, {pipeline_mode = #tpu.pipeline_mode<synchronous>, transform_indices = @transform_14, window_bounds = array<i64: 1, 32>}, {pipeline_mode = #tpu.pipeline_mode<synchronous>, transform_indices = @transform_15, window_bounds = array<i64: 1, 32>}, {pipeline_mode = #tpu.pipeline_mode<synchronous>, transform_indices = @transform_16, window_bounds = array<i64: 32, 128>}, {transform_indices = @transform_17, window_bounds = array<i64: 1, 1, 128>}]} {
    %c0 = arith.constant 0 : index
    %c0_0 = arith.constant 0 : index
    %c0_1 = arith.constant 0 : index
    %0 = vector.load %arg1[%c0, %c0_0, %c0_1] : memref<1x16x32xf32, #tpu.memory_space<vmem>>, vector<1x16x32xf32>
    %1 = vector.shape_cast %0 : vector<1x16x32xf32> to vector<16x32xf32>
    %2 = tpu.iota {dimensions = array<i32: 0>} : vector<16x16xi32>
    %3 = tpu.iota {dimensions = array<i32: 1>} : vector<16x16xi32>
    %4 = arith.cmpi sle, %3, %2 : vector<16x16xi32>
    %c0_2 = arith.constant 0 : index
    %c0_3 = arith.constant 0 : index
    %c0_4 = arith.constant 0 : index
    %5 = vector.load %arg3[%c0_2, %c0_3, %c0_4] : memref<2x1x32xf32, #tpu.memory_space<vmem>>, vector<1x1x32xf32>
    %6 = vector.shape_cast %5 : vector<1x1x32xf32> to vector<1x32xf32>
    %c0_5 = arith.constant 0 : index
    %c0_6 = arith.constant 0 : index
    %c0_7 = arith.constant 0 : index
    %7 = vector.load %arg4[%c0_5, %c0_6, %c0_7] : memref<2x1x32xf32, #tpu.memory_space<vmem>>, vector<1x1x32xf32>
    %8 = vector.shape_cast %7 : vector<1x1x32xf32> to vector<1x32xf32>
    %cst = arith.constant dense<0.000000e+00> : vector<16xf32>
    %9 = vector.multi_reduction <add>, %1, %cst [1] : vector<16x32xf32> to vector<16xf32>
    %10 = vector.shape_cast %9 : vector<16xf32> to vector<16x1xf32>
    %cst_8 = arith.constant 3.200000e+01 : f32
    %11 = vector.broadcast %cst_8 : f32 to vector<16x1xf32>
    %12 = arith.divf %10, %11 : vector<16x1xf32>
    %13 = vector.broadcast %12 : vector<16x1xf32> to vector<16x32xf32>
    %14 = arith.subf %1, %13 : vector<16x32xf32>
    %15 = arith.mulf %14, %14 : vector<16x32xf32>
    %cst_9 = arith.constant dense<0.000000e+00> : vector<16xf32>
    %16 = vector.multi_reduction <add>, %15, %cst_9 [1] : vector<16x32xf32> to vector<16xf32>
    %17 = vector.shape_cast %16 : vector<16xf32> to vector<16x1xf32>
    %cst_10 = arith.constant 3.200000e+01 : f32
    %18 = vector.broadcast %cst_10 : f32 to vector<16x1xf32>
    %19 = arith.divf %17, %18 : vector<16x1xf32>
    %cst_11 = arith.constant 9.99999974E-6 : f32
    %20 = vector.broadcast %cst_11 : f32 to vector<16x1xf32>
    %21 = arith.addf %19, %20 : vector<16x1xf32>
    %22 = math.rsqrt %21 : vector<16x1xf32>
    %23 = vector.broadcast %22 : vector<16x1xf32> to vector<16x32xf32>
    %24 = arith.mulf %14, %23 : vector<16x32xf32>
    %25 = vector.broadcast %6 : vector<1x32xf32> to vector<16x32xf32>
    %26 = arith.mulf %24, %25 : vector<16x32xf32>
    %27 = vector.broadcast %8 : vector<1x32xf32> to vector<16x32xf32>
    %28 = arith.addf %26, %27 : vector<16x32xf32>
    %c0_12 = arith.constant 0 : index
    %c0_13 = arith.constant 0 : index
    %c0_14 = arith.constant 0 : index
    %29 = vector.load %arg5[%c0_12, %c0_13, %c0_14] : memref<2x32x96xf32, #tpu.memory_space<vmem>>, vector<1x32x96xf32>
    %30 = vector.shape_cast %29 : vector<1x32x96xf32> to vector<32x96xf32>
    %cst_15 = arith.constant dense<0.000000e+00> : vector<16x96xf32>
    %31 = tpu.matmul %28, %30, %cst_15 {dimension_numbers = #tpu.dot_dimension_numbers<[1], [0], [0], [1], [0, 0, 1, 1], [], []>} : vector<16x32xf32>, vector<32x96xf32>, vector<16x96xf32> -> vector<16x96xf32>
    %c0_16 = arith.constant 0 : index
    %c0_17 = arith.constant 0 : index
    %c0_18 = arith.constant 0 : index
    %32 = vector.load %arg6[%c0_16, %c0_17, %c0_18] : memref<2x1x96xf32, #tpu.memory_space<vmem>>, vector<1x1x96xf32>
    %33 = vector.shape_cast %32 : vector<1x1x96xf32> to vector<1x96xf32>
    %34 = vector.broadcast %33 : vector<1x96xf32> to vector<16x96xf32>
    %35 = arith.addf %31, %34 : vector<16x96xf32>
    %36 = vector.extract_strided_slice %35 {offsets = [0, 0], sizes = [16, 32], strides = [1, 1]} : vector<16x96xf32> to vector<16x32xf32>
    %37 = vector.extract_strided_slice %35 {offsets = [0, 32], sizes = [16, 32], strides = [1, 1]} : vector<16x96xf32> to vector<16x32xf32>
    %38 = vector.extract_strided_slice %35 {offsets = [0, 64], sizes = [16, 32], strides = [1, 1]} : vector<16x96xf32> to vector<16x32xf32>
    %c0_19 = arith.constant 0 : index
    %c0_20 = arith.constant 0 : index
    %c0_21 = arith.constant 0 : index
    %39 = vector.load %arg7[%c0_19, %c0_20, %c0_21] : memref<2x32x32xf32, #tpu.memory_space<vmem>>, vector<1x32x32xf32>
    %40 = vector.shape_cast %39 : vector<1x32x32xf32> to vector<32x32xf32>
    %cst_22 = arith.constant 0.000000e+00 : f32
    %41 = vector.broadcast %cst_22 : f32 to vector<16x32xf32>
    %42 = vector.extract_strided_slice %36 {offsets = [0, 0], sizes = [16, 8], strides = [1, 1]} : vector<16x32xf32> to vector<16x8xf32>
    %43 = vector.extract_strided_slice %37 {offsets = [0, 0], sizes = [16, 8], strides = [1, 1]} : vector<16x32xf32> to vector<16x8xf32>
    %44 = vector.extract_strided_slice %38 {offsets = [0, 0], sizes = [16, 8], strides = [1, 1]} : vector<16x32xf32> to vector<16x8xf32>
    %cst_23 = arith.constant dense<0.000000e+00> : vector<16x16xf32>
    %45 = tpu.matmul %42, %43, %cst_23 {dimension_numbers = #tpu.dot_dimension_numbers<[1], [1], [0], [0], [0, 0, 1, 0], [], []>} : vector<16x8xf32>, vector<16x8xf32>, vector<16x16xf32> -> vector<16x16xf32>
    %cst_24 = arith.constant 0.353553385 : f32
    %46 = vector.broadcast %cst_24 : f32 to vector<16x16xf32>
    %47 = arith.mulf %45, %46 : vector<16x16xf32>
    %cst_25 = arith.constant -1.000000e+30 : f32
    %48 = vector.broadcast %cst_25 : f32 to vector<16x16xf32>
    %49 = arith.select %4, %47, %48 : vector<16x16xi1>, vector<16x16xf32>
    %cst_26 = arith.constant dense<0xFF800000> : vector<16xf32>
    %50 = vector.multi_reduction <maximumf>, %49, %cst_26 [1] : vector<16x16xf32> to vector<16xf32>
    %51 = vector.shape_cast %50 : vector<16xf32> to vector<16x1xf32>
    %52 = vector.broadcast %51 : vector<16x1xf32> to vector<16x16xf32>
    %53 = arith.subf %49, %52 : vector<16x16xf32>
    %54 = math.exp %53 : vector<16x16xf32>
    %cst_27 = arith.constant dense<0.000000e+00> : vector<16xf32>
    %55 = vector.multi_reduction <add>, %54, %cst_27 [1] : vector<16x16xf32> to vector<16xf32>
    %56 = vector.shape_cast %55 : vector<16xf32> to vector<16x1xf32>
    %57 = tpu.reciprocal %56 {approx = true} : vector<16x1xf32> -> vector<16x1xf32>
    %58 = vector.broadcast %57 : vector<16x1xf32> to vector<16x16xf32>
    %59 = arith.mulf %54, %58 : vector<16x16xf32>
    %cst_28 = arith.constant dense<0.000000e+00> : vector<16x8xf32>
    %60 = tpu.matmul %59, %44, %cst_28 {dimension_numbers = #tpu.dot_dimension_numbers<[1], [0], [0], [1], [0, 0, 1, 1], [], []>} : vector<16x16xf32>, vector<16x8xf32>, vector<16x8xf32> -> vector<16x8xf32>
    %61 = vector.extract_strided_slice %40 {offsets = [0, 0], sizes = [8, 32], strides = [1, 1]} : vector<32x32xf32> to vector<8x32xf32>
    %cst_29 = arith.constant dense<0.000000e+00> : vector<16x32xf32>
    %62 = tpu.matmul %60, %61, %cst_29 {dimension_numbers = #tpu.dot_dimension_numbers<[1], [0], [0], [1], [0, 0, 1, 1], [], []>} : vector<16x8xf32>, vector<8x32xf32>, vector<16x32xf32> -> vector<16x32xf32>
    %63 = arith.addf %41, %62 : vector<16x32xf32>
    %64 = vector.extract_strided_slice %36 {offsets = [0, 8], sizes = [16, 8], strides = [1, 1]} : vector<16x32xf32> to vector<16x8xf32>
    %65 = vector.extract_strided_slice %37 {offsets = [0, 8], sizes = [16, 8], strides = [1, 1]} : vector<16x32xf32> to vector<16x8xf32>
    %66 = vector.extract_strided_slice %38 {offsets = [0, 8], sizes = [16, 8], strides = [1, 1]} : vector<16x32xf32> to vector<16x8xf32>
    %cst_30 = arith.constant dense<0.000000e+00> : vector<16x16xf32>
    %67 = tpu.matmul %64, %65, %cst_30 {dimension_numbers = #tpu.dot_dimension_numbers<[1], [1], [0], [0], [0, 0, 1, 0], [], []>} : vector<16x8xf32>, vector<16x8xf32>, vector<16x16xf32> -> vector<16x16xf32>
    %cst_31 = arith.constant 0.353553385 : f32
    %68 = vector.broadcast %cst_31 : f32 to vector<16x16xf32>
    %69 = arith.mulf %67, %68 : vector<16x16xf32>
    %cst_32 = arith.constant -1.000000e+30 : f32
    %70 = vector.broadcast %cst_32 : f32 to vector<16x16xf32>
    %71 = arith.select %4, %69, %70 : vector<16x16xi1>, vector<16x16xf32>
    %cst_33 = arith.constant dense<0xFF800000> : vector<16xf32>
    %72 = vector.multi_reduction <maximumf>, %71, %cst_33 [1] : vector<16x16xf32> to vector<16xf32>
    %73 = vector.shape_cast %72 : vector<16xf32> to vector<16x1xf32>
    %74 = vector.broadcast %73 : vector<16x1xf32> to vector<16x16xf32>
    %75 = arith.subf %71, %74 : vector<16x16xf32>
    %76 = math.exp %75 : vector<16x16xf32>
    %cst_34 = arith.constant dense<0.000000e+00> : vector<16xf32>
    %77 = vector.multi_reduction <add>, %76, %cst_34 [1] : vector<16x16xf32> to vector<16xf32>
    %78 = vector.shape_cast %77 : vector<16xf32> to vector<16x1xf32>
    %79 = tpu.reciprocal %78 {approx = true} : vector<16x1xf32> -> vector<16x1xf32>
    %80 = vector.broadcast %79 : vector<16x1xf32> to vector<16x16xf32>
    %81 = arith.mulf %76, %80 : vector<16x16xf32>
    %cst_35 = arith.constant dense<0.000000e+00> : vector<16x8xf32>
    %82 = tpu.matmul %81, %66, %cst_35 {dimension_numbers = #tpu.dot_dimension_numbers<[1], [0], [0], [1], [0, 0, 1, 1], [], []>} : vector<16x16xf32>, vector<16x8xf32>, vector<16x8xf32> -> vector<16x8xf32>
    %83 = vector.extract_strided_slice %40 {offsets = [8, 0], sizes = [8, 32], strides = [1, 1]} : vector<32x32xf32> to vector<8x32xf32>
    %cst_36 = arith.constant dense<0.000000e+00> : vector<16x32xf32>
    %84 = tpu.matmul %82, %83, %cst_36 {dimension_numbers = #tpu.dot_dimension_numbers<[1], [0], [0], [1], [0, 0, 1, 1], [], []>} : vector<16x8xf32>, vector<8x32xf32>, vector<16x32xf32> -> vector<16x32xf32>
    %85 = arith.addf %63, %84 : vector<16x32xf32>
    %86 = vector.extract_strided_slice %36 {offsets = [0, 16], sizes = [16, 8], strides = [1, 1]} : vector<16x32xf32> to vector<16x8xf32>
    %87 = vector.extract_strided_slice %37 {offsets = [0, 16], sizes = [16, 8], strides = [1, 1]} : vector<16x32xf32> to vector<16x8xf32>
    %88 = vector.extract_strided_slice %38 {offsets = [0, 16], sizes = [16, 8], strides = [1, 1]} : vector<16x32xf32> to vector<16x8xf32>
    %cst_37 = arith.constant dense<0.000000e+00> : vector<16x16xf32>
    %89 = tpu.matmul %86, %87, %cst_37 {dimension_numbers = #tpu.dot_dimension_numbers<[1], [1], [0], [0], [0, 0, 1, 0], [], []>} : vector<16x8xf32>, vector<16x8xf32>, vector<16x16xf32> -> vector<16x16xf32>
    %cst_38 = arith.constant 0.353553385 : f32
    %90 = vector.broadcast %cst_38 : f32 to vector<16x16xf32>
    %91 = arith.mulf %89, %90 : vector<16x16xf32>
    %cst_39 = arith.constant -1.000000e+30 : f32
    %92 = vector.broadcast %cst_39 : f32 to vector<16x16xf32>
    %93 = arith.select %4, %91, %92 : vector<16x16xi1>, vector<16x16xf32>
    %cst_40 = arith.constant dense<0xFF800000> : vector<16xf32>
    %94 = vector.multi_reduction <maximumf>, %93, %cst_40 [1] : vector<16x16xf32> to vector<16xf32>
    %95 = vector.shape_cast %94 : vector<16xf32> to vector<16x1xf32>
    %96 = vector.broadcast %95 : vector<16x1xf32> to vector<16x16xf32>
    %97 = arith.subf %93, %96 : vector<16x16xf32>
    %98 = math.exp %97 : vector<16x16xf32>
    %cst_41 = arith.constant dense<0.000000e+00> : vector<16xf32>
    %99 = vector.multi_reduction <add>, %98, %cst_41 [1] : vector<16x16xf32> to vector<16xf32>
    %100 = vector.shape_cast %99 : vector<16xf32> to vector<16x1xf32>
    %101 = tpu.reciprocal %100 {approx = true} : vector<16x1xf32> -> vector<16x1xf32>
    %102 = vector.broadcast %101 : vector<16x1xf32> to vector<16x16xf32>
    %103 = arith.mulf %98, %102 : vector<16x16xf32>
    %cst_42 = arith.constant dense<0.000000e+00> : vector<16x8xf32>
    %104 = tpu.matmul %103, %88, %cst_42 {dimension_numbers = #tpu.dot_dimension_numbers<[1], [0], [0], [1], [0, 0, 1, 1], [], []>} : vector<16x16xf32>, vector<16x8xf32>, vector<16x8xf32> -> vector<16x8xf32>
    %105 = vector.extract_strided_slice %40 {offsets = [16, 0], sizes = [8, 32], strides = [1, 1]} : vector<32x32xf32> to vector<8x32xf32>
    %cst_43 = arith.constant dense<0.000000e+00> : vector<16x32xf32>
    %106 = tpu.matmul %104, %105, %cst_43 {dimension_numbers = #tpu.dot_dimension_numbers<[1], [0], [0], [1], [0, 0, 1, 1], [], []>} : vector<16x8xf32>, vector<8x32xf32>, vector<16x32xf32> -> vector<16x32xf32>
    %107 = arith.addf %85, %106 : vector<16x32xf32>
    %108 = vector.extract_strided_slice %36 {offsets = [0, 24], sizes = [16, 8], strides = [1, 1]} : vector<16x32xf32> to vector<16x8xf32>
    %109 = vector.extract_strided_slice %37 {offsets = [0, 24], sizes = [16, 8], strides = [1, 1]} : vector<16x32xf32> to vector<16x8xf32>
    %110 = vector.extract_strided_slice %38 {offsets = [0, 24], sizes = [16, 8], strides = [1, 1]} : vector<16x32xf32> to vector<16x8xf32>
    %cst_44 = arith.constant dense<0.000000e+00> : vector<16x16xf32>
    %111 = tpu.matmul %108, %109, %cst_44 {dimension_numbers = #tpu.dot_dimension_numbers<[1], [1], [0], [0], [0, 0, 1, 0], [], []>} : vector<16x8xf32>, vector<16x8xf32>, vector<16x16xf32> -> vector<16x16xf32>
    %cst_45 = arith.constant 0.353553385 : f32
    %112 = vector.broadcast %cst_45 : f32 to vector<16x16xf32>
    %113 = arith.mulf %111, %112 : vector<16x16xf32>
    %cst_46 = arith.constant -1.000000e+30 : f32
    %114 = vector.broadcast %cst_46 : f32 to vector<16x16xf32>
    %115 = arith.select %4, %113, %114 : vector<16x16xi1>, vector<16x16xf32>
    %cst_47 = arith.constant dense<0xFF800000> : vector<16xf32>
    %116 = vector.multi_reduction <maximumf>, %115, %cst_47 [1] : vector<16x16xf32> to vector<16xf32>
    %117 = vector.shape_cast %116 : vector<16xf32> to vector<16x1xf32>
    %118 = vector.broadcast %117 : vector<16x1xf32> to vector<16x16xf32>
    %119 = arith.subf %115, %118 : vector<16x16xf32>
    %120 = math.exp %119 : vector<16x16xf32>
    %cst_48 = arith.constant dense<0.000000e+00> : vector<16xf32>
    %121 = vector.multi_reduction <add>, %120, %cst_48 [1] : vector<16x16xf32> to vector<16xf32>
    %122 = vector.shape_cast %121 : vector<16xf32> to vector<16x1xf32>
    %123 = tpu.reciprocal %122 {approx = true} : vector<16x1xf32> -> vector<16x1xf32>
    %124 = vector.broadcast %123 : vector<16x1xf32> to vector<16x16xf32>
    %125 = arith.mulf %120, %124 : vector<16x16xf32>
    %cst_49 = arith.constant dense<0.000000e+00> : vector<16x8xf32>
    %126 = tpu.matmul %125, %110, %cst_49 {dimension_numbers = #tpu.dot_dimension_numbers<[1], [0], [0], [1], [0, 0, 1, 1], [], []>} : vector<16x16xf32>, vector<16x8xf32>, vector<16x8xf32> -> vector<16x8xf32>
    %127 = vector.extract_strided_slice %40 {offsets = [24, 0], sizes = [8, 32], strides = [1, 1]} : vector<32x32xf32> to vector<8x32xf32>
    %cst_50 = arith.constant dense<0.000000e+00> : vector<16x32xf32>
    %128 = tpu.matmul %126, %127, %cst_50 {dimension_numbers = #tpu.dot_dimension_numbers<[1], [0], [0], [1], [0, 0, 1, 1], [], []>} : vector<16x8xf32>, vector<8x32xf32>, vector<16x32xf32> -> vector<16x32xf32>
    %129 = arith.addf %107, %128 : vector<16x32xf32>
    %130 = arith.addf %1, %129 : vector<16x32xf32>
    %c0_51 = arith.constant 0 : index
    %c0_52 = arith.constant 0 : index
    %c0_53 = arith.constant 0 : index
    %131 = vector.load %arg8[%c0_51, %c0_52, %c0_53] : memref<2x1x32xf32, #tpu.memory_space<vmem>>, vector<1x1x32xf32>
    %132 = vector.shape_cast %131 : vector<1x1x32xf32> to vector<1x32xf32>
    %133 = vector.broadcast %132 : vector<1x32xf32> to vector<16x32xf32>
    %134 = arith.addf %130, %133 : vector<16x32xf32>
    %c0_54 = arith.constant 0 : index
    %c0_55 = arith.constant 0 : index
    %c0_56 = arith.constant 0 : index
    %135 = vector.load %arg9[%c0_54, %c0_55, %c0_56] : memref<2x1x32xf32, #tpu.memory_space<vmem>>, vector<1x1x32xf32>
    %136 = vector.shape_cast %135 : vector<1x1x32xf32> to vector<1x32xf32>
    %c0_57 = arith.constant 0 : index
    %c0_58 = arith.constant 0 : index
    %c0_59 = arith.constant 0 : index
    %137 = vector.load %arg10[%c0_57, %c0_58, %c0_59] : memref<2x1x32xf32, #tpu.memory_space<vmem>>, vector<1x1x32xf32>
    %138 = vector.shape_cast %137 : vector<1x1x32xf32> to vector<1x32xf32>
    %cst_60 = arith.constant dense<0.000000e+00> : vector<16xf32>
    %139 = vector.multi_reduction <add>, %134, %cst_60 [1] : vector<16x32xf32> to vector<16xf32>
    %140 = vector.shape_cast %139 : vector<16xf32> to vector<16x1xf32>
    %cst_61 = arith.constant 3.200000e+01 : f32
    %141 = vector.broadcast %cst_61 : f32 to vector<16x1xf32>
    %142 = arith.divf %140, %141 : vector<16x1xf32>
    %143 = vector.broadcast %142 : vector<16x1xf32> to vector<16x32xf32>
    %144 = arith.subf %134, %143 : vector<16x32xf32>
    %145 = arith.mulf %144, %144 : vector<16x32xf32>
    %cst_62 = arith.constant dense<0.000000e+00> : vector<16xf32>
    %146 = vector.multi_reduction <add>, %145, %cst_62 [1] : vector<16x32xf32> to vector<16xf32>
    %147 = vector.shape_cast %146 : vector<16xf32> to vector<16x1xf32>
    %cst_63 = arith.constant 3.200000e+01 : f32
    %148 = vector.broadcast %cst_63 : f32 to vector<16x1xf32>
    %149 = arith.divf %147, %148 : vector<16x1xf32>
    %cst_64 = arith.constant 9.99999974E-6 : f32
    %150 = vector.broadcast %cst_64 : f32 to vector<16x1xf32>
    %151 = arith.addf %149, %150 : vector<16x1xf32>
    %152 = math.rsqrt %151 : vector<16x1xf32>
    %153 = vector.broadcast %152 : vector<16x1xf32> to vector<16x32xf32>
    %154 = arith.mulf %144, %153 : vector<16x32xf32>
    %155 = vector.broadcast %136 : vector<1x32xf32> to vector<16x32xf32>
    %156 = arith.mulf %154, %155 : vector<16x32xf32>
    %157 = vector.broadcast %138 : vector<1x32xf32> to vector<16x32xf32>
    %158 = arith.addf %156, %157 : vector<16x32xf32>
    %c0_65 = arith.constant 0 : index
    %c0_66 = arith.constant 0 : index
    %c0_67 = arith.constant 0 : index
    %159 = vector.load %arg11[%c0_65, %c0_66, %c0_67] : memref<2x32x128xf32, #tpu.memory_space<vmem>>, vector<1x32x128xf32>
    %160 = vector.shape_cast %159 : vector<1x32x128xf32> to vector<32x128xf32>
    %cst_68 = arith.constant dense<0.000000e+00> : vector<16x128xf32>
    %161 = tpu.matmul %158, %160, %cst_68 {dimension_numbers = #tpu.dot_dimension_numbers<[1], [0], [0], [1], [0, 0, 1, 1], [], []>} : vector<16x32xf32>, vector<32x128xf32>, vector<16x128xf32> -> vector<16x128xf32>
    %c0_69 = arith.constant 0 : index
    %c0_70 = arith.constant 0 : index
    %c0_71 = arith.constant 0 : index
    %162 = vector.load %arg12[%c0_69, %c0_70, %c0_71] : memref<2x1x128xf32, #tpu.memory_space<vmem>>, vector<1x1x128xf32>
    %163 = vector.shape_cast %162 : vector<1x1x128xf32> to vector<1x128xf32>
    %164 = vector.broadcast %163 : vector<1x128xf32> to vector<16x128xf32>
    %165 = arith.addf %161, %164 : vector<16x128xf32>
    %166 = arith.mulf %165, %165 : vector<16x128xf32>
    %167 = arith.mulf %165, %166 : vector<16x128xf32>
    %cst_72 = arith.constant 4.471500e-02 : f32
    %168 = vector.broadcast %cst_72 : f32 to vector<16x128xf32>
    %169 = arith.mulf %168, %167 : vector<16x128xf32>
    %170 = arith.addf %165, %169 : vector<16x128xf32>
    %cst_73 = arith.constant 0.797884583 : f32
    %171 = vector.broadcast %cst_73 : f32 to vector<16x128xf32>
    %172 = arith.mulf %171, %170 : vector<16x128xf32>
    %173 = math.tanh %172 : vector<16x128xf32>
    %cst_74 = arith.constant 1.000000e+00 : f32
    %174 = vector.broadcast %cst_74 : f32 to vector<16x128xf32>
    %175 = arith.addf %174, %173 : vector<16x128xf32>
    %cst_75 = arith.constant 5.000000e-01 : f32
    %176 = vector.broadcast %cst_75 : f32 to vector<16x128xf32>
    %177 = arith.mulf %176, %175 : vector<16x128xf32>
    %178 = arith.mulf %165, %177 : vector<16x128xf32>
    %c0_76 = arith.constant 0 : index
    %c0_77 = arith.constant 0 : index
    %c0_78 = arith.constant 0 : index
    %179 = vector.load %arg13[%c0_76, %c0_77, %c0_78] : memref<2x128x32xf32, #tpu.memory_space<vmem>>, vector<1x128x32xf32>
    %180 = vector.shape_cast %179 : vector<1x128x32xf32> to vector<128x32xf32>
    %cst_79 = arith.constant dense<0.000000e+00> : vector<16x32xf32>
    %181 = tpu.matmul %178, %180, %cst_79 {dimension_numbers = #tpu.dot_dimension_numbers<[1], [0], [0], [1], [0, 0, 1, 1], [], []>} : vector<16x128xf32>, vector<128x32xf32>, vector<16x32xf32> -> vector<16x32xf32>
    %182 = arith.addf %134, %181 : vector<16x32xf32>
    %c0_80 = arith.constant 0 : index
    %c0_81 = arith.constant 0 : index
    %c0_82 = arith.constant 0 : index
    %183 = vector.load %arg14[%c0_80, %c0_81, %c0_82] : memref<2x1x32xf32, #tpu.memory_space<vmem>>, vector<1x1x32xf32>
    %184 = vector.shape_cast %183 : vector<1x1x32xf32> to vector<1x32xf32>
    %185 = vector.broadcast %184 : vector<1x32xf32> to vector<16x32xf32>
    %186 = arith.addf %182, %185 : vector<16x32xf32>
    %c1 = arith.constant 1 : index
    %c0_83 = arith.constant 0 : index
    %c0_84 = arith.constant 0 : index
    %187 = vector.load %arg3[%c1, %c0_83, %c0_84] : memref<2x1x32xf32, #tpu.memory_space<vmem>>, vector<1x1x32xf32>
    %188 = vector.shape_cast %187 : vector<1x1x32xf32> to vector<1x32xf32>
    %c1_85 = arith.constant 1 : index
    %c0_86 = arith.constant 0 : index
    %c0_87 = arith.constant 0 : index
    %189 = vector.load %arg4[%c1_85, %c0_86, %c0_87] : memref<2x1x32xf32, #tpu.memory_space<vmem>>, vector<1x1x32xf32>
    %190 = vector.shape_cast %189 : vector<1x1x32xf32> to vector<1x32xf32>
    %cst_88 = arith.constant dense<0.000000e+00> : vector<16xf32>
    %191 = vector.multi_reduction <add>, %186, %cst_88 [1] : vector<16x32xf32> to vector<16xf32>
    %192 = vector.shape_cast %191 : vector<16xf32> to vector<16x1xf32>
    %cst_89 = arith.constant 3.200000e+01 : f32
    %193 = vector.broadcast %cst_89 : f32 to vector<16x1xf32>
    %194 = arith.divf %192, %193 : vector<16x1xf32>
    %195 = vector.broadcast %194 : vector<16x1xf32> to vector<16x32xf32>
    %196 = arith.subf %186, %195 : vector<16x32xf32>
    %197 = arith.mulf %196, %196 : vector<16x32xf32>
    %cst_90 = arith.constant dense<0.000000e+00> : vector<16xf32>
    %198 = vector.multi_reduction <add>, %197, %cst_90 [1] : vector<16x32xf32> to vector<16xf32>
    %199 = vector.shape_cast %198 : vector<16xf32> to vector<16x1xf32>
    %cst_91 = arith.constant 3.200000e+01 : f32
    %200 = vector.broadcast %cst_91 : f32 to vector<16x1xf32>
    %201 = arith.divf %199, %200 : vector<16x1xf32>
    %cst_92 = arith.constant 9.99999974E-6 : f32
    %202 = vector.broadcast %cst_92 : f32 to vector<16x1xf32>
    %203 = arith.addf %201, %202 : vector<16x1xf32>
    %204 = math.rsqrt %203 : vector<16x1xf32>
    %205 = vector.broadcast %204 : vector<16x1xf32> to vector<16x32xf32>
    %206 = arith.mulf %196, %205 : vector<16x32xf32>
    %207 = vector.broadcast %188 : vector<1x32xf32> to vector<16x32xf32>
    %208 = arith.mulf %206, %207 : vector<16x32xf32>
    %209 = vector.broadcast %190 : vector<1x32xf32> to vector<16x32xf32>
    %210 = arith.addf %208, %209 : vector<16x32xf32>
    %c1_93 = arith.constant 1 : index
    %c0_94 = arith.constant 0 : index
    %c0_95 = arith.constant 0 : index
    %211 = vector.load %arg5[%c1_93, %c0_94, %c0_95] : memref<2x32x96xf32, #tpu.memory_space<vmem>>, vector<1x32x96xf32>
    %212 = vector.shape_cast %211 : vector<1x32x96xf32> to vector<32x96xf32>
    %cst_96 = arith.constant dense<0.000000e+00> : vector<16x96xf32>
    %213 = tpu.matmul %210, %212, %cst_96 {dimension_numbers = #tpu.dot_dimension_numbers<[1], [0], [0], [1], [0, 0, 1, 1], [], []>} : vector<16x32xf32>, vector<32x96xf32>, vector<16x96xf32> -> vector<16x96xf32>
    %c1_97 = arith.constant 1 : index
    %c0_98 = arith.constant 0 : index
    %c0_99 = arith.constant 0 : index
    %214 = vector.load %arg6[%c1_97, %c0_98, %c0_99] : memref<2x1x96xf32, #tpu.memory_space<vmem>>, vector<1x1x96xf32>
    %215 = vector.shape_cast %214 : vector<1x1x96xf32> to vector<1x96xf32>
    %216 = vector.broadcast %215 : vector<1x96xf32> to vector<16x96xf32>
    %217 = arith.addf %213, %216 : vector<16x96xf32>
    %218 = vector.extract_strided_slice %217 {offsets = [0, 0], sizes = [16, 32], strides = [1, 1]} : vector<16x96xf32> to vector<16x32xf32>
    %219 = vector.extract_strided_slice %217 {offsets = [0, 32], sizes = [16, 32], strides = [1, 1]} : vector<16x96xf32> to vector<16x32xf32>
    %220 = vector.extract_strided_slice %217 {offsets = [0, 64], sizes = [16, 32], strides = [1, 1]} : vector<16x96xf32> to vector<16x32xf32>
    %c1_100 = arith.constant 1 : index
    %c0_101 = arith.constant 0 : index
    %c0_102 = arith.constant 0 : index
    %221 = vector.load %arg7[%c1_100, %c0_101, %c0_102] : memref<2x32x32xf32, #tpu.memory_space<vmem>>, vector<1x32x32xf32>
    %222 = vector.shape_cast %221 : vector<1x32x32xf32> to vector<32x32xf32>
    %cst_103 = arith.constant 0.000000e+00 : f32
    %223 = vector.broadcast %cst_103 : f32 to vector<16x32xf32>
    %224 = vector.extract_strided_slice %218 {offsets = [0, 0], sizes = [16, 8], strides = [1, 1]} : vector<16x32xf32> to vector<16x8xf32>
    %225 = vector.extract_strided_slice %219 {offsets = [0, 0], sizes = [16, 8], strides = [1, 1]} : vector<16x32xf32> to vector<16x8xf32>
    %226 = vector.extract_strided_slice %220 {offsets = [0, 0], sizes = [16, 8], strides = [1, 1]} : vector<16x32xf32> to vector<16x8xf32>
    %cst_104 = arith.constant dense<0.000000e+00> : vector<16x16xf32>
    %227 = tpu.matmul %224, %225, %cst_104 {dimension_numbers = #tpu.dot_dimension_numbers<[1], [1], [0], [0], [0, 0, 1, 0], [], []>} : vector<16x8xf32>, vector<16x8xf32>, vector<16x16xf32> -> vector<16x16xf32>
    %cst_105 = arith.constant 0.353553385 : f32
    %228 = vector.broadcast %cst_105 : f32 to vector<16x16xf32>
    %229 = arith.mulf %227, %228 : vector<16x16xf32>
    %cst_106 = arith.constant -1.000000e+30 : f32
    %230 = vector.broadcast %cst_106 : f32 to vector<16x16xf32>
    %231 = arith.select %4, %229, %230 : vector<16x16xi1>, vector<16x16xf32>
    %cst_107 = arith.constant dense<0xFF800000> : vector<16xf32>
    %232 = vector.multi_reduction <maximumf>, %231, %cst_107 [1] : vector<16x16xf32> to vector<16xf32>
    %233 = vector.shape_cast %232 : vector<16xf32> to vector<16x1xf32>
    %234 = vector.broadcast %233 : vector<16x1xf32> to vector<16x16xf32>
    %235 = arith.subf %231, %234 : vector<16x16xf32>
    %236 = math.exp %235 : vector<16x16xf32>
    %cst_108 = arith.constant dense<0.000000e+00> : vector<16xf32>
    %237 = vector.multi_reduction <add>, %236, %cst_108 [1] : vector<16x16xf32> to vector<16xf32>
    %238 = vector.shape_cast %237 : vector<16xf32> to vector<16x1xf32>
    %239 = tpu.reciprocal %238 {approx = true} : vector<16x1xf32> -> vector<16x1xf32>
    %240 = vector.broadcast %239 : vector<16x1xf32> to vector<16x16xf32>
    %241 = arith.mulf %236, %240 : vector<16x16xf32>
    %cst_109 = arith.constant dense<0.000000e+00> : vector<16x8xf32>
    %242 = tpu.matmul %241, %226, %cst_109 {dimension_numbers = #tpu.dot_dimension_numbers<[1], [0], [0], [1], [0, 0, 1, 1], [], []>} : vector<16x16xf32>, vector<16x8xf32>, vector<16x8xf32> -> vector<16x8xf32>
    %243 = vector.extract_strided_slice %222 {offsets = [0, 0], sizes = [8, 32], strides = [1, 1]} : vector<32x32xf32> to vector<8x32xf32>
    %cst_110 = arith.constant dense<0.000000e+00> : vector<16x32xf32>
    %244 = tpu.matmul %242, %243, %cst_110 {dimension_numbers = #tpu.dot_dimension_numbers<[1], [0], [0], [1], [0, 0, 1, 1], [], []>} : vector<16x8xf32>, vector<8x32xf32>, vector<16x32xf32> -> vector<16x32xf32>
    %245 = arith.addf %223, %244 : vector<16x32xf32>
    %246 = vector.extract_strided_slice %218 {offsets = [0, 8], sizes = [16, 8], strides = [1, 1]} : vector<16x32xf32> to vector<16x8xf32>
    %247 = vector.extract_strided_slice %219 {offsets = [0, 8], sizes = [16, 8], strides = [1, 1]} : vector<16x32xf32> to vector<16x8xf32>
    %248 = vector.extract_strided_slice %220 {offsets = [0, 8], sizes = [16, 8], strides = [1, 1]} : vector<16x32xf32> to vector<16x8xf32>
    %cst_111 = arith.constant dense<0.000000e+00> : vector<16x16xf32>
    %249 = tpu.matmul %246, %247, %cst_111 {dimension_numbers = #tpu.dot_dimension_numbers<[1], [1], [0], [0], [0, 0, 1, 0], [], []>} : vector<16x8xf32>, vector<16x8xf32>, vector<16x16xf32> -> vector<16x16xf32>
    %cst_112 = arith.constant 0.353553385 : f32
    %250 = vector.broadcast %cst_112 : f32 to vector<16x16xf32>
    %251 = arith.mulf %249, %250 : vector<16x16xf32>
    %cst_113 = arith.constant -1.000000e+30 : f32
    %252 = vector.broadcast %cst_113 : f32 to vector<16x16xf32>
    %253 = arith.select %4, %251, %252 : vector<16x16xi1>, vector<16x16xf32>
    %cst_114 = arith.constant dense<0xFF800000> : vector<16xf32>
    %254 = vector.multi_reduction <maximumf>, %253, %cst_114 [1] : vector<16x16xf32> to vector<16xf32>
    %255 = vector.shape_cast %254 : vector<16xf32> to vector<16x1xf32>
    %256 = vector.broadcast %255 : vector<16x1xf32> to vector<16x16xf32>
    %257 = arith.subf %253, %256 : vector<16x16xf32>
    %258 = math.exp %257 : vector<16x16xf32>
    %cst_115 = arith.constant dense<0.000000e+00> : vector<16xf32>
    %259 = vector.multi_reduction <add>, %258, %cst_115 [1] : vector<16x16xf32> to vector<16xf32>
    %260 = vector.shape_cast %259 : vector<16xf32> to vector<16x1xf32>
    %261 = tpu.reciprocal %260 {approx = true} : vector<16x1xf32> -> vector<16x1xf32>
    %262 = vector.broadcast %261 : vector<16x1xf32> to vector<16x16xf32>
    %263 = arith.mulf %258, %262 : vector<16x16xf32>
    %cst_116 = arith.constant dense<0.000000e+00> : vector<16x8xf32>
    %264 = tpu.matmul %263, %248, %cst_116 {dimension_numbers = #tpu.dot_dimension_numbers<[1], [0], [0], [1], [0, 0, 1, 1], [], []>} : vector<16x16xf32>, vector<16x8xf32>, vector<16x8xf32> -> vector<16x8xf32>
    %265 = vector.extract_strided_slice %222 {offsets = [8, 0], sizes = [8, 32], strides = [1, 1]} : vector<32x32xf32> to vector<8x32xf32>
    %cst_117 = arith.constant dense<0.000000e+00> : vector<16x32xf32>
    %266 = tpu.matmul %264, %265, %cst_117 {dimension_numbers = #tpu.dot_dimension_numbers<[1], [0], [0], [1], [0, 0, 1, 1], [], []>} : vector<16x8xf32>, vector<8x32xf32>, vector<16x32xf32> -> vector<16x32xf32>
    %267 = arith.addf %245, %266 : vector<16x32xf32>
    %268 = vector.extract_strided_slice %218 {offsets = [0, 16], sizes = [16, 8], strides = [1, 1]} : vector<16x32xf32> to vector<16x8xf32>
    %269 = vector.extract_strided_slice %219 {offsets = [0, 16], sizes = [16, 8], strides = [1, 1]} : vector<16x32xf32> to vector<16x8xf32>
    %270 = vector.extract_strided_slice %220 {offsets = [0, 16], sizes = [16, 8], strides = [1, 1]} : vector<16x32xf32> to vector<16x8xf32>
    %cst_118 = arith.constant dense<0.000000e+00> : vector<16x16xf32>
    %271 = tpu.matmul %268, %269, %cst_118 {dimension_numbers = #tpu.dot_dimension_numbers<[1], [1], [0], [0], [0, 0, 1, 0], [], []>} : vector<16x8xf32>, vector<16x8xf32>, vector<16x16xf32> -> vector<16x16xf32>
    %cst_119 = arith.constant 0.353553385 : f32
    %272 = vector.broadcast %cst_119 : f32 to vector<16x16xf32>
    %273 = arith.mulf %271, %272 : vector<16x16xf32>
    %cst_120 = arith.constant -1.000000e+30 : f32
    %274 = vector.broadcast %cst_120 : f32 to vector<16x16xf32>
    %275 = arith.select %4, %273, %274 : vector<16x16xi1>, vector<16x16xf32>
    %cst_121 = arith.constant dense<0xFF800000> : vector<16xf32>
    %276 = vector.multi_reduction <maximumf>, %275, %cst_121 [1] : vector<16x16xf32> to vector<16xf32>
    %277 = vector.shape_cast %276 : vector<16xf32> to vector<16x1xf32>
    %278 = vector.broadcast %277 : vector<16x1xf32> to vector<16x16xf32>
    %279 = arith.subf %275, %278 : vector<16x16xf32>
    %280 = math.exp %279 : vector<16x16xf32>
    %cst_122 = arith.constant dense<0.000000e+00> : vector<16xf32>
    %281 = vector.multi_reduction <add>, %280, %cst_122 [1] : vector<16x16xf32> to vector<16xf32>
    %282 = vector.shape_cast %281 : vector<16xf32> to vector<16x1xf32>
    %283 = tpu.reciprocal %282 {approx = true} : vector<16x1xf32> -> vector<16x1xf32>
    %284 = vector.broadcast %283 : vector<16x1xf32> to vector<16x16xf32>
    %285 = arith.mulf %280, %284 : vector<16x16xf32>
    %cst_123 = arith.constant dense<0.000000e+00> : vector<16x8xf32>
    %286 = tpu.matmul %285, %270, %cst_123 {dimension_numbers = #tpu.dot_dimension_numbers<[1], [0], [0], [1], [0, 0, 1, 1], [], []>} : vector<16x16xf32>, vector<16x8xf32>, vector<16x8xf32> -> vector<16x8xf32>
    %287 = vector.extract_strided_slice %222 {offsets = [16, 0], sizes = [8, 32], strides = [1, 1]} : vector<32x32xf32> to vector<8x32xf32>
    %cst_124 = arith.constant dense<0.000000e+00> : vector<16x32xf32>
    %288 = tpu.matmul %286, %287, %cst_124 {dimension_numbers = #tpu.dot_dimension_numbers<[1], [0], [0], [1], [0, 0, 1, 1], [], []>} : vector<16x8xf32>, vector<8x32xf32>, vector<16x32xf32> -> vector<16x32xf32>
    %289 = arith.addf %267, %288 : vector<16x32xf32>
    %290 = vector.extract_strided_slice %218 {offsets = [0, 24], sizes = [16, 8], strides = [1, 1]} : vector<16x32xf32> to vector<16x8xf32>
    %291 = vector.extract_strided_slice %219 {offsets = [0, 24], sizes = [16, 8], strides = [1, 1]} : vector<16x32xf32> to vector<16x8xf32>
    %292 = vector.extract_strided_slice %220 {offsets = [0, 24], sizes = [16, 8], strides = [1, 1]} : vector<16x32xf32> to vector<16x8xf32>
    %cst_125 = arith.constant dense<0.000000e+00> : vector<16x16xf32>
    %293 = tpu.matmul %290, %291, %cst_125 {dimension_numbers = #tpu.dot_dimension_numbers<[1], [1], [0], [0], [0, 0, 1, 0], [], []>} : vector<16x8xf32>, vector<16x8xf32>, vector<16x16xf32> -> vector<16x16xf32>
    %cst_126 = arith.constant 0.353553385 : f32
    %294 = vector.broadcast %cst_126 : f32 to vector<16x16xf32>
    %295 = arith.mulf %293, %294 : vector<16x16xf32>
    %cst_127 = arith.constant -1.000000e+30 : f32
    %296 = vector.broadcast %cst_127 : f32 to vector<16x16xf32>
    %297 = arith.select %4, %295, %296 : vector<16x16xi1>, vector<16x16xf32>
    %cst_128 = arith.constant dense<0xFF800000> : vector<16xf32>
    %298 = vector.multi_reduction <maximumf>, %297, %cst_128 [1] : vector<16x16xf32> to vector<16xf32>
    %299 = vector.shape_cast %298 : vector<16xf32> to vector<16x1xf32>
    %300 = vector.broadcast %299 : vector<16x1xf32> to vector<16x16xf32>
    %301 = arith.subf %297, %300 : vector<16x16xf32>
    %302 = math.exp %301 : vector<16x16xf32>
    %cst_129 = arith.constant dense<0.000000e+00> : vector<16xf32>
    %303 = vector.multi_reduction <add>, %302, %cst_129 [1] : vector<16x16xf32> to vector<16xf32>
    %304 = vector.shape_cast %303 : vector<16xf32> to vector<16x1xf32>
    %305 = tpu.reciprocal %304 {approx = true} : vector<16x1xf32> -> vector<16x1xf32>
    %306 = vector.broadcast %305 : vector<16x1xf32> to vector<16x16xf32>
    %307 = arith.mulf %302, %306 : vector<16x16xf32>
    %cst_130 = arith.constant dense<0.000000e+00> : vector<16x8xf32>
    %308 = tpu.matmul %307, %292, %cst_130 {dimension_numbers = #tpu.dot_dimension_numbers<[1], [0], [0], [1], [0, 0, 1, 1], [], []>} : vector<16x16xf32>, vector<16x8xf32>, vector<16x8xf32> -> vector<16x8xf32>
    %309 = vector.extract_strided_slice %222 {offsets = [24, 0], sizes = [8, 32], strides = [1, 1]} : vector<32x32xf32> to vector<8x32xf32>
    %cst_131 = arith.constant dense<0.000000e+00> : vector<16x32xf32>
    %310 = tpu.matmul %308, %309, %cst_131 {dimension_numbers = #tpu.dot_dimension_numbers<[1], [0], [0], [1], [0, 0, 1, 1], [], []>} : vector<16x8xf32>, vector<8x32xf32>, vector<16x32xf32> -> vector<16x32xf32>
    %311 = arith.addf %289, %310 : vector<16x32xf32>
    %312 = arith.addf %186, %311 : vector<16x32xf32>
    %c1_132 = arith.constant 1 : index
    %c0_133 = arith.constant 0 : index
    %c0_134 = arith.constant 0 : index
    %313 = vector.load %arg8[%c1_132, %c0_133, %c0_134] : memref<2x1x32xf32, #tpu.memory_space<vmem>>, vector<1x1x32xf32>
    %314 = vector.shape_cast %313 : vector<1x1x32xf32> to vector<1x32xf32>
    %315 = vector.broadcast %314 : vector<1x32xf32> to vector<16x32xf32>
    %316 = arith.addf %312, %315 : vector<16x32xf32>
    %c1_135 = arith.constant 1 : index
    %c0_136 = arith.constant 0 : index
    %c0_137 = arith.constant 0 : index
    %317 = vector.load %arg9[%c1_135, %c0_136, %c0_137] : memref<2x1x32xf32, #tpu.memory_space<vmem>>, vector<1x1x32xf32>
    %318 = vector.shape_cast %317 : vector<1x1x32xf32> to vector<1x32xf32>
    %c1_138 = arith.constant 1 : index
    %c0_139 = arith.constant 0 : index
    %c0_140 = arith.constant 0 : index
    %319 = vector.load %arg10[%c1_138, %c0_139, %c0_140] : memref<2x1x32xf32, #tpu.memory_space<vmem>>, vector<1x1x32xf32>
    %320 = vector.shape_cast %319 : vector<1x1x32xf32> to vector<1x32xf32>
    %cst_141 = arith.constant dense<0.000000e+00> : vector<16xf32>
    %321 = vector.multi_reduction <add>, %316, %cst_141 [1] : vector<16x32xf32> to vector<16xf32>
    %322 = vector.shape_cast %321 : vector<16xf32> to vector<16x1xf32>
    %cst_142 = arith.constant 3.200000e+01 : f32
    %323 = vector.broadcast %cst_142 : f32 to vector<16x1xf32>
    %324 = arith.divf %322, %323 : vector<16x1xf32>
    %325 = vector.broadcast %324 : vector<16x1xf32> to vector<16x32xf32>
    %326 = arith.subf %316, %325 : vector<16x32xf32>
    %327 = arith.mulf %326, %326 : vector<16x32xf32>
    %cst_143 = arith.constant dense<0.000000e+00> : vector<16xf32>
    %328 = vector.multi_reduction <add>, %327, %cst_143 [1] : vector<16x32xf32> to vector<16xf32>
    %329 = vector.shape_cast %328 : vector<16xf32> to vector<16x1xf32>
    %cst_144 = arith.constant 3.200000e+01 : f32
    %330 = vector.broadcast %cst_144 : f32 to vector<16x1xf32>
    %331 = arith.divf %329, %330 : vector<16x1xf32>
    %cst_145 = arith.constant 9.99999974E-6 : f32
    %332 = vector.broadcast %cst_145 : f32 to vector<16x1xf32>
    %333 = arith.addf %331, %332 : vector<16x1xf32>
    %334 = math.rsqrt %333 : vector<16x1xf32>
    %335 = vector.broadcast %334 : vector<16x1xf32> to vector<16x32xf32>
    %336 = arith.mulf %326, %335 : vector<16x32xf32>
    %337 = vector.broadcast %318 : vector<1x32xf32> to vector<16x32xf32>
    %338 = arith.mulf %336, %337 : vector<16x32xf32>
    %339 = vector.broadcast %320 : vector<1x32xf32> to vector<16x32xf32>
    %340 = arith.addf %338, %339 : vector<16x32xf32>
    %c1_146 = arith.constant 1 : index
    %c0_147 = arith.constant 0 : index
    %c0_148 = arith.constant 0 : index
    %341 = vector.load %arg11[%c1_146, %c0_147, %c0_148] : memref<2x32x128xf32, #tpu.memory_space<vmem>>, vector<1x32x128xf32>
    %342 = vector.shape_cast %341 : vector<1x32x128xf32> to vector<32x128xf32>
    %cst_149 = arith.constant dense<0.000000e+00> : vector<16x128xf32>
    %343 = tpu.matmul %340, %342, %cst_149 {dimension_numbers = #tpu.dot_dimension_numbers<[1], [0], [0], [1], [0, 0, 1, 1], [], []>} : vector<16x32xf32>, vector<32x128xf32>, vector<16x128xf32> -> vector<16x128xf32>
    %c1_150 = arith.constant 1 : index
    %c0_151 = arith.constant 0 : index
    %c0_152 = arith.constant 0 : index
    %344 = vector.load %arg12[%c1_150, %c0_151, %c0_152] : memref<2x1x128xf32, #tpu.memory_space<vmem>>, vector<1x1x128xf32>
    %345 = vector.shape_cast %344 : vector<1x1x128xf32> to vector<1x128xf32>
    %346 = vector.broadcast %345 : vector<1x128xf32> to vector<16x128xf32>
    %347 = arith.addf %343, %346 : vector<16x128xf32>
    %348 = arith.mulf %347, %347 : vector<16x128xf32>
    %349 = arith.mulf %347, %348 : vector<16x128xf32>
    %cst_153 = arith.constant 4.471500e-02 : f32
    %350 = vector.broadcast %cst_153 : f32 to vector<16x128xf32>
    %351 = arith.mulf %350, %349 : vector<16x128xf32>
    %352 = arith.addf %347, %351 : vector<16x128xf32>
    %cst_154 = arith.constant 0.797884583 : f32
    %353 = vector.broadcast %cst_154 : f32 to vector<16x128xf32>
    %354 = arith.mulf %353, %352 : vector<16x128xf32>
    %355 = math.tanh %354 : vector<16x128xf32>
    %cst_155 = arith.constant 1.000000e+00 : f32
    %356 = vector.broadcast %cst_155 : f32 to vector<16x128xf32>
    %357 = arith.addf %356, %355 : vector<16x128xf32>
    %cst_156 = arith.constant 5.000000e-01 : f32
    %358 = vector.broadcast %cst_156 : f32 to vector<16x128xf32>
    %359 = arith.mulf %358, %357 : vector<16x128xf32>
    %360 = arith.mulf %347, %359 : vector<16x128xf32>
    %c1_157 = arith.constant 1 : index
    %c0_158 = arith.constant 0 : index
    %c0_159 = arith.constant 0 : index
    %361 = vector.load %arg13[%c1_157, %c0_158, %c0_159] : memref<2x128x32xf32, #tpu.memory_space<vmem>>, vector<1x128x32xf32>
    %362 = vector.shape_cast %361 : vector<1x128x32xf32> to vector<128x32xf32>
    %cst_160 = arith.constant dense<0.000000e+00> : vector<16x32xf32>
    %363 = tpu.matmul %360, %362, %cst_160 {dimension_numbers = #tpu.dot_dimension_numbers<[1], [0], [0], [1], [0, 0, 1, 1], [], []>} : vector<16x128xf32>, vector<128x32xf32>, vector<16x32xf32> -> vector<16x32xf32>
    %364 = arith.addf %316, %363 : vector<16x32xf32>
    %c1_161 = arith.constant 1 : index
    %c0_162 = arith.constant 0 : index
    %c0_163 = arith.constant 0 : index
    %365 = vector.load %arg14[%c1_161, %c0_162, %c0_163] : memref<2x1x32xf32, #tpu.memory_space<vmem>>, vector<1x1x32xf32>
    %366 = vector.shape_cast %365 : vector<1x1x32xf32> to vector<1x32xf32>
    %367 = vector.broadcast %366 : vector<1x32xf32> to vector<16x32xf32>
    %368 = arith.addf %364, %367 : vector<16x32xf32>
    %c0_164 = arith.constant 0 : index
    %c0_165 = arith.constant 0 : index
    %369 = vector.load %arg15[%c0_164, %c0_165] : memref<1x32xf32, #tpu.memory_space<vmem>>, vector<1x32xf32>
    %c0_166 = arith.constant 0 : index
    %c0_167 = arith.constant 0 : index
    %370 = vector.load %arg16[%c0_166, %c0_167] : memref<1x32xf32, #tpu.memory_space<vmem>>, vector<1x32xf32>
    %cst_168 = arith.constant dense<0.000000e+00> : vector<16xf32>
    %371 = vector.multi_reduction <add>, %368, %cst_168 [1] : vector<16x32xf32> to vector<16xf32>
    %372 = vector.shape_cast %371 : vector<16xf32> to vector<16x1xf32>
    %cst_169 = arith.constant 3.200000e+01 : f32
    %373 = vector.broadcast %cst_169 : f32 to vector<16x1xf32>
    %374 = arith.divf %372, %373 : vector<16x1xf32>
    %375 = vector.broadcast %374 : vector<16x1xf32> to vector<16x32xf32>
    %376 = arith.subf %368, %375 : vector<16x32xf32>
    %377 = arith.mulf %376, %376 : vector<16x32xf32>
    %cst_170 = arith.constant dense<0.000000e+00> : vector<16xf32>
    %378 = vector.multi_reduction <add>, %377, %cst_170 [1] : vector<16x32xf32> to vector<16xf32>
    %379 = vector.shape_cast %378 : vector<16xf32> to vector<16x1xf32>
    %cst_171 = arith.constant 3.200000e+01 : f32
    %380 = vector.broadcast %cst_171 : f32 to vector<16x1xf32>
    %381 = arith.divf %379, %380 : vector<16x1xf32>
    %cst_172 = arith.constant 9.99999974E-6 : f32
    %382 = vector.broadcast %cst_172 : f32 to vector<16x1xf32>
    %383 = arith.addf %381, %382 : vector<16x1xf32>
    %384 = math.rsqrt %383 : vector<16x1xf32>
    %385 = vector.broadcast %384 : vector<16x1xf32> to vector<16x32xf32>
    %386 = arith.mulf %376, %385 : vector<16x32xf32>
    %387 = vector.broadcast %369 : vector<1x32xf32> to vector<16x32xf32>
    %388 = arith.mulf %386, %387 : vector<16x32xf32>
    %389 = vector.broadcast %370 : vector<1x32xf32> to vector<16x32xf32>
    %390 = arith.addf %388, %389 : vector<16x32xf32>
    %c0_173 = arith.constant 0 : index
    %c0_174 = arith.constant 0 : index
    %391 = vector.load %arg2[%c0_173, %c0_174] : memref<16x1xf32, #tpu.memory_space<vmem>>, vector<16x1xf32>
    %392 = vector.broadcast %391 : vector<16x1xf32> to vector<16x32xf32>
    %393 = arith.mulf %390, %392 : vector<16x32xf32>
    %cst_175 = arith.constant dense<0.000000e+00> : vector<32xf32>
    %394 = vector.multi_reduction <add>, %393, %cst_175 [0] : vector<16x32xf32> to vector<32xf32>
    %395 = vector.shape_cast %394 : vector<32xf32> to vector<1x32xf32>
    %c0_176 = arith.constant 0 : index
    %c0_177 = arith.constant 0 : index
    %396 = vector.load %arg17[%c0_176, %c0_177] : memref<32x128xf32, #tpu.memory_space<vmem>>, vector<32x128xf32>
    %cst_178 = arith.constant dense<0.000000e+00> : vector<1x128xf32>
    %397 = tpu.matmul %395, %396, %cst_178 {dimension_numbers = #tpu.dot_dimension_numbers<[1], [0], [0], [1], [0, 0, 1, 1], [], []>} : vector<1x32xf32>, vector<32x128xf32>, vector<1x128xf32> -> vector<1x128xf32>
    %c0_179 = arith.constant 0 : index
    %c0_180 = arith.constant 0 : index
    %c0_181 = arith.constant 0 : index
    %398 = vector.load %arg18[%c0_179, %c0_180, %c0_181] : memref<1x1x128xf32, #tpu.memory_space<vmem>>, vector<1x1x128xf32>
    %399 = vector.shape_cast %398 : vector<1x1x128xf32> to vector<1x128xf32>
    %400 = vector.shape_cast %397 : vector<1x128xf32> to vector<1x1x128xf32>
    tpu.vector_store %arg18[%c0_179, %c0_180, %c0_181], %400 {strides = array<i32>} : memref<1x1x128xf32, #tpu.memory_space<vmem>>, vector<1x1x128xf32>,
    return
  }
  func.func @transform_0(%arg0: i32) -> (i32, i32, i32) {
    %c0_i32 = arith.constant 0 : i32
    %c0_i32_0 = arith.constant 0 : i32
    %c0_i32_1 = arith.constant 0 : i32
    return %arg0, %c0_i32, %c0_i32_0 : i32, i32, i32
  }
  func.func @transform_1(%arg0: i32) -> (i32, i32) {
    %c0_i32 = arith.constant 0 : i32
    %c0_i32_0 = arith.constant 0 : i32
    %c0_i32_1 = arith.constant 0 : i32
    return %c0_i32, %c0_i32_0 : i32, i32
  }
  func.func @transform_2(%arg0: i32) -> (i32, i32, i32) {
    %c0_i32 = arith.constant 0 : i32
    %c0_i32_0 = arith.constant 0 : i32
    %c0_i32_1 = arith.constant 0 : i32
    %c0_i32_2 = arith.constant 0 : i32
    return %c0_i32, %c0_i32_0, %c0_i32_1 : i32, i32, i32
  }
  func.func @transform_3(%arg0: i32) -> (i32, i32, i32) {
    %c0_i32 = arith.constant 0 : i32
    %c0_i32_0 = arith.constant 0 : i32
    %c0_i32_1 = arith.constant 0 : i32
    %c0_i32_2 = arith.constant 0 : i32
    return %c0_i32, %c0_i32_0, %c0_i32_1 : i32, i32, i32
  }
  func.func @transform_4(%arg0: i32) -> (i32, i32, i32) {
    %c0_i32 = arith.constant 0 : i32
    %c0_i32_0 = arith.constant 0 : i32
    %c0_i32_1 = arith.constant 0 : i32
    %c0_i32_2 = arith.constant 0 : i32
    return %c0_i32, %c0_i32_0, %c0_i32_1 : i32, i32, i32
  }
  func.func @transform_5(%arg0: i32) -> (i32, i32, i32) {
    %c0_i32 = arith.constant 0 : i32
    %c0_i32_0 = arith.constant 0 : i32
    %c0_i32_1 = arith.constant 0 : i32
    %c0_i32_2 = arith.constant 0 : i32
    return %c0_i32, %c0_i32_0, %c0_i32_1 : i32, i32, i32
  }
  func.func @transform_6(%arg0: i32) -> (i32, i32, i32) {
    %c0_i32 = arith.constant 0 : i32
    %c0_i32_0 = arith.constant 0 : i32
    %c0_i32_1 = arith.constant 0 : i32
    %c0_i32_2 = arith.constant 0 : i32
    return %c0_i32, %c0_i32_0, %c0_i32_1 : i32, i32, i32
  }
  func.func @transform_7(%arg0: i32) -> (i32, i32, i32) {
    %c0_i32 = arith.constant 0 : i32
    %c0_i32_0 = arith.constant 0 : i32
    %c0_i32_1 = arith.constant 0 : i32
    %c0_i32_2 = arith.constant 0 : i32
    return %c0_i32, %c0_i32_0, %c0_i32_1 : i32, i32, i32
  }
  func.func @transform_8(%arg0: i32) -> (i32, i32, i32) {
    %c0_i32 = arith.constant 0 : i32
    %c0_i32_0 = arith.constant 0 : i32
    %c0_i32_1 = arith.constant 0 : i32
    %c0_i32_2 = arith.constant 0 : i32
    return %c0_i32, %c0_i32_0, %c0_i32_1 : i32, i32, i32
  }
  func.func @transform_9(%arg0: i32) -> (i32, i32, i32) {
    %c0_i32 = arith.constant 0 : i32
    %c0_i32_0 = arith.constant 0 : i32
    %c0_i32_1 = arith.constant 0 : i32
    %c0_i32_2 = arith.constant 0 : i32
    return %c0_i32, %c0_i32_0, %c0_i32_1 : i32, i32, i32
  }
  func.func @transform_10(%arg0: i32) -> (i32, i32, i32) {
    %c0_i32 = arith.constant 0 : i32
    %c0_i32_0 = arith.constant 0 : i32
    %c0_i32_1 = arith.constant 0 : i32
    %c0_i32_2 = arith.constant 0 : i32
    return %c0_i32, %c0_i32_0, %c0_i32_1 : i32, i32, i32
  }
  func.func @transform_11(%arg0: i32) -> (i32, i32, i32) {
    %c0_i32 = arith.constant 0 : i32
    %c0_i32_0 = arith.constant 0 : i32
    %c0_i32_1 = arith.constant 0 : i32
    %c0_i32_2 = arith.constant 0 : i32
    return %c0_i32, %c0_i32_0, %c0_i32_1 : i32, i32, i32
  }
  func.func @transform_12(%arg0: i32) -> (i32, i32, i32) {
    %c0_i32 = arith.constant 0 : i32
    %c0_i32_0 = arith.constant 0 : i32
    %c0_i32_1 = arith.constant 0 : i32
    %c0_i32_2 = arith.constant 0 : i32
    return %c0_i32, %c0_i32_0, %c0_i32_1 : i32, i32, i32
  }
  func.func @transform_13(%arg0: i32) -> (i32, i32, i32) {
    %c0_i32 = arith.constant 0 : i32
    %c0_i32_0 = arith.constant 0 : i32
    %c0_i32_1 = arith.constant 0 : i32
    %c0_i32_2 = arith.constant 0 : i32
    return %c0_i32, %c0_i32_0, %c0_i32_1 : i32, i32, i32
  }
  func.func @transform_14(%arg0: i32) -> (i32, i32) {
    %c0_i32 = arith.constant 0 : i32
    %c0_i32_0 = arith.constant 0 : i32
    %c0_i32_1 = arith.constant 0 : i32
    return %c0_i32, %c0_i32_0 : i32, i32
  }
  func.func @transform_15(%arg0: i32) -> (i32, i32) {
    %c0_i32 = arith.constant 0 : i32
    %c0_i32_0 = arith.constant 0 : i32
    %c0_i32_1 = arith.constant 0 : i32
    return %c0_i32, %c0_i32_0 : i32, i32
  }
  func.func @transform_16(%arg0: i32) -> (i32, i32) {
    %c0_i32 = arith.constant 0 : i32
    %c0_i32_0 = arith.constant 0 : i32
    %c0_i32_1 = arith.constant 0 : i32
    return %c0_i32, %c0_i32_0 : i32, i32
  }
  func.func @transform_17(%arg0: i32) -> (i32, i32, i32) {
    %c0_i32 = arith.constant 0 : i32
    %c0_i32_0 = arith.constant 0 : i32
    %c0_i32_1 = arith.constant 0 : i32
    return %arg0, %c0_i32, %c0_i32_0 : i32, i32, i32
  }
}

</mosaic_0001>

<llo_original>
// kernel: closed_call.21
$region0: #{closed_call.21}
  #allocation0 [shape = 'u32[]', space=smem, size = 0x4, offset = 0x4, fixed_abs, tag = 'smem constant byte address 0x4 - core index']
  #allocation1 [shape = 'u32[144,128]{1,0:T(1,128)}', space=vmem, size = 0x12000, scoped, tag = 'internal scratch']
  %s0 = inlined_call_operand.vmem [shape: f32[2,16,32], index: 0, kind: input, shape index: {}]
  %s1 = inlined_call_operand.vmem [shape: f32[16,1], index: 1, kind: input, shape index: {}]
  %s2 = inlined_call_operand.vmem [shape: f32[2,1,32], index: 2, kind: input, shape index: {}]
  %s3 = inlined_call_operand.vmem [shape: f32[2,1,32], index: 3, kind: input, shape index: {}]
  %s4 = inlined_call_operand.vmem [shape: f32[2,32,96], index: 4, kind: input, shape index: {}]
  %s5 = inlined_call_operand.vmem [shape: f32[2,1,96], index: 5, kind: input, shape index: {}]
  %s6 = inlined_call_operand.vmem [shape: f32[2,32,32], index: 6, kind: input, shape index: {}]
  %s7 = inlined_call_operand.vmem [shape: f32[2,1,32], index: 7, kind: input, shape index: {}]
  %s8 = inlined_call_operand.vmem [shape: f32[2,1,32], index: 8, kind: input, shape index: {}]
  %s9 = inlined_call_operand.vmem [shape: f32[2,1,32], index: 9, kind: input, shape index: {}]
  %s10 = inlined_call_operand.vmem [shape: f32[2,32,128], index: 10, kind: input, shape index: {}]
  %s11 = inlined_call_operand.vmem [shape: f32[2,1,128], index: 11, kind: input, shape index: {}]
  %s12 = inlined_call_operand.vmem [shape: f32[2,128,32], index: 12, kind: input, shape index: {}]
  %s13 = inlined_call_operand.vmem [shape: f32[2,1,32], index: 13, kind: input, shape index: {}]
  %s14 = inlined_call_operand.vmem [shape: f32[1,32], index: 14, kind: input, shape index: {}]
  %s15 = inlined_call_operand.vmem [shape: f32[1,32], index: 15, kind: input, shape index: {}]
  %s16 = inlined_call_operand.vmem [shape: f32[32,128], index: 16, kind: input, shape index: {}]
  %s17 = inlined_call_operand.vmem [shape: f32[2,1,128], index: 17, kind: output, shape index: {}]
  %s18 = sld [smem:[#allocation0]]
  $region101: #{closed_call.21} parent=0
    _
  %s20 = ssub.s32 1, %s18
  %s21 = scalar_select 0, %s20, %s18
  loop: start=0, step=1, limit=4
  $region2: #{closed_call.21} parent=0 // loop_pre_header
    _
  $region3: #{closed_call.21} parent=0 // loop_header
    %s23 = sphi 0, %s27
    %p24 = scmp.ge.s32.totalorder %s23, 4
    %s33 = sphi 0, %s35
    %s36 = sphi 0, %s33
    %s37 = sphi 0, %s36
    %s53 = sphi 0, %s37
    %s57 = sphi 0, %s57
    %s59 = sphi 0, %s57
    %s60 = sphi 0, %s59
    %s74 = sphi 0, %s60
    %s78 = sphi 0, %s78
    %s80 = sphi 0, %s78
    %s81 = sphi 0, %s80
    %s95 = sphi 0, %s81
    %s99 = sphi 0, %s99
    %s101 = sphi 0, %s99
    %s102 = sphi 0, %s101
    %s116 = sphi 0, %s102
    %s120 = sphi 0, %s120
    %s122 = sphi 0, %s120
    %s123 = sphi 0, %s122
    %s137 = sphi 0, %s123
    %s141 = sphi 0, %s141
    %s143 = sphi 0, %s141
    %s144 = sphi 0, %s143
    %s158 = sphi 0, %s144
    %s162 = sphi 0, %s162
    %s164 = sphi 0, %s162
    %s165 = sphi 0, %s164
    %s179 = sphi 0, %s165
    %s183 = sphi 0, %s183
    %s185 = sphi 0, %s183
    %s186 = sphi 0, %s185
    %s200 = sphi 0, %s186
    %s204 = sphi 0, %s204
    %s206 = sphi 0, %s204
    %s207 = sphi 0, %s206
    %s221 = sphi 0, %s207
    %s225 = sphi 0, %s225
    %s227 = sphi 0, %s225
    %s228 = sphi 0, %s227
    %s242 = sphi 0, %s228
    %s246 = sphi 0, %s246
    %s248 = sphi 0, %s246
    %s249 = sphi 0, %s248
    %s263 = sphi 0, %s249
    %s267 = sphi 0, %s267
    %s269 = sphi 0, %s267
    %s270 = sphi 0, %s269
    %s284 = sphi 0, %s270
    %s288 = sphi 0, %s288
    %s290 = sphi 0, %s288
    %s291 = sphi 0, %s290
    %s305 = sphi 0, %s291
    %s309 = sphi 0, %s309
    %s311 = sphi 0, %s309
    %s312 = sphi 0, %s311
    %s326 = sphi 0, %s312
    %s330 = sphi 0, %s330
    %s332 = sphi 0, %s330
    %s333 = sphi 0, %s332
    %s347 = sphi 0, %s333
    %s351 = sphi 0, %s351
    %s353 = sphi 0, %s351
    %s354 = sphi 0, %s353
    %s368 = sphi 0, %s354
    %s372 = sphi 0, %s372
    %s374 = sphi 0, %s372
    %s375 = sphi 0, %s374
    %s389 = sphi 0, %s375
    %s395 = sphi 0, %s397
    %s398 = sphi 0, %s395
    %s399 = sphi 0, %s398
    %s415 = sphi 0, %s399
  $region4: #{closed_call.21} parent=0 // loop_header_branch
    %26 = sbr.rel (%p24) target = $region8
  $region5: #{closed_call.21} parent=0 // loop_body
    %s28 = ssub.s32 %s23, 1
    %s29 = ssub.s32 %s23, 2
    %s30 = sadd.s32 %s23, 1
    %s31 = ssub.s32 %s23, %s30
    %p32 = scmp.eq.s32.totalorder %s31, 0
    %s34 = sadd.s32 %s33, 1
    %s35 = scalar_select %p32, %s33, %s34
    %p38 = pneg %p32
    %p39 = scmp.eq.s32.totalorder %s23, 1
    %p40 = por %p38, %p39
    %p41 = scmp.ne.s32.totalorder %s33, %s36
    %p42 = scmp.eq.s32.totalorder %s23, 0
    %p43 = por %p41, %p42
    %p44 = scmp.ne.s32.totalorder %s33, %s36
    %p45 = scmp.eq.s32.totalorder %s28, 1
    %p46 = por %p44, %p45
    %p47 = scmp.ne.s32.totalorder %s36, %s37
    %p48 = scmp.eq.s32.totalorder %s28, 0
    %p49 = por %p47, %p48
    %p50 = scmp.ne.s32.totalorder %s36, %s37
    %p51 = scmp.eq.s32.totalorder %s29, 1
    %p52 = por %p50, %p51
    %p54 = scmp.ne.s32.totalorder %s37, %s53
    %p55 = scmp.eq.s32.totalorder %s29, 0
    %p56 = por %p54, %p55
    %s58 = sadd.s32 %s57, 1
    %p61 = scmp.eq.s32.totalorder %s23, 1
    %p62 = scmp.ne.s32.totalorder %s57, %s59
    %p63 = scmp.eq.s32.totalorder %s23, 0
    %p64 = por %p62, %p63
    %p65 = scmp.ne.s32.totalorder %s57, %s59
    %p66 = scmp.eq.s32.totalorder %s28, 1
    %p67 = por %p65, %p66
    %p68 = scmp.ne.s32.totalorder %s59, %s60
    %p69 = scmp.eq.s32.totalorder %s28, 0
    %p70 = por %p68, %p69
    %p71 = scmp.ne.s32.totalorder %s59, %s60
    %p72 = scmp.eq.s32.totalorder %s29, 1
    %p73 = por %p71, %p72
    %p75 = scmp.ne.s32.totalorder %s60, %s74
    %p76 = scmp.eq.s32.totalorder %s29, 0
    %p77 = por %p75, %p76
    %s79 = sadd.s32 %s78, 1
    %p82 = scmp.eq.s32.totalorder %s23, 1
    %p83 = scmp.ne.s32.totalorder %s78, %s80
    %p84 = scmp.eq.s32.totalorder %s23, 0
    %p85 = por %p83, %p84
    %p86 = scmp.ne.s32.totalorder %s78, %s80
    %p87 = scmp.eq.s32.totalorder %s28, 1
    %p88 = por %p86, %p87
    %p89 = scmp.ne.s32.totalorder %s80, %s81
    %p90 = scmp.eq.s32.totalorder %s28, 0
    %p91 = por %p89, %p90
    %p92 = scmp.ne.s32.totalorder %s80, %s81
    %p93 = scmp.eq.s32.totalorder %s29, 1
    %p94 = por %p92, %p93
    %p96 = scmp.ne.s32.totalorder %s81, %s95
    %p97 = scmp.eq.s32.totalorder %s29, 0
    %p98 = por %p96, %p97
    %s100 = sadd.s32 %s99, 1
    %p103 = scmp.eq.s32.totalorder %s23, 1
    %p104 = scmp.ne.s32.totalorder %s99, %s101
    %p105 = scmp.eq.s32.totalorder %s23, 0
    %p106 = por %p104, %p105
    %p107 = scmp.ne.s32.totalorder %s99, %s101
    %p108 = scmp.eq.s32.totalorder %s28, 1
    %p109 = por %p107, %p108
    %p110 = scmp.ne.s32.totalorder %s101, %s102
    %p111 = scmp.eq.s32.totalorder %s28, 0
    %p112 = por %p110, %p111
    %p113 = scmp.ne.s32.totalorder %s101, %s102
    %p114 = scmp.eq.s32.totalorder %s29, 1
    %p115 = por %p113, %p114
    %p117 = scmp.ne.s32.totalorder %s102, %s116
    %p118 = scmp.eq.s32.totalorder %s29, 0
    %p119 = por %p117, %p118
    %s121 = sadd.s32 %s120, 1
    %p124 = scmp.eq.s32.totalorder %s23, 1
    %p125 = scmp.ne.s32.totalorder %s120, %s122
    %p126 = scmp.eq.s32.totalorder %s23, 0
    %p127 = por %p125, %p126
    %p128 = scmp.ne.s32.totalorder %s120, %s122
    %p129 = scmp.eq.s32.totalorder %s28, 1
    %p130 = por %p128, %p129
    %p131 = scmp.ne.s32.totalorder %s122, %s123
    %p132 = scmp.eq.s32.totalorder %s28, 0
    %p133 = por %p131, %p132
    %p134 = scmp.ne.s32.totalorder %s122, %s123
    %p135 = scmp.eq.s32.totalorder %s29, 1
    %p136 = por %p134, %p135
    %p138 = scmp.ne.s32.totalorder %s123, %s137
    %p139 = scmp.eq.s32.totalorder %s29, 0
    %p140 = por %p138, %p139
    %s142 = sadd.s32 %s141, 1
    %p145 = scmp.eq.s32.totalorder %s23, 1
    %p146 = scmp.ne.s32.totalorder %s141, %s143
    %p147 = scmp.eq.s32.totalorder %s23, 0
    %p148 = por %p146, %p147
    %p149 = scmp.ne.s32.totalorder %s141, %s143
    %p150 = scmp.eq.s32.totalorder %s28, 1
    %p151 = por %p149, %p150
    %p152 = scmp.ne.s32.totalorder %s143, %s144
    %p153 = scmp.eq.s32.totalorder %s28, 0
    %p154 = por %p152, %p153
    %p155 = scmp.ne.s32.totalorder %s143, %s144
    %p156 = scmp.eq.s32.totalorder %s29, 1
    %p157 = por %p155, %p156
    %p159 = scmp.ne.s32.totalorder %s144, %s158
    %p160 = scmp.eq.s32.totalorder %s29, 0
    %p161 = por %p159, %p160
    %s163 = sadd.s32 %s162, 1
    %p166 = scmp.eq.s32.totalorder %s23, 1
    %p167 = scmp.ne.s32.totalorder %s162, %s164
    %p168 = scmp.eq.s32.totalorder %s23, 0
    %p169 = por %p167, %p168
    %p170 = scmp.ne.s32.totalorder %s162, %s164
    %p171 = scmp.eq.s32.totalorder %s28, 1
    %p172 = por %p170, %p171
    %p173 = scmp.ne.s32.totalorder %s164, %s165
    %p174 = scmp.eq.s32.totalorder %s28, 0
    %p175 = por %p173, %p174
    %p176 = scmp.ne.s32.totalorder %s164, %s165
    %p177 = scmp.eq.s32.totalorder %s29, 1
    %p178 = por %p176, %p177
    %p180 = scmp.ne.s32.totalorder %s165, %s179
    %p181 = scmp.eq.s32.totalorder %s29, 0
    %p182 = por %p180, %p181
    %s184 = sadd.s32 %s183, 1
    %p187 = scmp.eq.s32.totalorder %s23, 1
    %p188 = scmp.ne.s32.totalorder %s183, %s185
    %p189 = scmp.eq.s32.totalorder %s23, 0
    %p190 = por %p188, %p189
    %p191 = scmp.ne.s32.totalorder %s183, %s185
    %p192 = scmp.eq.s32.totalorder %s28, 1
    %p193 = por %p191, %p192
    %p194 = scmp.ne.s32.totalorder %s185, %s186
    %p195 = scmp.eq.s32.totalorder %s28, 0
    %p196 = por %p194, %p195
    %p197 = scmp.ne.s32.totalorder %s185, %s186
    %p198 = scmp.eq.s32.totalorder %s29, 1
    %p199 = por %p197, %p198
    %p201 = scmp.ne.s32.totalorder %s186, %s200
    %p202 = scmp.eq.s32.totalorder %s29, 0
    %p203 = por %p201, %p202
    %s205 = sadd.s32 %s204, 1
    %p208 = scmp.eq.s32.totalorder %s23, 1
    %p209 = scmp.ne.s32.totalorder %s204, %s206
    %p210 = scmp.eq.s32.totalorder %s23, 0
    %p211 = por %p209, %p210
    %p212 = scmp.ne.s32.totalorder %s204, %s206
    %p213 = scmp.eq.s32.totalorder %s28, 1
    %p214 = por %p212, %p213
    %p215 = scmp.ne.s32.totalorder %s206, %s207
    %p216 = scmp.eq.s32.totalorder %s28, 0
    %p217 = por %p215, %p216
    %p218 = scmp.ne.s32.totalorder %s206, %s207
    %p219 = scmp.eq.s32.totalorder %s29, 1
    %p220 = por %p218, %p219
    %p222 = scmp.ne.s32.totalorder %s207, %s221
    %p223 = scmp.eq.s32.totalorder %s29, 0
    %p224 = por %p222, %p223
    %s226 = sadd.s32 %s225, 1
    %p229 = scmp.eq.s32.totalorder %s23, 1
    %p230 = scmp.ne.s32.totalorder %s225, %s227
    %p231 = scmp.eq.s32.totalorder %s23, 0
    %p232 = por %p230, %p231
    %p233 = scmp.ne.s32.totalorder %s225, %s227
    %p234 = scmp.eq.s32.totalorder %s28, 1
    %p235 = por %p233, %p234
    %p236 = scmp.ne.s32.totalorder %s227, %s228
    %p237 = scmp.eq.s32.totalorder %s28, 0
    %p238 = por %p236, %p237
    %p239 = scmp.ne.s32.totalorder %s227, %s228
    %p240 = scmp.eq.s32.totalorder %s29, 1
    %p241 = por %p239, %p240
    %p243 = scmp.ne.s32.totalorder %s228, %s242
    %p244 = scmp.eq.s32.totalorder %s29, 0
    %p245 = por %p243, %p244
    %s247 = sadd.s32 %s246, 1
    %p250 = scmp.eq.s32.totalorder %s23, 1
    %p251 = scmp.ne.s32.totalorder %s246, %s248
    %p252 = scmp.eq.s32.totalorder %s23, 0
    %p253 = por %p251, %p252
    %p254 = scmp.ne.s32.totalorder %s246, %s248
    %p255 = scmp.eq.s32.totalorder %s28, 1
    %p256 = por %p254, %p255
    %p257 = scmp.ne.s32.totalorder %s248, %s249
    %p258 = scmp.eq.s32.totalorder %s28, 0
    %p259 = por %p257, %p258
    %p260 = scmp.ne.s32.totalorder %s248, %s249
    %p261 = scmp.eq.s32.totalorder %s29, 1
    %p262 = por %p260, %p261
    %p264 = scmp.ne.s32.totalorder %s249, %s263
    %p265 = scmp.eq.s32.totalorder %s29, 0
    %p266 = por %p264, %p265
    %s268 = sadd.s32 %s267, 1
    %p271 = scmp.eq.s32.totalorder %s23, 1
    %p272 = scmp.ne.s32.totalorder %s267, %s269
    %p273 = scmp.eq.s32.totalorder %s23, 0
    %p274 = por %p272, %p273
    %p275 = scmp.ne.s32.totalorder %s267, %s269
    %p276 = scmp.eq.s32.totalorder %s28, 1
    %p277 = por %p275, %p276
    %p278 = scmp.ne.s32.totalorder %s269, %s270
    %p279 = scmp.eq.s32.totalorder %s28, 0
    %p280 = por %p278, %p279
    %p281 = scmp.ne.s32.totalorder %s269, %s270
    %p282 = scmp.eq.s32.totalorder %s29, 1
    %p283 = por %p281, %p282
    %p285 = scmp.ne.s32.totalorder %s270, %s284
    %p286 = scmp.eq.s32.totalorder %s29, 0
    %p287 = por %p285, %p286
    %s289 = sadd.s32 %s288, 1
    %p292 = scmp.eq.s32.totalorder %s23, 1
    %p293 = scmp.ne.s32.totalorder %s288, %s290
    %p294 = scmp.eq.s32.totalorder %s23, 0
    %p295 = por %p293, %p294
    %p296 = scmp.ne.s32.totalorder %s288, %s290
    %p297 = scmp.eq.s32.totalorder %s28, 1
    %p298 = por %p296, %p297
    %p299 = scmp.ne.s32.totalorder %s290, %s291
    %p300 = scmp.eq.s32.totalorder %s28, 0
    %p301 = por %p299, %p300
    %p302 = scmp.ne.s32.totalorder %s290, %s291
    %p303 = scmp.eq.s32.totalorder %s29, 1
    %p304 = por %p302, %p303
    %p306 = scmp.ne.s32.totalorder %s291, %s305
    %p307 = scmp.eq.s32.totalorder %s29, 0
    %p308 = por %p306, %p307
    %s310 = sadd.s32 %s309, 1
    %p313 = scmp.eq.s32.totalorder %s23, 1
    %p314 = scmp.ne.s32.totalorder %s309, %s311
    %p315 = scmp.eq.s32.totalorder %s23, 0
    %p316 = por %p314, %p315
    %p317 = scmp.ne.s32.totalorder %s309, %s311
    %p318 = scmp.eq.s32.totalorder %s28, 1
    %p319 = por %p317, %p318
    %p320 = scmp.ne.s32.totalorder %s311, %s312
    %p321 = scmp.eq.s32.totalorder %s28, 0
    %p322 = por %p320, %p321
    %p323 = scmp.ne.s32.totalorder %s311, %s312
    %p324 = scmp.eq.s32.totalorder %s29, 1
    %p325 = por %p323, %p324
    %p327 = scmp.ne.s32.totalorder %s312, %s326
    %p328 = scmp.eq.s32.totalorder %s29, 0
    %p329 = por %p327, %p328
    %s331 = sadd.s32 %s330, 1
    %p334 = scmp.eq.s32.totalorder %s23, 1
    %p335 = scmp.ne.s32.totalorder %s330, %s332
    %p336 = scmp.eq.s32.totalorder %s23, 0
    %p337 = por %p335, %p336
    %p338 = scmp.ne.s32.totalorder %s330, %s332
    %p339 = scmp.eq.s32.totalorder %s28, 1
    %p340 = por %p338, %p339
    %p341 = scmp.ne.s32.totalorder %s332, %s333
    %p342 = scmp.eq.s32.totalorder %s28, 0
    %p343 = por %p341, %p342
    %p344 = scmp.ne.s32.totalorder %s332, %s333
    %p345 = scmp.eq.s32.totalorder %s29, 1
    %p346 = por %p344, %p345
    %p348 = scmp.ne.s32.totalorder %s333, %s347
    %p349 = scmp.eq.s32.totalorder %s29, 0
    %p350 = por %p348, %p349
    %s352 = sadd.s32 %s351, 1
    %p355 = scmp.eq.s32.totalorder %s23, 1
    %p356 = scmp.ne.s32.totalorder %s351, %s353
    %p357 = scmp.eq.s32.totalorder %s23, 0
    %p358 = por %p356, %p357
    %p359 = scmp.ne.s32.totalorder %s351, %s353
    %p360 = scmp.eq.s32.totalorder %s28, 1
    %p361 = por %p359, %p360
    %p362 = scmp.ne.s32.totalorder %s353, %s354
    %p363 = scmp.eq.s32.totalorder %s28, 0
    %p364 = por %p362, %p363
    %p365 = scmp.ne.s32.totalorder %s353, %s354
    %p366 = scmp.eq.s32.totalorder %s29, 1
    %p367 = por %p365, %p366
    %p369 = scmp.ne.s32.totalorder %s354, %s368
    %p370 = scmp.eq.s32.totalorder %s29, 0
    %p371 = por %p369, %p370
    %s373 = sadd.s32 %s372, 1
    %p376 = scmp.eq.s32.totalorder %s23, 1
    %p377 = scmp.ne.s32.totalorder %s372, %s374
    %p378 = scmp.eq.s32.totalorder %s23, 0
    %p379 = por %p377, %p378
    %p380 = scmp.ne.s32.totalorder %s372, %s374
    %p381 = scmp.eq.s32.totalorder %s28, 1
    %p382 = por %p380, %p381
    %p383 = scmp.ne.s32.totalorder %s374, %s375
    %p384 = scmp.eq.s32.totalorder %s28, 0
    %p385 = por %p383, %p384
    %p386 = scmp.ne.s32.totalorder %s374, %s375
    %p387 = scmp.eq.s32.totalorder %s29, 1
    %p388 = por %p386, %p387
    %p390 = scmp.ne.s32.totalorder %s375, %s389
    %p391 = scmp.eq.s32.totalorder %s29, 0
    %p392 = por %p390, %p391
    %s393 = ssub.s32 %s23, %s30
    %p394 = scmp.eq.s32.totalorder %s393, 0
    %s396 = sadd.s32 %s395, 1
    %s397 = scalar_select %p394, %s395, %s396
    %p400 = pneg %p394
    %p401 = scmp.eq.s32.totalorder %s23, 1
    %p402 = por %p400, %p401
    %p403 = scmp.ne.s32.totalorder %s395, %s398
    %p404 = scmp.eq.s32.totalorder %s23, 0
    %p405 = por %p403, %p404
    %p406 = scmp.ne.s32.totalorder %s395, %s398
    %p407 = scmp.eq.s32.totalorder %s28, 1
    %p408 = por %p406, %p407
    %p409 = scmp.ne.s32.totalorder %s398, %s399
    %p410 = scmp.eq.s32.totalorder %s28, 0
    %p411 = por %p409, %p410
    %p412 = scmp.ne.s32.totalorder %s398, %s399
    %p413 = scmp.eq.s32.totalorder %s29, 1
    %p414 = por %p412, %p413
    %p416 = scmp.ne.s32.totalorder %s399, %s415
    %p417 = scmp.eq.s32.totalorder %s29, 0
    %p418 = por %p416, %p417
    %p419 = scmp.le.s32.totalorder 1, %s23
    %p420 = scmp.lt.s32.totalorder %s23, 3
    %p421 = pnand %p419, %p420
    %p422 = pneg %p421
    // Predicated region
    $region9: #{closed_call.21} parent=5 // pred_check
      _
    $region10: #{closed_call.21} parent=5 // pred_check_branch
      %424 = sbr.rel (%p421) target = $region12
    $region11: #{closed_call.21} parent=5 // pred_region
      %s425 = ssub.s32 %s23, 1
      // Predicated region
      $region13: #{closed_call.21} parent=11 // pred_check
        %p426 = pneg %p70
      $region14: #{closed_call.21} parent=11 // pred_check_branch
        %428 = sbr.rel (%p426) target = $region16
      $region15: #{closed_call.21} parent=11 // pred_region
        _
      $region16: #{closed_call.21} parent=11 // pred_fallthru
        _
      // Predicated region
      $region17: #{closed_call.21} parent=11 // pred_check
        %p429 = pneg %p91
      $region18: #{closed_call.21} parent=11 // pred_check_branch
        %431 = sbr.rel (%p429) target = $region20
      $region19: #{closed_call.21} parent=11 // pred_region
        _
      $region20: #{closed_call.21} parent=11 // pred_fallthru
        _
      // Predicated region
      $region21: #{closed_call.21} parent=11 // pred_check
        %p432 = pneg %p112
      $region22: #{closed_call.21} parent=11 // pred_check_branch
        %434 = sbr.rel (%p432) target = $region24
      $region23: #{closed_call.21} parent=11 // pred_region
        _
      $region24: #{closed_call.21} parent=11 // pred_fallthru
        _
      // Predicated region
      $region25: #{closed_call.21} parent=11 // pred_check
        %p435 = pneg %p133
      $region26: #{closed_call.21} parent=11 // pred_check_branch
        %437 = sbr.rel (%p435) target = $region28
      $region27: #{closed_call.21} parent=11 // pred_region
        _
      $region28: #{closed_call.21} parent=11 // pred_fallthru
        _
      // Predicated region
      $region29: #{closed_call.21} parent=11 // pred_check
        %p438 = pneg %p154
      $region30: #{closed_call.21} parent=11 // pred_check_branch
        %440 = sbr.rel (%p438) target = $region32
      $region31: #{closed_call.21} parent=11 // pred_region
        _
      $region32: #{closed_call.21} parent=11 // pred_fallthru
        _
      // Predicated region
      $region33: #{closed_call.21} parent=11 // pred_check
        %p441 = pneg %p175
      $region34: #{closed_call.21} parent=11 // pred_check_branch
        %443 = sbr.rel (%p441) target = $region36
      $region35: #{closed_call.21} parent=11 // pred_region
        _
      $region36: #{closed_call.21} parent=11 // pred_fallthru
        _
      // Predicated region
      $region37: #{closed_call.21} parent=11 // pred_check
        %p444 = pneg %p196
      $region38: #{closed_call.21} parent=11 // pred_check_branch
        %446 = sbr.rel (%p444) target = $region40
      $region39: #{closed_call.21} parent=11 // pred_region
        _
      $region40: #{closed_call.21} parent=11 // pred_fallthru
        _
      // Predicated region
      $region41: #{closed_call.21} parent=11 // pred_check
        %p447 = pneg %p217
      $region42: #{closed_call.21} parent=11 // pred_check_branch
        %449 = sbr.rel (%p447) target = $region44
      $region43: #{closed_call.21} parent=11 // pred_region
        _
      $region44: #{closed_call.21} parent=11 // pred_fallthru
        _
      // Predicated region
      $region45: #{closed_call.21} parent=11 // pred_check
        %p450 = pneg %p238
      $region46: #{closed_call.21} parent=11 // pred_check_branch
        %452 = sbr.rel (%p450) target = $region48
      $region47: #{closed_call.21} parent=11 // pred_region
        _
      $region48: #{closed_call.21} parent=11 // pred_fallthru
        _
      // Predicated region
      $region49: #{closed_call.21} parent=11 // pred_check
        %p453 = pneg %p259
      $region50: #{closed_call.21} parent=11 // pred_check_branch
        %455 = sbr.rel (%p453) target = $region52
      $region51: #{closed_call.21} parent=11 // pred_region
        _
      $region52: #{closed_call.21} parent=11 // pred_fallthru
        _
      // Predicated region
      $region53: #{closed_call.21} parent=11 // pred_check
        %p456 = pneg %p280
      $region54: #{closed_call.21} parent=11 // pred_check_branch
        %458 = sbr.rel (%p456) target = $region56
      $region55: #{closed_call.21} parent=11 // pred_region
        _
      $region56: #{closed_call.21} parent=11 // pred_fallthru
        _
      // Predicated region
      $region57: #{closed_call.21} parent=11 // pred_check
        %p459 = pneg %p301
      $region58: #{closed_call.21} parent=11 // pred_check_branch
        %461 = sbr.rel (%p459) target = $region60
      $region59: #{closed_call.21} parent=11 // pred_region
        _
      $region60: #{closed_call.21} parent=11 // pred_fallthru
        _
      // Predicated region
      $region61: #{closed_call.21} parent=11 // pred_check
        %p462 = pneg %p322
      $region62: #{closed_call.21} parent=11 // pred_check_branch
        %464 = sbr.rel (%p462) target = $region64
      $region63: #{closed_call.21} parent=11 // pred_region
        _
      $region64: #{closed_call.21} parent=11 // pred_fallthru
        _
      // Predicated region
      $region65: #{closed_call.21} parent=11 // pred_check
        %p465 = pneg %p343
      $region66: #{closed_call.21} parent=11 // pred_check_branch
        %467 = sbr.rel (%p465) target = $region68
      $region67: #{closed_call.21} parent=11 // pred_region
        _
      $region68: #{closed_call.21} parent=11 // pred_fallthru
        _
      // Predicated region
      $region69: #{closed_call.21} parent=11 // pred_check
        %p468 = pneg %p364
      $region70: #{closed_call.21} parent=11 // pred_check_branch
        %470 = sbr.rel (%p468) target = $region72
      $region71: #{closed_call.21} parent=11 // pred_region
        _
      $region72: #{closed_call.21} parent=11 // pred_fallthru
        _
      // Predicated region
      $region73: #{closed_call.21} parent=11 // pred_check
        %p471 = pneg %p385
      $region74: #{closed_call.21} parent=11 // pred_check_branch
        %473 = sbr.rel (%p471) target = $region76
      $region75: #{closed_call.21} parent=11 // pred_region
        _
      $region76: #{closed_call.21} parent=11 // pred_fallthru
        _
    $region12: #{closed_call.21} parent=5 // pred_fallthru
      _
    %p474 = scmp.lt.s32.totalorder %s23, 2
    // Predicated region
    $region77: #{closed_call.21} parent=5 // pred_check
      %p475 = pneg %p474
    $region78: #{closed_call.21} parent=5 // pred_check_branch
      %477 = sbr.rel (%p475) target = $region80
    $region79: #{closed_call.21} parent=5 // pred_region
      // Predicated region
      $region81: #{closed_call.21} parent=79 // pred_check
        %p478 = pneg %p43
      $region82: #{closed_call.21} parent=79 // pred_check_branch
        %480 = sbr.rel (%p478) target = $region84
      $region83: #{closed_call.21} parent=79 // pred_region
        %p481 = scmp.lt.s32.totalorder %s23, 1
        %s482 = scalar_select %p481, %s23, 1
        %s483 = smul.addr %s482, 2
        %s484 = smul.addr %s483, 8
        %s485 = scalar_lea.vmem %s0, %s484
      $region84: #{closed_call.21} parent=79 // pred_fallthru
        _
    $region80: #{closed_call.21} parent=5 // pred_fallthru
      _
    %p486 = scmp.le.s32.totalorder 1, %s23
    %p487 = scmp.lt.s32.totalorder %s23, 3
    %p488 = pnand %p486, %p487
    %p489 = pneg %p488
    // Predicated region
    $region85: #{closed_call.21} parent=5 // pred_check
      _
    $region86: #{closed_call.21} parent=5 // pred_check_branch
      %491 = sbr.rel (%p488) target = $region88
    $region87: #{closed_call.21} parent=5 // pred_region
      %s492 = ssub.s32 %s23, 1
      %p493 = scmp.lt.s32.totalorder %s28, 1
      %s494 = scalar_select %p493, %s28, 1
      %s495 = smul.addr %s494, 2
      %s496 = smul.addr %s495, 8
      %s497 = scalar_lea.vmem %s0, %s496
      %p498 = pneg %p49
      %p499 = pneg %p46
      %p500 = pneg %p70
      %p501 = pneg %p67
      %p502 = pneg %p91
      %p503 = pneg %p88
      %p504 = pneg %p112
      %p505 = pneg %p109
      %p506 = pneg %p133
      %p507 = pneg %p130
      %p508 = pneg %p154
      %p509 = pneg %p151
      %p510 = pneg %p175
      %p511 = pneg %p172
      %p512 = pneg %p196
      %p513 = pneg %p193
      %p514 = pneg %p217
      %p515 = pneg %p214
      %p516 = pneg %p238
      %p517 = pneg %p235
      %p518 = pneg %p259
      %p519 = pneg %p256
      %p520 = pneg %p280
      %p521 = pneg %p277
      %p522 = pneg %p301
      %p523 = pneg %p298
      %p524 = pneg %p322
      %p525 = pneg %p319
      %p526 = pneg %p343
      %p527 = pneg %p340
      %p528 = pneg %p364
      %p529 = pneg %p361
      %p530 = pneg %p385
      %p531 = pneg %p382
      %p532 = pneg %p411
      %p533 = pneg %p408
      %p534 = scmp.lt.s32.totalorder %s28, 1
      %s535 = scalar_select %p534, %s28, 1
      %s536 = scalar_lea.vmem %s17, %s535
      %p537 = scmp.lt.s32.totalorder %s28, 1
      %s538 = scalar_select %p537, %s28, 1
      %s539 = smul.addr %s538, 2
      %s540 = smul.addr %s539, 8
      %s541 = scalar_lea.vmem %s0, %s540
      %p542 = scmp.lt.s32.totalorder %s28, 1
      %s543 = scalar_select %p542, %s28, 1
      %s544 = scalar_lea.vmem %s17, %s543
      %v545 = vld [vmem:[%s541] sm:$0xff]
      %v546 = vld [vmem:[%s541 + $0x8] sm:$0xff]
      %v547 = vlaneseq
      %v548 = vshrl.u32 %v547, 7
      %v549 = vadd.s32 %v548, 8
      %v550 = vlaneseq
      %v551 = vand.u32 %v550, 127
      %vm552 = vcmp.le.s32.totalorder %v551, %v548
      %vm553 = vcmp.le.s32.totalorder %v551, %v549
      %v554 = vld [vmem:[%s2] sm:$0x1]
      %v555 = vld [vmem:[%s3] sm:$0x1]
      %vm556 = vcmask 261120
      %v557 = vsel %vm556, %v545, 0.0
      %558 = vadd.xlane.f32.xlu0 %v557
      %v559 = vpop.xlane.xlu0 %558
      %v560 = vsel %vm556, %v546, 0.0
      %561 = vadd.xlane.f32.xlu0 %v560
      %v562 = vpop.xlane.xlu0 %561
      %v563 = vrcp.pop 32.0
      %v564 = vmul.f32 %v559, %v563
      %v565 = vmul.f32 %v562, %v563
      %v566 = vsub.f32 %v545, %v564
      %v567 = vsub.f32 %v546, %v565
      %v568 = vmul.f32 %v566, %v566
      %v569 = vmul.f32 %v567, %v567
      %v570 = vsel %vm556, %v568, 0.0
      %571 = vadd.xlane.f32.xlu0 %v570
      %v572 = vpop.xlane.xlu0 %571
      %v573 = vsel %vm556, %v569, 0.0
      %574 = vadd.xlane.f32.xlu0 %v573
      %v575 = vpop.xlane.xlu0 %574
      %v576 = vmul.f32 %v572, %v563
      %v577 = vmul.f32 %v575, %v563
      %v578 = vadd.f32 %v576, 1e-05
      %v579 = vadd.f32 %v577, 1e-05
      %v580 = vrsqrt.pop %v578
      %v581 = vrsqrt.pop %v579
      %v582 = vmul.f32 %v566, %v580
      %v583 = vmul.f32 %v567, %v581
      %v585 = vlaneseq
      %v586 = vshrl.u32 %v585, 7
      %v587 = vsub.s32 0, %v586
      %v588 = vrot.slane %v554, %v587
      %v590 = vmul.f32 %v582, %v588
      %v591 = vmul.f32 %v583, %v588
      %v593 = vlaneseq
      %v594 = vshrl.u32 %v593, 7
      %v595 = vsub.s32 0, %v594
      %v596 = vrot.slane %v555, %v595
      %v598 = vadd.f32 %v590, %v596
      %v599 = vadd.f32 %v591, %v596
      %v600 = vld [vmem:[%s4] sm:$0xff]
      %v601 = vld [vmem:[%s4 + $0x8] sm:$0xff]
      %v602 = vld [vmem:[%s4 + $0x10] sm:$0xff]
      %v603 = vld [vmem:[%s4 + $0x18] sm:$0xff]
      %v604 = vld [vmem:[%s5] sm:$0x1]
      %v606 = vlaneseq
      %v607 = vshrl.u32 %v606, 7
      %v608 = vsub.s32 0, %v607
      %v609 = vrot.slane %v604, %v608
      %v612 = vsel %vm556, %v598, 0
      %v615 = vsel %vm556, %v599, 0
      %617 = vmatprep.subr.mxu0 0.0
      %618 = vmatpush1.msra.mxu0 %v600
      %619 = vmatprep.subr.mxu0 0.0
      %620 = vmatpush1.msra.mxu0 %v601
      %621 = vmatprep.subr.mxu0 0.0
      %622 = vmatpush1.msra.mxu0 %v602
      %623 = vmatprep.subr.mxu0 0.0
      %624 = vmatpush1.msra.mxu0 %v603
      %625 = vmatprep.subr.mxu0 0.0
      %626 = vmatpush1.msra.mxu0 0.0
      %627 = vmatprep.subr.mxu0 0.0
      %628 = vmatpush1.msra.mxu0 0.0
      %629 = vmatprep.subr.mxu0 0.0
      %630 = vmatpush1.msra.mxu0 0.0
      %631 = vmatprep.subr.mxu0 0.0
      %632 = vmatpush1.msra.mxu0 0.0
      %633 = vmatprep.subr.mxu0 0.0
      %634 = vmatpush1.msra.mxu0 0.0
      %635 = vmatprep.subr.mxu0 0.0
      %636 = vmatpush1.msra.mxu0 0.0
      %637 = vmatprep.subr.mxu0 0.0
      %638 = vmatpush1.msra.mxu0 0.0
      %639 = vmatprep.subr.mxu0 0.0
      %640 = vmatpush1.msra.mxu0 0.0
      %641 = vmatprep.subr.mxu0 0.0
      %642 = vmatpush1.msra.mxu0 0.0
      %643 = vmatprep.subr.mxu0 0.0
      %644 = vmatpush1.msra.mxu0 0.0
      %645 = vmatprep.subr.mxu0 0.0
      %646 = vmatpush1.msra.mxu0 0.0
      %647 = vmatprep.subr.mxu0 0.0
      %648 = vmatpush1.msra.mxu0 0.0
      %649 = vmatprep.subr.mxu0 0.0
      %650 = vmatpush1.msra.mxu0 0.0
      %651 = vmatprep.subr.mxu0 0.0
      %652 = vmatpush1.msra.mxu0 0.0
      %653 = vmatprep.subr.mxu0 0.0
      %654 = vmatpush1.msra.mxu0 0.0
      %655 = vmatprep.subr.mxu0 0.0
      %656 = vmatpush1.msra.mxu0 0.0
      %657 = vmatprep.subr.mxu0 0.0
      %658 = vmatpush1.msra.mxu0 0.0
      %659 = vmatprep.subr.mxu0 0.0
      %660 = vmatpush1.msra.mxu0 0.0
      %661 = vmatprep.subr.mxu0 0.0
      %662 = vmatpush1.msra.mxu0 0.0
      %663 = vmatprep.subr.mxu0 0.0
      %664 = vmatpush1.msra.mxu0 0.0
      %665 = vmatprep.subr.mxu0 0.0
      %666 = vmatpush1.msra.mxu0 0.0
      %667 = vmatprep.subr.mxu0 0.0
      %668 = vmatpush1.msra.mxu0 0.0
      %669 = vmatprep.subr.mxu0 0.0
      %670 = vmatpush1.msra.mxu0 0.0
      %671 = vmatprep.subr.mxu0 0.0
      %672 = vmatpush1.msra.mxu0 0.0
      %673 = vmatprep.subr.mxu0 0.0
      %674 = vmatpush1.msra.mxu0 0.0
      %675 = vmatprep.subr.mxu0 0.0
      %676 = vmatpush1.msra.mxu0 0.0
      %677 = vmatprep.subr.mxu0 0.0
      %678 = vmatpush1.msra.mxu0 0.0
      %679 = vmatprep.subr.mxu0 0.0
      %680 = vmatpush1.msra.mxu0 0.0
      %681 = vmatprep.mubr.f32.mxu0 0.0
      %682 = vmatmul.mubr.f32.gmra.mrb[0].mxu0 %v612
      %v683 = vpop.f32.mrb[0].mxu0
      %v684 = vadd.f32 %v609, %v683
      %v685 = vpop.f32.mrb[0].mxu0
      %686 = vmatprep.mubr.f32.mxu0 0.0
      %687 = vmatmul.mubr.f32.gmra.mrb[0].mxu0 %v615
      %v688 = vpop.f32.mrb[0].mxu0
      %v689 = vadd.f32 %v609, %v688
      %v690 = vpop.f32.mrb[0].mxu0
      %691 = vdwg.mxu0
      %v692 = vld [vmem:[%s6] sm:$0xff]
      %v693 = vld [vmem:[%s6 + $0x8] sm:$0xff]
      %v694 = vld [vmem:[%s6 + $0x10] sm:$0xff]
      %v695 = vld [vmem:[%s6 + $0x18] sm:$0xff]
      %698 = vrot.lane.b32.xlu0 %v684, 96
      %v699 = vpop.permute.xlu0 %698
      %700 = vrot.lane.b32.xlu0 %v689, 96
      %v701 = vpop.permute.xlu0 %700
      %vm702 = vcmask 64512
      %v703 = vsel %vm702, %v684, 0
      %v705 = vsel %vm702, %v689, 0
      %v707 = vsel %vm702, %v699, 0
      %v709 = vsel %vm702, %v701, 0
      %711 = vmatprep.subr.mxu0 0.0
      %712 = vmatpush1.xpose.msra.mxu0 %v707
      %713 = vmatprep.subr.mxu0 0.0
      %714 = vmatpush1.xpose.msra.mxu0 %v709
      %715 = vmatprep.subr.mxu0 0.0
      %716 = vmatpush1.xpose.msra.mxu0 0.0
      %717 = vmatprep.subr.mxu0 0.0
      %718 = vmatpush1.xpose.msra.mxu0 0.0
      %719 = vmatprep.subr.mxu0 0.0
      %720 = vmatpush1.xpose.msra.mxu0 0.0
      %721 = vmatprep.subr.mxu0 0.0
      %722 = vmatpush1.xpose.msra.mxu0 0.0
      %723 = vmatprep.subr.mxu0 0.0
      %724 = vmatpush1.xpose.msra.mxu0 0.0
      %725 = vmatprep.subr.mxu0 0.0
      %726 = vmatpush1.xpose.msra.mxu0 0.0
      %727 = vmatprep.subr.mxu0 0.0
      %728 = vmatpush1.xpose.msra.mxu0 0.0
      %729 = vmatprep.subr.mxu0 0.0
      %730 = vmatpush1.xpose.msra.mxu0 0.0
      %731 = vmatprep.subr.mxu0 0.0
      %732 = vmatpush1.xpose.msra.mxu0 0.0
      %733 = vmatprep.subr.mxu0 0.0
      %734 = vmatpush1.xpose.msra.mxu0 0.0
      %735 = vmatprep.subr.mxu0 0.0
      %736 = vmatpush1.xpose.msra.mxu0 0.0
      %737 = vmatprep.subr.mxu0 0.0
      %738 = vmatpush1.xpose.msra.mxu0 0.0
      %739 = vmatprep.subr.mxu0 0.0
      %740 = vmatpush1.xpose.msra.mxu0 0.0
      %741 = vmatprep.subr.mxu0 0.0
      %742 = vmatpush1.xpose.msra.mxu0 0.0
      %743 = vmatprep.subr.mxu0 0.0
      %744 = vmatpush1.xpose.msra.mxu0 0.0
      %745 = vmatprep.subr.mxu0 0.0
      %746 = vmatpush1.xpose.msra.mxu0 0.0
      %747 = vmatprep.subr.mxu0 0.0
      %748 = vmatpush1.xpose.msra.mxu0 0.0
      %749 = vmatprep.subr.mxu0 0.0
      %750 = vmatpush1.xpose.msra.mxu0 0.0
      %751 = vmatprep.subr.mxu0 0.0
      %752 = vmatpush1.xpose.msra.mxu0 0.0
      %753 = vmatprep.subr.mxu0 0.0
      %754 = vmatpush1.xpose.msra.mxu0 0.0
      %755 = vmatprep.subr.mxu0 0.0
      %756 = vmatpush1.xpose.msra.mxu0 0.0
      %757 = vmatprep.subr.mxu0 0.0
      %758 = vmatpush1.xpose.msra.mxu0 0.0
      %759 = vmatprep.subr.mxu0 0.0
      %760 = vmatpush1.xpose.msra.mxu0 0.0
      %761 = vmatprep.subr.mxu0 0.0
      %762 = vmatpush1.xpose.msra.mxu0 0.0
      %763 = vmatprep.subr.mxu0 0.0
      %764 = vmatpush1.xpose.msra.mxu0 0.0
      %765 = vmatprep.subr.mxu0 0.0
      %766 = vmatpush1.xpose.msra.mxu0 0.0
      %767 = vmatprep.subr.mxu0 0.0
      %768 = vmatpush1.xpose.msra.mxu0 0.0
      %769 = vmatprep.subr.mxu0 0.0
      %770 = vmatpush1.xpose.msra.mxu0 0.0
      %771 = vmatprep.subr.mxu0 0.0
      %772 = vmatpush1.xpose.msra.mxu0 0.0
      %773 = vmatprep.subr.mxu0 0.0
      %774 = vmatpush1.xpose.msra.mxu0 0.0
      %775 = vmatprep.mubr.f32.mxu0 0.0
      %776 = vmatmul.mubr.f32.gmra.mrb[0].mxu0 %v703
      %v777 = vpop.f32.mrb[0].mxu0
      %v778 = vadd.f32 0.0, %v777
      %v779 = vpop.f32.mrb[0].mxu0
      %780 = vmatprep.mubr.f32.mxu0 0.0
      %781 = vmatmul.mubr.f32.gmra.mrb[0].mxu0 %v705
      %v782 = vpop.f32.mrb[0].mxu0
      %v783 = vadd.f32 0.0, %v782
      %v784 = vpop.f32.mrb[0].mxu0
      %785 = vdwg.mxu0
      %v786 = vmul.f32 %v778, 0.35355338
      %v787 = vmul.f32 %v783, 0.35355338
      %v788 = vsel %vm552, %v786, -1e+30
      %v789 = vsel %vm553, %v787, -1e+30
      %vm790 = vcmask 130048
      %v791 = vsel %vm790, %v788, -inf
      %792 = vmax.xlane.f32.xlu0 %v791
      %v793 = vpop.xlane.xlu0 %792
      %v794 = vsel %vm790, %v789, -inf
      %795 = vmax.xlane.f32.xlu0 %v794
      %v796 = vpop.xlane.xlu0 %795
      %v797 = vsub.f32 %v788, %v793
      %v798 = vsub.f32 %v789, %v796
      %v799 = vmul.f32 %v797, 1.442695
      %v800 = vpow.pop %v799
      %v801 = vmul.f32 %v798, 1.442695
      %v802 = vpow.pop %v801
      %v803 = vsel %vm790, %v800, 0.0
      %804 = vadd.xlane.f32.xlu0 %v803
      %v805 = vpop.xlane.xlu0 %804
      %v806 = vsel %vm790, %v802, 0.0
      %807 = vadd.xlane.f32.xlu0 %v806
      %v808 = vpop.xlane.xlu0 %807
      %v809 = vrcp.pop %v805
      %v810 = vrcp.pop %v808
      %v811 = vmul.f32 %v800, %v809
      %v812 = vmul.f32 %v802, %v810
      %813 = vrot.lane.b32.xlu0 %v684, 64
      %v814 = vpop.permute.xlu0 %813
      %815 = vrot.lane.b32.xlu0 %v689, 64
      %v816 = vpop.permute.xlu0 %815
      %v820 = vsel %vm790, %v811, 0
      %v823 = vsel %vm790, %v812, 0
      %825 = vmatprep.subr.mxu0 0.0
      %826 = vmatpush1.msra.mxu0 %v814
      %827 = vmatprep.subr.mxu0 0.0
      %828 = vmatpush1.msra.mxu0 %v816
      %829 = vmatprep.subr.mxu0 0.0
      %830 = vmatpush1.msra.mxu0 0.0
      %831 = vmatprep.subr.mxu0 0.0
      %832 = vmatpush1.msra.mxu0 0.0
      %833 = vmatprep.subr.mxu0 0.0
      %834 = vmatpush1.msra.mxu0 0.0
      %835 = vmatprep.subr.mxu0 0.0
      %836 = vmatpush1.msra.mxu0 0.0
      %837 = vmatprep.subr.mxu0 0.0
      %838 = vmatpush1.msra.mxu0 0.0
      %839 = vmatprep.subr.mxu0 0.0
      %840 = vmatpush1.msra.mxu0 0.0
      %841 = vmatprep.subr.mxu0 0.0
      %842 = vmatpush1.msra.mxu0 0.0
      %843 = vmatprep.subr.mxu0 0.0
      %844 = vmatpush1.msra.mxu0 0.0
      %845 = vmatprep.subr.mxu0 0.0
      %846 = vmatpush1.msra.mxu0 0.0
      %847 = vmatprep.subr.mxu0 0.0
      %848 = vmatpush1.msra.mxu0 0.0
      %849 = vmatprep.subr.mxu0 0.0
      %850 = vmatpush1.msra.mxu0 0.0
      %851 = vmatprep.subr.mxu0 0.0
      %852 = vmatpush1.msra.mxu0 0.0
      %853 = vmatprep.subr.mxu0 0.0
      %854 = vmatpush1.msra.mxu0 0.0
      %855 = vmatprep.subr.mxu0 0.0
      %856 = vmatpush1.msra.mxu0 0.0
      %857 = vmatprep.subr.mxu0 0.0
      %858 = vmatpush1.msra.mxu0 0.0
      %859 = vmatprep.subr.mxu0 0.0
      %860 = vmatpush1.msra.mxu0 0.0
      %861 = vmatprep.subr.mxu0 0.0
      %862 = vmatpush1.msra.mxu0 0.0
      %863 = vmatprep.subr.mxu0 0.0
      %864 = vmatpush1.msra.mxu0 0.0
      %865 = vmatprep.subr.mxu0 0.0
      %866 = vmatpush1.msra.mxu0 0.0
      %867 = vmatprep.subr.mxu0 0.0
      %868 = vmatpush1.msra.mxu0 0.0
      %869 = vmatprep.subr.mxu0 0.0
      %870 = vmatpush1.msra.mxu0 0.0
      %871 = vmatprep.subr.mxu0 0.0
      %872 = vmatpush1.msra.mxu0 0.0
      %873 = vmatprep.subr.mxu0 0.0
      %874 = vmatpush1.msra.mxu0 0.0
      %875 = vmatprep.subr.mxu0 0.0
      %876 = vmatpush1.msra.mxu0 0.0
      %877 = vmatprep.subr.mxu0 0.0
      %878 = vmatpush1.msra.mxu0 0.0
      %879 = vmatprep.subr.mxu0 0.0
      %880 = vmatpush1.msra.mxu0 0.0
      %881 = vmatprep.subr.mxu0 0.0
      %882 = vmatpush1.msra.mxu0 0.0
      %883 = vmatprep.subr.mxu0 0.0
      %884 = vmatpush1.msra.mxu0 0.0
      %885 = vmatprep.subr.mxu0 0.0
      %886 = vmatpush1.msra.mxu0 0.0
      %887 = vmatprep.subr.mxu0 0.0
      %888 = vmatpush1.msra.mxu0 0.0
      %889 = vmatprep.mubr.f32.mxu0 0.0
      %890 = vmatmul.mubr.f32.gmra.mrb[0].mxu0 %v820
      %v891 = vpop.f32.mrb[0].mxu0
      %v892 = vadd.f32 0.0, %v891
      %v893 = vpop.f32.mrb[0].mxu0
      %894 = vmatprep.mubr.f32.mxu0 0.0
      %895 = vmatmul.mubr.f32.gmra.mrb[0].mxu0 %v823
      %v896 = vpop.f32.mrb[0].mxu0
      %v897 = vadd.f32 0.0, %v896
      %v898 = vpop.f32.mrb[0].mxu0
      %899 = vdwg.mxu0
      %900 = vrot.lane.b32.xlu0 %v684, 120
      %v901 = vpop.permute.xlu0 %900
      %902 = vrot.lane.b32.xlu0 %v689, 120
      %v903 = vpop.permute.xlu0 %902
      %904 = vrot.lane.b32.xlu0 %v684, 88
      %v905 = vpop.permute.xlu0 %904
      %906 = vrot.lane.b32.xlu0 %v689, 88
      %v907 = vpop.permute.xlu0 %906
      %v908 = vsel %vm702, %v901, 0
      %v910 = vsel %vm702, %v903, 0
      %v912 = vsel %vm702, %v905, 0
      %v914 = vsel %vm702, %v907, 0
      %916 = vmatprep.subr.mxu0 0.0
      %917 = vmatpush1.xpose.msra.mxu0 %v912
      %918 = vmatprep.subr.mxu0 0.0
      %919 = vmatpush1.xpose.msra.mxu0 %v914
      %920 = vmatprep.subr.mxu0 0.0
      %921 = vmatpush1.xpose.msra.mxu0 0.0
      %922 = vmatprep.subr.mxu0 0.0
      %923 = vmatpush1.xpose.msra.mxu0 0.0
      %924 = vmatprep.subr.mxu0 0.0
      %925 = vmatpush1.xpose.msra.mxu0 0.0
      %926 = vmatprep.subr.mxu0 0.0
      %927 = vmatpush1.xpose.msra.mxu0 0.0
      %928 = vmatprep.subr.mxu0 0.0
      %929 = vmatpush1.xpose.msra.mxu0 0.0
      %930 = vmatprep.subr.mxu0 0.0
      %931 = vmatpush1.xpose.msra.mxu0 0.0
      %932 = vmatprep.subr.mxu0 0.0
      %933 = vmatpush1.xpose.msra.mxu0 0.0
      %934 = vmatprep.subr.mxu0 0.0
      %935 = vmatpush1.xpose.msra.mxu0 0.0
      %936 = vmatprep.subr.mxu0 0.0
      %937 = vmatpush1.xpose.msra.mxu0 0.0
      %938 = vmatprep.subr.mxu0 0.0
      %939 = vmatpush1.xpose.msra.mxu0 0.0
      %940 = vmatprep.subr.mxu0 0.0
      %941 = vmatpush1.xpose.msra.mxu0 0.0
      %942 = vmatprep.subr.mxu0 0.0
      %943 = vmatpush1.xpose.msra.mxu0 0.0
      %944 = vmatprep.subr.mxu0 0.0
      %945 = vmatpush1.xpose.msra.mxu0 0.0
      %946 = vmatprep.subr.mxu0 0.0
      %947 = vmatpush1.xpose.msra.mxu0 0.0
      %948 = vmatprep.subr.mxu0 0.0
      %949 = vmatpush1.xpose.msra.mxu0 0.0
      %950 = vmatprep.subr.mxu0 0.0
      %951 = vmatpush1.xpose.msra.mxu0 0.0
      %952 = vmatprep.subr.mxu0 0.0
      %953 = vmatpush1.xpose.msra.mxu0 0.0
      %954 = vmatprep.subr.mxu0 0.0
      %955 = vmatpush1.xpose.msra.mxu0 0.0
      %956 = vmatprep.subr.mxu0 0.0
      %957 = vmatpush1.xpose.msra.mxu0 0.0
      %958 = vmatprep.subr.mxu0 0.0
      %959 = vmatpush1.xpose.msra.mxu0 0.0
      %960 = vmatprep.subr.mxu0 0.0
      %961 = vmatpush1.xpose.msra.mxu0 0.0
      %962 = vmatprep.subr.mxu0 0.0
      %963 = vmatpush1.xpose.msra.mxu0 0.0
      %964 = vmatprep.subr.mxu0 0.0
      %965 = vmatpush1.xpose.msra.mxu0 0.0
      %966 = vmatprep.subr.mxu0 0.0
      %967 = vmatpush1.xpose.msra.mxu0 0.0
      %968 = vmatprep.subr.mxu0 0.0
      %969 = vmatpush1.xpose.msra.mxu0 0.0
      %970 = vmatprep.subr.mxu0 0.0
      %971 = vmatpush1.xpose.msra.mxu0 0.0
      %972 = vmatprep.subr.mxu0 0.0
      %973 = vmatpush1.xpose.msra.mxu0 0.0
      %974 = vmatprep.subr.mxu0 0.0
      %975 = vmatpush1.xpose.msra.mxu0 0.0
      %976 = vmatprep.subr.mxu0 0.0
      %977 = vmatpush1.xpose.msra.mxu0 0.0
      %978 = vmatprep.subr.mxu0 0.0
      %979 = vmatpush1.xpose.msra.mxu0 0.0
      %980 = vmatprep.mubr.f32.mxu0 0.0
      %981 = vmatmul.mubr.f32.gmra.mrb[0].mxu0 %v908
      %v982 = vpop.f32.mrb[0].mxu0
      %v983 = vadd.f32 0.0, %v982
      %v984 = vpop.f32.mrb[0].mxu0
      %985 = vmatprep.mubr.f32.mxu0 0.0
      %986 = vmatmul.mubr.f32.gmra.mrb[0].mxu0 %v910
      %v987 = vpop.f32.mrb[0].mxu0
      %v988 = vadd.f32 0.0, %v987
      %v989 = vpop.f32.mrb[0].mxu0
      %990 = vdwg.mxu0
      %v991 = vmul.f32 %v983, 0.35355338
      %v992 = vmul.f32 %v988, 0.35355338
      %v993 = vsel %vm552, %v991, -1e+30
      %v994 = vsel %vm553, %v992, -1e+30
      %v995 = vsel %vm790, %v993, -inf
      %996 = vmax.xlane.f32.xlu0 %v995
      %v997 = vpop.xlane.xlu0 %996
      %v998 = vsel %vm790, %v994, -inf
      %999 = vmax.xlane.f32.xlu0 %v998
      %v1000 = vpop.xlane.xlu0 %999
      %v1001 = vsub.f32 %v993, %v997
      %v1002 = vsub.f32 %v994, %v1000
      %v1003 = vmul.f32 %v1001, 1.442695
      %v1004 = vpow.pop %v1003
      %v1005 = vmul.f32 %v1002, 1.442695
      %v1006 = vpow.pop %v1005
      %v1007 = vsel %vm790, %v1004, 0.0
      %1008 = vadd.xlane.f32.xlu0 %v1007
      %v1009 = vpop.xlane.xlu0 %1008
      %v1010 = vsel %vm790, %v1006, 0.0
      %1011 = vadd.xlane.f32.xlu0 %v1010
      %v1012 = vpop.xlane.xlu0 %1011
      %v1013 = vrcp.pop %v1009
      %v1014 = vrcp.pop %v1012
      %v1015 = vmul.f32 %v1004, %v1013
      %v1016 = vmul.f32 %v1006, %v1014
      %1017 = vrot.lane.b32.xlu0 %v684, 56
      %v1018 = vpop.permute.xlu0 %1017
      %1019 = vrot.lane.b32.xlu0 %v689, 56
      %v1020 = vpop.permute.xlu0 %1019
      %v1024 = vsel %vm790, %v1015, 0
      %v1027 = vsel %vm790, %v1016, 0
      %1029 = vmatprep.subr.mxu0 0.0
      %1030 = vmatpush1.msra.mxu0 %v1018
      %1031 = vmatprep.subr.mxu0 0.0
      %1032 = vmatpush1.msra.mxu0 %v1020
      %1033 = vmatprep.subr.mxu0 0.0
      %1034 = vmatpush1.msra.mxu0 0.0
      %1035 = vmatprep.subr.mxu0 0.0
      %1036 = vmatpush1.msra.mxu0 0.0
      %1037 = vmatprep.subr.mxu0 0.0
      %1038 = vmatpush1.msra.mxu0 0.0
      %1039 = vmatprep.subr.mxu0 0.0
      %1040 = vmatpush1.msra.mxu0 0.0
      %1041 = vmatprep.subr.mxu0 0.0
      %1042 = vmatpush1.msra.mxu0 0.0
      %1043 = vmatprep.subr.mxu0 0.0
      %1044 = vmatpush1.msra.mxu0 0.0
      %1045 = vmatprep.subr.mxu0 0.0
      %1046 = vmatpush1.msra.mxu0 0.0
      %1047 = vmatprep.subr.mxu0 0.0
      %1048 = vmatpush1.msra.mxu0 0.0
      %1049 = vmatprep.subr.mxu0 0.0
      %1050 = vmatpush1.msra.mxu0 0.0
      %1051 = vmatprep.subr.mxu0 0.0
      %1052 = vmatpush1.msra.mxu0 0.0
      %1053 = vmatprep.subr.mxu0 0.0
      %1054 = vmatpush1.msra.mxu0 0.0
      %1055 = vmatprep.subr.mxu0 0.0
      %1056 = vmatpush1.msra.mxu0 0.0
      %1057 = vmatprep.subr.mxu0 0.0
      %1058 = vmatpush1.msra.mxu0 0.0
      %1059 = vmatprep.subr.mxu0 0.0
      %1060 = vmatpush1.msra.mxu0 0.0
      %1061 = vmatprep.subr.mxu0 0.0
      %1062 = vmatpush1.msra.mxu0 0.0
      %1063 = vmatprep.subr.mxu0 0.0
      %1064 = vmatpush1.msra.mxu0 0.0
      %1065 = vmatprep.subr.mxu0 0.0
      %1066 = vmatpush1.msra.mxu0 0.0
      %1067 = vmatprep.subr.mxu0 0.0
      %1068 = vmatpush1.msra.mxu0 0.0
      %1069 = vmatprep.subr.mxu0 0.0
      %1070 = vmatpush1.msra.mxu0 0.0
      %1071 = vmatprep.subr.mxu0 0.0
      %1072 = vmatpush1.msra.mxu0 0.0
      %1073 = vmatprep.subr.mxu0 0.0
      %1074 = vmatpush1.msra.mxu0 0.0
      %1075 = vmatprep.subr.mxu0 0.0
      %1076 = vmatpush1.msra.mxu0 0.0
      %1077 = vmatprep.subr.mxu0 0.0
      %1078 = vmatpush1.msra.mxu0 0.0
      %1079 = vmatprep.subr.mxu0 0.0
      %1080 = vmatpush1.msra.mxu0 0.0
      %1081 = vmatprep.subr.mxu0 0.0
      %1082 = vmatpush1.msra.mxu0 0.0
      %1083 = vmatprep.subr.mxu0 0.0
      %1084 = vmatpush1.msra.mxu0 0.0
      %1085 = vmatprep.subr.mxu0 0.0
      %1086 = vmatpush1.msra.mxu0 0.0
      %1087 = vmatprep.subr.mxu0 0.0
      %1088 = vmatpush1.msra.mxu0 0.0
      %1089 = vmatprep.subr.mxu0 0.0
      %1090 = vmatpush1.msra.mxu0 0.0
      %1091 = vmatprep.subr.mxu0 0.0
      %1092 = vmatpush1.msra.mxu0 0.0
      %1093 = vmatprep.mubr.f32.mxu0 0.0
      %1094 = vmatmul.mubr.f32.gmra.mrb[0].mxu0 %v1024
      %v1095 = vpop.f32.mrb[0].mxu0
      %v1096 = vadd.f32 0.0, %v1095
      %v1097 = vpop.f32.mrb[0].mxu0
      %1098 = vmatprep.mubr.f32.mxu0 0.0
      %1099 = vmatmul.mubr.f32.gmra.mrb[0].mxu0 %v1027
      %v1100 = vpop.f32.mrb[0].mxu0
      %v1101 = vadd.f32 0.0, %v1100
      %v1102 = vpop.f32.mrb[0].mxu0
      %1103 = vdwg.mxu0
      %v1105 = vsel %vm702, %v1096, 0
      %v1108 = vsel %vm702, %v1101, 0
      %1110 = vmatprep.subr.mxu0 0.0
      %1111 = vmatpush1.msra.mxu0 %v693
      %1112 = vmatprep.subr.mxu0 0.0
      %1113 = vmatpush1.msra.mxu0 0.0
      %1114 = vmatprep.subr.mxu0 0.0
      %1115 = vmatpush1.msra.mxu0 0.0
      %1116 = vmatprep.subr.mxu0 0.0
      %1117 = vmatpush1.msra.mxu0 0.0
      %1118 = vmatprep.subr.mxu0 0.0
      %1119 = vmatpush1.msra.mxu0 0.0
      %1120 = vmatprep.subr.mxu0 0.0
      %1121 = vmatpush1.msra.mxu0 0.0
      %1122 = vmatprep.subr.mxu0 0.0
      %1123 = vmatpush1.msra.mxu0 0.0
      %1124 = vmatprep.subr.mxu0 0.0
      %1125 = vmatpush1.msra.mxu0 0.0
      %1126 = vmatprep.subr.mxu0 0.0
      %1127 = vmatpush1.msra.mxu0 0.0
      %1128 = vmatprep.subr.mxu0 0.0
      %1129 = vmatpush1.msra.mxu0 0.0
      %1130 = vmatprep.subr.mxu0 0.0
      %1131 = vmatpush1.msra.mxu0 0.0
      %1132 = vmatprep.subr.mxu0 0.0
      %1133 = vmatpush1.msra.mxu0 0.0
      %1134 = vmatprep.subr.mxu0 0.0
      %1135 = vmatpush1.msra.mxu0 0.0
      %1136 = vmatprep.subr.mxu0 0.0
      %1137 = vmatpush1.msra.mxu0 0.0
      %1138 = vmatprep.subr.mxu0 0.0
      %1139 = vmatpush1.msra.mxu0 0.0
      %1140 = vmatprep.subr.mxu0 0.0
      %1141 = vmatpush1.msra.mxu0 0.0
      %1142 = vmatprep.subr.mxu0 0.0
      %1143 = vmatpush1.msra.mxu0 0.0
      %1144 = vmatprep.subr.mxu0 0.0
      %1145 = vmatpush1.msra.mxu0 0.0
      %1146 = vmatprep.subr.mxu0 0.0
      %1147 = vmatpush1.msra.mxu0 0.0
      %1148 = vmatprep.subr.mxu0 0.0
      %1149 = vmatpush1.msra.mxu0 0.0
      %1150 = vmatprep.subr.mxu0 0.0
      %1151 = vmatpush1.msra.mxu0 0.0
      %1152 = vmatprep.subr.mxu0 0.0
      %1153 = vmatpush1.msra.mxu0 0.0
      %1154 = vmatprep.subr.mxu0 0.0
      %1155 = vmatpush1.msra.mxu0 0.0
      %1156 = vmatprep.subr.mxu0 0.0
      %1157 = vmatpush1.msra.mxu0 0.0
      %1158 = vmatprep.subr.mxu0 0.0
      %1159 = vmatpush1.msra.mxu0 0.0
      %1160 = vmatprep.subr.mxu0 0.0
      %1161 = vmatpush1.msra.mxu0 0.0
      %1162 = vmatprep.subr.mxu0 0.0
      %1163 = vmatpush1.msra.mxu0 0.0
      %1164 = vmatprep.subr.mxu0 0.0
      %1165 = vmatpush1.msra.mxu0 0.0
      %1166 = vmatprep.subr.mxu0 0.0
      %1167 = vmatpush1.msra.mxu0 0.0
      %1168 = vmatprep.subr.mxu0 0.0
      %1169 = vmatpush1.msra.mxu0 0.0
      %1170 = vmatprep.subr.mxu0 0.0
      %1171 = vmatpush1.msra.mxu0 0.0
      %1172 = vmatprep.subr.mxu0 0.0
      %1173 = vmatpush1.msra.mxu0 0.0
      %1174 = vmatprep.mubr.f32.mxu0 0.0
      %1175 = vmatmul.mubr.f32.gmra.mrb[0].mxu0 %v1105
      %v1176 = vpop.f32.mrb[0].mxu0
      %v1177 = vadd.f32 0.0, %v1176
      %v1178 = vpop.f32.mrb[0].mxu0
      %1179 = vmatprep.mubr.f32.mxu0 0.0
      %1180 = vmatmul.mubr.f32.gmra.mrb[0].mxu0 %v1108
      %v1181 = vpop.f32.mrb[0].mxu0
      %v1182 = vadd.f32 0.0, %v1181
      %v1183 = vpop.f32.mrb[0].mxu0
      %1184 = vdwg.mxu0
      %v1186 = vsel %vm702, %v892, 0
      %v1189 = vsel %vm702, %v897, 0
      %1191 = vmatprep.subr.mxu0 0.0
      %1192 = vmatpush1.msra.mxu0 %v692
      %1193 = vmatprep.subr.mxu0 0.0
      %1194 = vmatpush1.msra.mxu0 0.0
      %1195 = vmatprep.subr.mxu0 0.0
      %1196 = vmatpush1.msra.mxu0 0.0
      %1197 = vmatprep.subr.mxu0 0.0
      %1198 = vmatpush1.msra.mxu0 0.0
      %1199 = vmatprep.subr.mxu0 0.0
      %1200 = vmatpush1.msra.mxu0 0.0
      %1201 = vmatprep.subr.mxu0 0.0
      %1202 = vmatpush1.msra.mxu0 0.0
      %1203 = vmatprep.subr.mxu0 0.0
      %1204 = vmatpush1.msra.mxu0 0.0
      %1205 = vmatprep.subr.mxu0 0.0
      %1206 = vmatpush1.msra.mxu0 0.0
      %1207 = vmatprep.subr.mxu0 0.0
      %1208 = vmatpush1.msra.mxu0 0.0
      %1209 = vmatprep.subr.mxu0 0.0
      %1210 = vmatpush1.msra.mxu0 0.0
      %1211 = vmatprep.subr.mxu0 0.0
      %1212 = vmatpush1.msra.mxu0 0.0
      %1213 = vmatprep.subr.mxu0 0.0
      %1214 = vmatpush1.msra.mxu0 0.0
      %1215 = vmatprep.subr.mxu0 0.0
      %1216 = vmatpush1.msra.mxu0 0.0
      %1217 = vmatprep.subr.mxu0 0.0
      %1218 = vmatpush1.msra.mxu0 0.0
      %1219 = vmatprep.subr.mxu0 0.0
      %1220 = vmatpush1.msra.mxu0 0.0
      %1221 = vmatprep.subr.mxu0 0.0
      %1222 = vmatpush1.msra.mxu0 0.0
      %1223 = vmatprep.subr.mxu0 0.0
      %1224 = vmatpush1.msra.mxu0 0.0
      %1225 = vmatprep.subr.mxu0 0.0
      %1226 = vmatpush1.msra.mxu0 0.0
      %1227 = vmatprep.subr.mxu0 0.0
      %1228 = vmatpush1.msra.mxu0 0.0
      %1229 = vmatprep.subr.mxu0 0.0
      %1230 = vmatpush1.msra.mxu0 0.0
      %1231 = vmatprep.subr.mxu0 0.0
      %1232 = vmatpush1.msra.mxu0 0.0
      %1233 = vmatprep.subr.mxu0 0.0
      %1234 = vmatpush1.msra.mxu0 0.0
      %1235 = vmatprep.subr.mxu0 0.0
      %1236 = vmatpush1.msra.mxu0 0.0
      %1237 = vmatprep.subr.mxu0 0.0
      %1238 = vmatpush1.msra.mxu0 0.0
      %1239 = vmatprep.subr.mxu0 0.0
      %1240 = vmatpush1.msra.mxu0 0.0
      %1241 = vmatprep.subr.mxu0 0.0
      %1242 = vmatpush1.msra.mxu0 0.0
      %1243 = vmatprep.subr.mxu0 0.0
      %1244 = vmatpush1.msra.mxu0 0.0
      %1245 = vmatprep.subr.mxu0 0.0
      %1246 = vmatpush1.msra.mxu0 0.0
      %1247 = vmatprep.subr.mxu0 0.0
      %1248 = vmatpush1.msra.mxu0 0.0
      %1249 = vmatprep.subr.mxu0 0.0
      %1250 = vmatpush1.msra.mxu0 0.0
      %1251 = vmatprep.subr.mxu0 0.0
      %1252 = vmatpush1.msra.mxu0 0.0
      %1253 = vmatprep.subr.mxu0 0.0
      %1254 = vmatpush1.msra.mxu0 0.0
      %1255 = vmatprep.mubr.f32.mxu0 0.0
      %1256 = vmatmul.mubr.f32.gmra.mrb[0].mxu0 %v1186
      %v1257 = vpop.f32.mrb[0].mxu0
      %v1258 = vadd.f32 %v1177, %v1257
      %v1259 = vpop.f32.mrb[0].mxu0
      %1260 = vmatprep.mubr.f32.mxu0 0.0
      %1261 = vmatmul.mubr.f32.gmra.mrb[0].mxu0 %v1189
      %v1262 = vpop.f32.mrb[0].mxu0
      %v1263 = vadd.f32 %v1182, %v1262
      %v1264 = vpop.f32.mrb[0].mxu0
      %1265 = vdwg.mxu0
      %1266 = vrot.lane.b32.xlu0 %v684, 112
      %v1267 = vpop.permute.xlu0 %1266
      %1268 = vrot.lane.b32.xlu0 %v689, 112
      %v1269 = vpop.permute.xlu0 %1268
      %1270 = vrot.lane.b32.xlu0 %v684, 80
      %v1271 = vpop.permute.xlu0 %1270
      %1272 = vrot.lane.b32.xlu0 %v689, 80
      %v1273 = vpop.permute.xlu0 %1272
      %v1274 = vsel %vm702, %v1267, 0
      %v1276 = vsel %vm702, %v1269, 0
      %v1278 = vsel %vm702, %v1271, 0
      %v1280 = vsel %vm702, %v1273, 0
      %1282 = vmatprep.subr.mxu0 0.0
      %1283 = vmatpush1.xpose.msra.mxu0 %v1278
      %1284 = vmatprep.subr.mxu0 0.0
      %1285 = vmatpush1.xpose.msra.mxu0 %v1280
      %1286 = vmatprep.subr.mxu0 0.0
      %1287 = vmatpush1.xpose.msra.mxu0 0.0
      %1288 = vmatprep.subr.mxu0 0.0
      %1289 = vmatpush1.xpose.msra.mxu0 0.0
      %1290 = vmatprep.subr.mxu0 0.0
      %1291 = vmatpush1.xpose.msra.mxu0 0.0
      %1292 = vmatprep.subr.mxu0 0.0
      %1293 = vmatpush1.xpose.msra.mxu0 0.0
      %1294 = vmatprep.subr.mxu0 0.0
      %1295 = vmatpush1.xpose.msra.mxu0 0.0
      %1296 = vmatprep.subr.mxu0 0.0
      %1297 = vmatpush1.xpose.msra.mxu0 0.0
      %1298 = vmatprep.subr.mxu0 0.0
      %1299 = vmatpush1.xpose.msra.mxu0 0.0
      %1300 = vmatprep.subr.mxu0 0.0
      %1301 = vmatpush1.xpose.msra.mxu0 0.0
      %1302 = vmatprep.subr.mxu0 0.0
      %1303 = vmatpush1.xpose.msra.mxu0 0.0
      %1304 = vmatprep.subr.mxu0 0.0
      %1305 = vmatpush1.xpose.msra.mxu0 0.0
      %1306 = vmatprep.subr.mxu0 0.0
      %1307 = vmatpush1.xpose.msra.mxu0 0.0
      %1308 = vmatprep.subr.mxu0 0.0
      %1309 = vmatpush1.xpose.msra.mxu0 0.0
      %1310 = vmatprep.subr.mxu0 0.0
      %1311 = vmatpush1.xpose.msra.mxu0 0.0
      %1312 = vmatprep.subr.mxu0 0.0
      %1313 = vmatpush1.xpose.msra.mxu0 0.0
      %1314 = vmatprep.subr.mxu0 0.0
      %1315 = vmatpush1.xpose.msra.mxu0 0.0
      %1316 = vmatprep.subr.mxu0 0.0
      %1317 = vmatpush1.xpose.msra.mxu0 0.0
      %1318 = vmatprep.subr.mxu0 0.0
      %1319 = vmatpush1.xpose.msra.mxu0 0.0
      %1320 = vmatprep.subr.mxu0 0.0
      %1321 = vmatpush1.xpose.msra.mxu0 0.0
      %1322 = vmatprep.subr.mxu0 0.0
      %1323 = vmatpush1.xpose.msra.mxu0 0.0
      %1324 = vmatprep.subr.mxu0 0.0
      %1325 = vmatpush1.xpose.msra.mxu0 0.0
      %1326 = vmatprep.subr.mxu0 0.0
      %1327 = vmatpush1.xpose.msra.mxu0 0.0
      %1328 = vmatprep.subr.mxu0 0.0
      %1329 = vmatpush1.xpose.msra.mxu0 0.0
      %1330 = vmatprep.subr.mxu0 0.0
      %1331 = vmatpush1.xpose.msra.mxu0 0.0
      %1332 = vmatprep.subr.mxu0 0.0
      %1333 = vmatpush1.xpose.msra.mxu0 0.0
      %1334 = vmatprep.subr.mxu0 0.0
      %1335 = vmatpush1.xpose.msra.mxu0 0.0
      %1336 = vmatprep.subr.mxu0 0.0
      %1337 = vmatpush1.xpose.msra.mxu0 0.0
      %1338 = vmatprep.subr.mxu0 0.0
      %1339 = vmatpush1.xpose.msra.mxu0 0.0
      %1340 = vmatprep.subr.mxu0 0.0
      %1341 = vmatpush1.xpose.msra.mxu0 0.0
      %1342 = vmatprep.subr.mxu0 0.0
      %1343 = vmatpush1.xpose.msra.mxu0 0.0
      %1344 = vmatprep.subr.mxu0 0.0
      %1345 = vmatpush1.xpose.msra.mxu0 0.0
      %1346 = vmatprep.mubr.f32.mxu0 0.0
      %1347 = vmatmul.mubr.f32.gmra.mrb[0].mxu0 %v1274
      %v1348 = vpop.f32.mrb[0].mxu0
      %v1349 = vadd.f32 0.0, %v1348
      %v1350 = vpop.f32.mrb[0].mxu0
      %1351 = vmatprep.mubr.f32.mxu0 0.0
      %1352 = vmatmul.mubr.f32.gmra.mrb[0].mxu0 %v1276
      %v1353 = vpop.f32.mrb[0].mxu0
      %v1354 = vadd.f32 0.0, %v1353
      %v1355 = vpop.f32.mrb[0].mxu0
      %1356 = vdwg.mxu0
      %v1357 = vmul.f32 %v1349, 0.35355338
      %v1358 = vmul.f32 %v1354, 0.35355338
      %v1359 = vsel %vm552, %v1357, -1e+30
      %v1360 = vsel %vm553, %v1358, -1e+30
      %v1361 = vsel %vm790, %v1359, -inf
      %1362 = vmax.xlane.f32.xlu0 %v1361
      %v1363 = vpop.xlane.xlu0 %1362
      %v1364 = vsel %vm790, %v1360, -inf
      %1365 = vmax.xlane.f32.xlu0 %v1364
      %v1366 = vpop.xlane.xlu0 %1365
      %v1367 = vsub.f32 %v1359, %v1363
      %v1368 = vsub.f32 %v1360, %v1366
      %v1369 = vmul.f32 %v1367, 1.442695
      %v1370 = vpow.pop %v1369
      %v1371 = vmul.f32 %v1368, 1.442695
      %v1372 = vpow.pop %v1371
      %v1373 = vsel %vm790, %v1370, 0.0
      %1374 = vadd.xlane.f32.xlu0 %v1373
      %v1375 = vpop.xlane.xlu0 %1374
      %v1376 = vsel %vm790, %v1372, 0.0
      %1377 = vadd.xlane.f32.xlu0 %v1376
      %v1378 = vpop.xlane.xlu0 %1377
      %v1379 = vrcp.pop %v1375
      %v1380 = vrcp.pop %v1378
      %v1381 = vmul.f32 %v1370, %v1379
      %v1382 = vmul.f32 %v1372, %v1380
      %1383 = vrot.lane.b32.xlu0 %v684, 48
      %v1384 = vpop.permute.xlu0 %1383
      %1385 = vrot.lane.b32.xlu0 %v689, 48
      %v1386 = vpop.permute.xlu0 %1385
      %v1390 = vsel %vm790, %v1381, 0
      %v1393 = vsel %vm790, %v1382, 0
      %1395 = vmatprep.subr.mxu0 0.0
      %1396 = vmatpush1.msra.mxu0 %v1384
      %1397 = vmatprep.subr.mxu0 0.0
      %1398 = vmatpush1.msra.mxu0 %v1386
      %1399 = vmatprep.subr.mxu0 0.0
      %1400 = vmatpush1.msra.mxu0 0.0
      %1401 = vmatprep.subr.mxu0 0.0
      %1402 = vmatpush1.msra.mxu0 0.0
      %1403 = vmatprep.subr.mxu0 0.0
      %1404 = vmatpush1.msra.mxu0 0.0
      %1405 = vmatprep.subr.mxu0 0.0
      %1406 = vmatpush1.msra.mxu0 0.0
      %1407 = vmatprep.subr.mxu0 0.0
      %1408 = vmatpush1.msra.mxu0 0.0
      %1409 = vmatprep.subr.mxu0 0.0
      %1410 = vmatpush1.msra.mxu0 0.0
      %1411 = vmatprep.subr.mxu0 0.0
      %1412 = vmatpush1.msra.mxu0 0.0
      %1413 = vmatprep.subr.mxu0 0.0
      %1414 = vmatpush1.msra.mxu0 0.0
      %1415 = vmatprep.subr.mxu0 0.0
      %1416 = vmatpush1.msra.mxu0 0.0
      %1417 = vmatprep.subr.mxu0 0.0
      %1418 = vmatpush1.msra.mxu0 0.0
      %1419 = vmatprep.subr.mxu0 0.0
      %1420 = vmatpush1.msra.mxu0 0.0
      %1421 = vmatprep.subr.mxu0 0.0
      %1422 = vmatpush1.msra.mxu0 0.0
      %1423 = vmatprep.subr.mxu0 0.0
      %1424 = vmatpush1.msra.mxu0 0.0
      %1425 = vmatprep.subr.mxu0 0.0
      %1426 = vmatpush1.msra.mxu0 0.0
      %1427 = vmatprep.subr.mxu0 0.0
      %1428 = vmatpush1.msra.mxu0 0.0
      %1429 = vmatprep.subr.mxu0 0.0
      %1430 = vmatpush1.msra.mxu0 0.0
      %1431 = vmatprep.subr.mxu0 0.0
      %1432 = vmatpush1.msra.mxu0 0.0
      %1433 = vmatprep.subr.mxu0 0.0
      %1434 = vmatpush1.msra.mxu0 0.0
      %1435 = vmatprep.subr.mxu0 0.0
      %1436 = vmatpush1.msra.mxu0 0.0
      %1437 = vmatprep.subr.mxu0 0.0
      %1438 = vmatpush1.msra.mxu0 0.0
      %1439 = vmatprep.subr.mxu0 0.0
      %1440 = vmatpush1.msra.mxu0 0.0
      %1441 = vmatprep.subr.mxu0 0.0
      %1442 = vmatpush1.msra.mxu0 0.0
      %1443 = vmatprep.subr.mxu0 0.0
      %1444 = vmatpush1.msra.mxu0 0.0
      %1445 = vmatprep.subr.mxu0 0.0
      %1446 = vmatpush1.msra.mxu0 0.0
      %1447 = vmatprep.subr.mxu0 0.0
      %1448 = vmatpush1.msra.mxu0 0.0
      %1449 = vmatprep.subr.mxu0 0.0
      %1450 = vmatpush1.msra.mxu0 0.0
      %1451 = vmatprep.subr.mxu0 0.0
      %1452 = vmatpush1.msra.mxu0 0.0
      %1453 = vmatprep.subr.mxu0 0.0
      %1454 = vmatpush1.msra.mxu0 0.0
      %1455 = vmatprep.subr.mxu0 0.0
      %1456 = vmatpush1.msra.mxu0 0.0
      %1457 = vmatprep.subr.mxu0 0.0
      %1458 = vmatpush1.msra.mxu0 0.0
      %1459 = vmatprep.mubr.f32.mxu0 0.0
      %1460 = vmatmul.mubr.f32.gmra.mrb[0].mxu0 %v1390
      %v1461 = vpop.f32.mrb[0].mxu0
      %v1462 = vadd.f32 0.0, %v1461
      %v1463 = vpop.f32.mrb[0].mxu0
      %1464 = vmatprep.mubr.f32.mxu0 0.0
      %1465 = vmatmul.mubr.f32.gmra.mrb[0].mxu0 %v1393
      %v1466 = vpop.f32.mrb[0].mxu0
      %v1467 = vadd.f32 0.0, %v1466
      %v1468 = vpop.f32.mrb[0].mxu0
      %1469 = vdwg.mxu0
      %v1471 = vsel %vm702, %v1462, 0
      %v1474 = vsel %vm702, %v1467, 0
      %1476 = vmatprep.subr.mxu0 0.0
      %1477 = vmatpush1.msra.mxu0 %v694
      %1478 = vmatprep.subr.mxu0 0.0
      %1479 = vmatpush1.msra.mxu0 0.0
      %1480 = vmatprep.subr.mxu0 0.0
      %1481 = vmatpush1.msra.mxu0 0.0
      %1482 = vmatprep.subr.mxu0 0.0
      %1483 = vmatpush1.msra.mxu0 0.0
      %1484 = vmatprep.subr.mxu0 0.0
      %1485 = vmatpush1.msra.mxu0 0.0
      %1486 = vmatprep.subr.mxu0 0.0
      %1487 = vmatpush1.msra.mxu0 0.0
      %1488 = vmatprep.subr.mxu0 0.0
      %1489 = vmatpush1.msra.mxu0 0.0
      %1490 = vmatprep.subr.mxu0 0.0
      %1491 = vmatpush1.msra.mxu0 0.0
      %1492 = vmatprep.subr.mxu0 0.0
      %1493 = vmatpush1.msra.mxu0 0.0
      %1494 = vmatprep.subr.mxu0 0.0
      %1495 = vmatpush1.msra.mxu0 0.0
      %1496 = vmatprep.subr.mxu0 0.0
      %1497 = vmatpush1.msra.mxu0 0.0
      %1498 = vmatprep.subr.mxu0 0.0
      %1499 = vmatpush1.msra.mxu0 0.0
      %1500 = vmatprep.subr.mxu0 0.0
      %1501 = vmatpush1.msra.mxu0 0.0
      %1502 = vmatprep.subr.mxu0 0.0
      %1503 = vmatpush1.msra.mxu0 0.0
      %1504 = vmatprep.subr.mxu0 0.0
      %1505 = vmatpush1.msra.mxu0 0.0
      %1506 = vmatprep.subr.mxu0 0.0
      %1507 = vmatpush1.msra.mxu0 0.0
      %1508 = vmatprep.subr.mxu0 0.0
      %1509 = vmatpush1.msra.mxu0 0.0
      %1510 = vmatprep.subr.mxu0 0.0
      %1511 = vmatpush1.msra.mxu0 0.0
      %1512 = vmatprep.subr.mxu0 0.0
      %1513 = vmatpush1.msra.mxu0 0.0
      %1514 = vmatprep.subr.mxu0 0.0
      %1515 = vmatpush1.msra.mxu0 0.0
      %1516 = vmatprep.subr.mxu0 0.0
      %1517 = vmatpush1.msra.mxu0 0.0
      %1518 = vmatprep.subr.mxu0 0.0
      %1519 = vmatpush1.msra.mxu0 0.0
      %1520 = vmatprep.subr.mxu0 0.0
      %1521 = vmatpush1.msra.mxu0 0.0
      %1522 = vmatprep.subr.mxu0 0.0
      %1523 = vmatpush1.msra.mxu0 0.0
      %1524 = vmatprep.subr.mxu0 0.0
      %1525 = vmatpush1.msra.mxu0 0.0
      %1526 = vmatprep.subr.mxu0 0.0
      %1527 = vmatpush1.msra.mxu0 0.0
      %1528 = vmatprep.subr.mxu0 0.0
      %1529 = vmatpush1.msra.mxu0 0.0
      %1530 = vmatprep.subr.mxu0 0.0
      %1531 = vmatpush1.msra.mxu0 0.0
      %1532 = vmatprep.subr.mxu0 0.0
      %1533 = vmatpush1.msra.mxu0 0.0
      %1534 = vmatprep.subr.mxu0 0.0
      %1535 = vmatpush1.msra.mxu0 0.0
      %1536 = vmatprep.subr.mxu0 0.0
      %1537 = vmatpush1.msra.mxu0 0.0
      %1538 = vmatprep.subr.mxu0 0.0
      %1539 = vmatpush1.msra.mxu0 0.0
      %1540 = vmatprep.mubr.f32.mxu0 0.0
      %1541 = vmatmul.mubr.f32.gmra.mrb[0].mxu0 %v1471
      %v1542 = vpop.f32.mrb[0].mxu0
      %v1543 = vadd.f32 0.0, %v1542
      %v1544 = vpop.f32.mrb[0].mxu0
      %1545 = vmatprep.mubr.f32.mxu0 0.0
      %1546 = vmatmul.mubr.f32.gmra.mrb[0].mxu0 %v1474
      %v1547 = vpop.f32.mrb[0].mxu0
      %v1548 = vadd.f32 0.0, %v1547
      %v1549 = vpop.f32.mrb[0].mxu0
      %1550 = vdwg.mxu0
      %v1551 = vadd.f32 %v1258, %v1543
      %v1552 = vadd.f32 %v1263, %v1548
      %1553 = vrot.lane.b32.xlu0 %v684, 104
      %v1554 = vpop.permute.xlu0 %1553
      %1555 = vrot.lane.b32.xlu0 %v689, 104
      %v1556 = vpop.permute.xlu0 %1555
      %1557 = vrot.lane.b32.xlu0 %v684, 72
      %v1558 = vpop.permute.xlu0 %1557
      %1559 = vrot.lane.b32.xlu0 %v689, 72
      %v1560 = vpop.permute.xlu0 %1559
      %v1561 = vsel %vm702, %v1554, 0
      %v1563 = vsel %vm702, %v1556, 0
      %v1565 = vsel %vm702, %v1558, 0
      %v1567 = vsel %vm702, %v1560, 0
      %1569 = vmatprep.subr.mxu0 0.0
      %1570 = vmatpush1.xpose.msra.mxu0 %v1565
      %1571 = vmatprep.subr.mxu0 0.0
      %1572 = vmatpush1.xpose.msra.mxu0 %v1567
      %1573 = vmatprep.subr.mxu0 0.0
      %1574 = vmatpush1.xpose.msra.mxu0 0.0
      %1575 = vmatprep.subr.mxu0 0.0
      %1576 = vmatpush1.xpose.msra.mxu0 0.0
      %1577 = vmatprep.subr.mxu0 0.0
      %1578 = vmatpush1.xpose.msra.mxu0 0.0
      %1579 = vmatprep.subr.mxu0 0.0
      %1580 = vmatpush1.xpose.msra.mxu0 0.0
      %1581 = vmatprep.subr.mxu0 0.0
      %1582 = vmatpush1.xpose.msra.mxu0 0.0
      %1583 = vmatprep.subr.mxu0 0.0
      %1584 = vmatpush1.xpose.msra.mxu0 0.0
      %1585 = vmatprep.subr.mxu0 0.0
      %1586 = vmatpush1.xpose.msra.mxu0 0.0
      %1587 = vmatprep.subr.mxu0 0.0
      %1588 = vmatpush1.xpose.msra.mxu0 0.0
      %1589 = vmatprep.subr.mxu0 0.0
      %1590 = vmatpush1.xpose.msra.mxu0 0.0
      %1591 = vmatprep.subr.mxu0 0.0
      %1592 = vmatpush1.xpose.msra.mxu0 0.0
      %1593 = vmatprep.subr.mxu0 0.0
      %1594 = vmatpush1.xpose.msra.mxu0 0.0
      %1595 = vmatprep.subr.mxu0 0.0
      %1596 = vmatpush1.xpose.msra.mxu0 0.0
      %1597 = vmatprep.subr.mxu0 0.0
      %1598 = vmatpush1.xpose.msra.mxu0 0.0
      %1599 = vmatprep.subr.mxu0 0.0
      %1600 = vmatpush1.xpose.msra.mxu0 0.0
      %1601 = vmatprep.subr.mxu0 0.0
      %1602 = vmatpush1.xpose.msra.mxu0 0.0
      %1603 = vmatprep.subr.mxu0 0.0
      %1604 = vmatpush1.xpose.msra.mxu0 0.0
      %1605 = vmatprep.subr.mxu0 0.0
      %1606 = vmatpush1.xpose.msra.mxu0 0.0
      %1607 = vmatprep.subr.mxu0 0.0
      %1608 = vmatpush1.xpose.msra.mxu0 0.0
      %1609 = vmatprep.subr.mxu0 0.0
      %1610 = vmatpush1.xpose.msra.mxu0 0.0
      %1611 = vmatprep.subr.mxu0 0.0
      %1612 = vmatpush1.xpose.msra.mxu0 0.0
      %1613 = vmatprep.subr.mxu0 0.0
      %1614 = vmatpush1.xpose.msra.mxu0 0.0
      %1615 = vmatprep.subr.mxu0 0.0
      %1616 = vmatpush1.xpose.msra.mxu0 0.0
      %1617 = vmatprep.subr.mxu0 0.0
      %1618 = vmatpush1.xpose.msra.mxu0 0.0
      %1619 = vmatprep.subr.mxu0 0.0
      %1620 = vmatpush1.xpose.msra.mxu0 0.0
      %1621 = vmatprep.subr.mxu0 0.0
      %1622 = vmatpush1.xpose.msra.mxu0 0.0
      %1623 = vmatprep.subr.mxu0 0.0
      %1624 = vmatpush1.xpose.msra.mxu0 0.0
      %1625 = vmatprep.subr.mxu0 0.0
      %1626 = vmatpush1.xpose.msra.mxu0 0.0
      %1627 = vmatprep.subr.mxu0 0.0
      %1628 = vmatpush1.xpose.msra.mxu0 0.0
      %1629 = vmatprep.subr.mxu0 0.0
      %1630 = vmatpush1.xpose.msra.mxu0 0.0
      %1631 = vmatprep.subr.mxu0 0.0
      %1632 = vmatpush1.xpose.msra.mxu0 0.0
      %1633 = vmatprep.mubr.f32.mxu0 0.0
      %1634 = vmatmul.mubr.f32.gmra.mrb[0].mxu0 %v1561
      %v1635 = vpop.f32.mrb[0].mxu0
      %v1636 = vadd.f32 0.0, %v1635
      %v1637 = vpop.f32.mrb[0].mxu0
      %1638 = vmatprep.mubr.f32.mxu0 0.0
      %1639 = vmatmul.mubr.f32.gmra.mrb[0].mxu0 %v1563
      %v1640 = vpop.f32.mrb[0].mxu0
      %v1641 = vadd.f32 0.0, %v1640
      %v1642 = vpop.f32.mrb[0].mxu0
      %1643 = vdwg.mxu0
      %v1644 = vmul.f32 %v1636, 0.35355338
      %v1645 = vmul.f32 %v1641, 0.35355338
      %v1646 = vsel %vm552, %v1644, -1e+30
      %v1647 = vsel %vm553, %v1645, -1e+30
      %v1648 = vsel %vm790, %v1646, -inf
      %1649 = vmax.xlane.f32.xlu0 %v1648
      %v1650 = vpop.xlane.xlu0 %1649
      %v1651 = vsel %vm790, %v1647, -inf
      %1652 = vmax.xlane.f32.xlu0 %v1651
      %v1653 = vpop.xlane.xlu0 %1652
      %v1654 = vsub.f32 %v1646, %v1650
      %v1655 = vsub.f32 %v1647, %v1653
      %v1656 = vmul.f32 %v1654, 1.442695
      %v1657 = vpow.pop %v1656
      %v1658 = vmul.f32 %v1655, 1.442695
      %v1659 = vpow.pop %v1658
      %v1660 = vsel %vm790, %v1657, 0.0
      %1661 = vadd.xlane.f32.xlu0 %v1660
      %v1662 = vpop.xlane.xlu0 %1661
      %v1663 = vsel %vm790, %v1659, 0.0
      %1664 = vadd.xlane.f32.xlu0 %v1663
      %v1665 = vpop.xlane.xlu0 %1664
      %v1666 = vrcp.pop %v1662
      %v1667 = vrcp.pop %v1665
      %v1668 = vmul.f32 %v1657, %v1666
      %v1669 = vmul.f32 %v1659, %v1667
      %1670 = vrot.lane.b32.xlu0 %v684, 40
      %v1671 = vpop.permute.xlu0 %1670
      %1672 = vrot.lane.b32.xlu0 %v689, 40
      %v1673 = vpop.permute.xlu0 %1672
      %v1677 = vsel %vm790, %v1668, 0
      %v1680 = vsel %vm790, %v1669, 0
      %1682 = vmatprep.subr.mxu0 0.0
      %1683 = vmatpush1.msra.mxu0 %v1671
      %1684 = vmatprep.subr.mxu0 0.0
      %1685 = vmatpush1.msra.mxu0 %v1673
      %1686 = vmatprep.subr.mxu0 0.0
      %1687 = vmatpush1.msra.mxu0 0.0
      %1688 = vmatprep.subr.mxu0 0.0
      %1689 = vmatpush1.msra.mxu0 0.0
      %1690 = vmatprep.subr.mxu0 0.0
      %1691 = vmatpush1.msra.mxu0 0.0
      %1692 = vmatprep.subr.mxu0 0.0
      %1693 = vmatpush1.msra.mxu0 0.0
      %1694 = vmatprep.subr.mxu0 0.0
      %1695 = vmatpush1.msra.mxu0 0.0
      %1696 = vmatprep.subr.mxu0 0.0
      %1697 = vmatpush1.msra.mxu0 0.0
      %1698 = vmatprep.subr.mxu0 0.0
      %1699 = vmatpush1.msra.mxu0 0.0
      %1700 = vmatprep.subr.mxu0 0.0
      %1701 = vmatpush1.msra.mxu0 0.0
      %1702 = vmatprep.subr.mxu0 0.0
      %1703 = vmatpush1.msra.mxu0 0.0
      %1704 = vmatprep.subr.mxu0 0.0
      %1705 = vmatpush1.msra.mxu0 0.0
      %1706 = vmatprep.subr.mxu0 0.0
      %1707 = vmatpush1.msra.mxu0 0.0
      %1708 = vmatprep.subr.mxu0 0.0
      %1709 = vmatpush1.msra.mxu0 0.0
      %1710 = vmatprep.subr.mxu0 0.0
      %1711 = vmatpush1.msra.mxu0 0.0
      %1712 = vmatprep.subr.mxu0 0.0
      %1713 = vmatpush1.msra.mxu0 0.0
      %1714 = vmatprep.subr.mxu0 0.0
      %1715 = vmatpush1.msra.mxu0 0.0
      %1716 = vmatprep.subr.mxu0 0.0
      %1717 = vmatpush1.msra.mxu0 0.0
      %1718 = vmatprep.subr.mxu0 0.0
      %1719 = vmatpush1.msra.mxu0 0.0
      %1720 = vmatprep.subr.mxu0 0.0
      %1721 = vmatpush1.msra.mxu0 0.0
      %1722 = vmatprep.subr.mxu0 0.0
      %1723 = vmatpush1.msra.mxu0 0.0
      %1724 = vmatprep.subr.mxu0 0.0
      %1725 = vmatpush1.msra.mxu0 0.0
      %1726 = vmatprep.subr.mxu0 0.0
      %1727 = vmatpush1.msra.mxu0 0.0
      %1728 = vmatprep.subr.mxu0 0.0
      %1729 = vmatpush1.msra.mxu0 0.0
      %1730 = vmatprep.subr.mxu0 0.0
      %1731 = vmatpush1.msra.mxu0 0.0
      %1732 = vmatprep.subr.mxu0 0.0
      %1733 = vmatpush1.msra.mxu0 0.0
      %1734 = vmatprep.subr.mxu0 0.0
      %1735 = vmatpush1.msra.mxu0 0.0
      %1736 = vmatprep.subr.mxu0 0.0
      %1737 = vmatpush1.msra.mxu0 0.0
      %1738 = vmatprep.subr.mxu0 0.0
      %1739 = vmatpush1.msra.mxu0 0.0
      %1740 = vmatprep.subr.mxu0 0.0
      %1741 = vmatpush1.msra.mxu0 0.0
      %1742 = vmatprep.subr.mxu0 0.0
      %1743 = vmatpush1.msra.mxu0 0.0
      %1744 = vmatprep.subr.mxu0 0.0
      %1745 = vmatpush1.msra.mxu0 0.0
      %1746 = vmatprep.mubr.f32.mxu0 0.0
      %1747 = vmatmul.mubr.f32.gmra.mrb[0].mxu0 %v1677
      %v1748 = vpop.f32.mrb[0].mxu0
      %v1749 = vadd.f32 0.0, %v1748
      %v1750 = vpop.f32.mrb[0].mxu0
      %1751 = vmatprep.mubr.f32.mxu0 0.0
      %1752 = vmatmul.mubr.f32.gmra.mrb[0].mxu0 %v1680
      %v1753 = vpop.f32.mrb[0].mxu0
      %v1754 = vadd.f32 0.0, %v1753
      %v1755 = vpop.f32.mrb[0].mxu0
      %1756 = vdwg.mxu0
      %v1758 = vsel %vm702, %v1749, 0
      %v1761 = vsel %vm702, %v1754, 0
      %1763 = vmatprep.subr.mxu0 0.0
      %1764 = vmatpush1.msra.mxu0 %v695
      %1765 = vmatprep.subr.mxu0 0.0
      %1766 = vmatpush1.msra.mxu0 0.0
      %1767 = vmatprep.subr.mxu0 0.0
      %1768 = vmatpush1.msra.mxu0 0.0
      %1769 = vmatprep.subr.mxu0 0.0
      %1770 = vmatpush1.msra.mxu0 0.0
      %1771 = vmatprep.subr.mxu0 0.0
      %1772 = vmatpush1.msra.mxu0 0.0
      %1773 = vmatprep.subr.mxu0 0.0
      %1774 = vmatpush1.msra.mxu0 0.0
      %1775 = vmatprep.subr.mxu0 0.0
      %1776 = vmatpush1.msra.mxu0 0.0
      %1777 = vmatprep.subr.mxu0 0.0
      %1778 = vmatpush1.msra.mxu0 0.0
      %1779 = vmatprep.subr.mxu0 0.0
      %1780 = vmatpush1.msra.mxu0 0.0
      %1781 = vmatprep.subr.mxu0 0.0
      %1782 = vmatpush1.msra.mxu0 0.0
      %1783 = vmatprep.subr.mxu0 0.0
      %1784 = vmatpush1.msra.mxu0 0.0
      %1785 = vmatprep.subr.mxu0 0.0
      %1786 = vmatpush1.msra.mxu0 0.0
      %1787 = vmatprep.subr.mxu0 0.0
      %1788 = vmatpush1.msra.mxu0 0.0
      %1789 = vmatprep.subr.mxu0 0.0
      %1790 = vmatpush1.msra.mxu0 0.0
      %1791 = vmatprep.subr.mxu0 0.0
      %1792 = vmatpush1.msra.mxu0 0.0
      %1793 = vmatprep.subr.mxu0 0.0
      %1794 = vmatpush1.msra.mxu0 0.0
      %1795 = vmatprep.subr.mxu0 0.0
      %1796 = vmatpush1.msra.mxu0 0.0
      %1797 = vmatprep.subr.mxu0 0.0
      %1798 = vmatpush1.msra.mxu0 0.0
      %1799 = vmatprep.subr.mxu0 0.0
      %1800 = vmatpush1.msra.mxu0 0.0
      %1801 = vmatprep.subr.mxu0 0.0
      %1802 = vmatpush1.msra.mxu0 0.0
      %1803 = vmatprep.subr.mxu0 0.0
      %1804 = vmatpush1.msra.mxu0 0.0
      %1805 = vmatprep.subr.mxu0 0.0
      %1806 = vmatpush1.msra.mxu0 0.0
      %1807 = vmatprep.subr.mxu0 0.0
      %1808 = vmatpush1.msra.mxu0 0.0
      %1809 = vmatprep.subr.mxu0 0.0
      %1810 = vmatpush1.msra.mxu0 0.0
      %1811 = vmatprep.subr.mxu0 0.0
      %1812 = vmatpush1.msra.mxu0 0.0
      %1813 = vmatprep.subr.mxu0 0.0
      %1814 = vmatpush1.msra.mxu0 0.0
      %1815 = vmatprep.subr.mxu0 0.0
      %1816 = vmatpush1.msra.mxu0 0.0
      %1817 = vmatprep.subr.mxu0 0.0
      %1818 = vmatpush1.msra.mxu0 0.0
      %1819 = vmatprep.subr.mxu0 0.0
      %1820 = vmatpush1.msra.mxu0 0.0
      %1821 = vmatprep.subr.mxu0 0.0
      %1822 = vmatpush1.msra.mxu0 0.0
      %1823 = vmatprep.subr.mxu0 0.0
      %1824 = vmatpush1.msra.mxu0 0.0
      %1825 = vmatprep.subr.mxu0 0.0
      %1826 = vmatpush1.msra.mxu0 0.0
      %1827 = vmatprep.mubr.f32.mxu0 0.0
      %1828 = vmatmul.mubr.f32.gmra.mrb[0].mxu0 %v1758
      %v1829 = vpop.f32.mrb[0].mxu0
      %v1830 = vadd.f32 0.0, %v1829
      %v1831 = vpop.f32.mrb[0].mxu0
      %1832 = vmatprep.mubr.f32.mxu0 0.0
      %1833 = vmatmul.mubr.f32.gmra.mrb[0].mxu0 %v1761
      %v1834 = vpop.f32.mrb[0].mxu0
      %v1835 = vadd.f32 0.0, %v1834
      %v1836 = vpop.f32.mrb[0].mxu0
      %1837 = vdwg.mxu0
      %v1838 = vadd.f32 %v1551, %v1830
      %v1839 = vadd.f32 %v1552, %v1835
      %v1840 = vadd.f32 %v545, %v1838
      %v1841 = vadd.f32 %v546, %v1839
      %v1842 = vld [vmem:[%s7] sm:$0x1]
      %v1844 = vlaneseq
      %v1845 = vshrl.u32 %v1844, 7
      %v1846 = vsub.s32 0, %v1845
      %v1847 = vrot.slane %v1842, %v1846
      %v1849 = vadd.f32 %v1840, %v1847
      %v1850 = vadd.f32 %v1841, %v1847
      %v1851 = vld [vmem:[%s8] sm:$0x1]
      %v1852 = vld [vmem:[%s9] sm:$0x1]
      %v1853 = vsel %vm556, %v1849, 0.0
      %1854 = vadd.xlane.f32.xlu0 %v1853
      %v1855 = vpop.xlane.xlu0 %1854
      %v1856 = vsel %vm556, %v1850, 0.0
      %1857 = vadd.xlane.f32.xlu0 %v1856
      %v1858 = vpop.xlane.xlu0 %1857
      %v1859 = vmul.f32 %v1855, %v563
      %v1860 = vmul.f32 %v1858, %v563
      %v1861 = vsub.f32 %v1849, %v1859
      %v1862 = vsub.f32 %v1850, %v1860
      %v1863 = vmul.f32 %v1861, %v1861
      %v1864 = vmul.f32 %v1862, %v1862
      %v1865 = vsel %vm556, %v1863, 0.0
      %1866 = vadd.xlane.f32.xlu0 %v1865
      %v1867 = vpop.xlane.xlu0 %1866
      %v1868 = vsel %vm556, %v1864, 0.0
      %1869 = vadd.xlane.f32.xlu0 %v1868
      %v1870 = vpop.xlane.xlu0 %1869
      %v1871 = vmul.f32 %v1867, %v563
      %v1872 = vmul.f32 %v1870, %v563
      %v1873 = vadd.f32 %v1871, 1e-05
      %v1874 = vadd.f32 %v1872, 1e-05
      %v1875 = vrsqrt.pop %v1873
      %v1876 = vrsqrt.pop %v1874
      %v1877 = vmul.f32 %v1861, %v1875
      %v1878 = vmul.f32 %v1862, %v1876
      %v1880 = vlaneseq
      %v1881 = vshrl.u32 %v1880, 7
      %v1882 = vsub.s32 0, %v1881
      %v1883 = vrot.slane %v1851, %v1882
      %v1885 = vmul.f32 %v1877, %v1883
      %v1886 = vmul.f32 %v1878, %v1883
      %v1888 = vlaneseq
      %v1889 = vshrl.u32 %v1888, 7
      %v1890 = vsub.s32 0, %v1889
      %v1891 = vrot.slane %v1852, %v1890
      %v1893 = vadd.f32 %v1885, %v1891
      %v1894 = vadd.f32 %v1886, %v1891
      %v1895 = vld [vmem:[%s10] sm:$0xff]
      %v1896 = vld [vmem:[%s10 + $0x8] sm:$0xff]
      %v1897 = vld [vmem:[%s10 + $0x10] sm:$0xff]
      %v1898 = vld [vmem:[%s10 + $0x18] sm:$0xff]
      %v1899 = vld [vmem:[%s11] sm:$0x1]
      %v1901 = vlaneseq
      %v1902 = vshrl.u32 %v1901, 7
      %v1903 = vsub.s32 0, %v1902
      %v1904 = vrot.slane %v1899, %v1903
      %v1907 = vsel %vm556, %v1893, 0
      %v1910 = vsel %vm556, %v1894, 0
      %1912 = vmatprep.subr.mxu0 0.0
      %1913 = vmatpush1.msra.mxu0 %v1895
      %1914 = vmatprep.subr.mxu0 0.0
      %1915 = vmatpush1.msra.mxu0 %v1896
      %1916 = vmatprep.subr.mxu0 0.0
      %1917 = vmatpush1.msra.mxu0 %v1897
      %1918 = vmatprep.subr.mxu0 0.0
      %1919 = vmatpush1.msra.mxu0 %v1898
      %1920 = vmatprep.subr.mxu0 0.0
      %1921 = vmatpush1.msra.mxu0 0.0
      %1922 = vmatprep.subr.mxu0 0.0
      %1923 = vmatpush1.msra.mxu0 0.0
      %1924 = vmatprep.subr.mxu0 0.0
      %1925 = vmatpush1.msra.mxu0 0.0
      %1926 = vmatprep.subr.mxu0 0.0
      %1927 = vmatpush1.msra.mxu0 0.0
      %1928 = vmatprep.subr.mxu0 0.0
      %1929 = vmatpush1.msra.mxu0 0.0
      %1930 = vmatprep.subr.mxu0 0.0
      %1931 = vmatpush1.msra.mxu0 0.0
      %1932 = vmatprep.subr.mxu0 0.0
      %1933 = vmatpush1.msra.mxu0 0.0
      %1934 = vmatprep.subr.mxu0 0.0
      %1935 = vmatpush1.msra.mxu0 0.0
      %1936 = vmatprep.subr.mxu0 0.0
      %1937 = vmatpush1.msra.mxu0 0.0
      %1938 = vmatprep.subr.mxu0 0.0
      %1939 = vmatpush1.msra.mxu0 0.0
      %1940 = vmatprep.subr.mxu0 0.0
      %1941 = vmatpush1.msra.mxu0 0.0
      %1942 = vmatprep.subr.mxu0 0.0
      %1943 = vmatpush1.msra.mxu0 0.0
      %1944 = vmatprep.subr.mxu0 0.0
      %1945 = vmatpush1.msra.mxu0 0.0
      %1946 = vmatprep.subr.mxu0 0.0
      %1947 = vmatpush1.msra.mxu0 0.0
      %1948 = vmatprep.subr.mxu0 0.0
      %1949 = vmatpush1.msra.mxu0 0.0
      %1950 = vmatprep.subr.mxu0 0.0
      %1951 = vmatpush1.msra.mxu0 0.0
      %1952 = vmatprep.subr.mxu0 0.0
      %1953 = vmatpush1.msra.mxu0 0.0
      %1954 = vmatprep.subr.mxu0 0.0
      %1955 = vmatpush1.msra.mxu0 0.0
      %1956 = vmatprep.subr.mxu0 0.0
      %1957 = vmatpush1.msra.mxu0 0.0
      %1958 = vmatprep.subr.mxu0 0.0
      %1959 = vmatpush1.msra.mxu0 0.0
      %1960 = vmatprep.subr.mxu0 0.0
      %1961 = vmatpush1.msra.mxu0 0.0
      %1962 = vmatprep.subr.mxu0 0.0
      %1963 = vmatpush1.msra.mxu0 0.0
      %1964 = vmatprep.subr.mxu0 0.0
      %1965 = vmatpush1.msra.mxu0 0.0
      %1966 = vmatprep.subr.mxu0 0.0
      %1967 = vmatpush1.msra.mxu0 0.0
      %1968 = vmatprep.subr.mxu0 0.0
      %1969 = vmatpush1.msra.mxu0 0.0
      %1970 = vmatprep.subr.mxu0 0.0
      %1971 = vmatpush1.msra.mxu0 0.0
      %1972 = vmatprep.subr.mxu0 0.0
      %1973 = vmatpush1.msra.mxu0 0.0
      %1974 = vmatprep.subr.mxu0 0.0
      %1975 = vmatpush1.msra.mxu0 0.0
      %1976 = vmatprep.mubr.f32.mxu0 0.0
      %1977 = vmatmul.mubr.f32.gmra.mrb[0].mxu0 %v1907
      %v1978 = vpop.f32.mrb[0].mxu0
      %v1979 = vadd.f32 %v1904, %v1978
      %v1980 = vpop.f32.mrb[0].mxu0
      %1981 = vmatprep.mubr.f32.mxu0 0.0
      %1982 = vmatmul.mubr.f32.gmra.mrb[0].mxu0 %v1910
      %v1983 = vpop.f32.mrb[0].mxu0
      %v1984 = vadd.f32 %v1904, %v1983
      %v1985 = vpop.f32.mrb[0].mxu0
      %1986 = vdwg.mxu0
      %v1987 = vmul.f32 %v1979, %v1979
      %v1988 = vmul.f32 %v1984, %v1984
      %v1989 = vmul.f32 %v1979, %v1987
      %v1990 = vmul.f32 %v1984, %v1988
      %v1991 = vmul.f32 %v1989, 0.044715
      %v1992 = vmul.f32 %v1990, 0.044715
      %v1993 = vadd.f32 %v1979, %v1991
      %v1994 = vadd.f32 %v1984, %v1992
      %v1995 = vmul.f32 %v1993, 0.7978846
      %v1996 = vmul.f32 %v1994, 0.7978846
      %v1997 = vtanh.pop %v1995
      %v1998 = vtanh.pop %v1996
      %v1999 = vadd.f32 %v1997, 1.0
      %v2000 = vadd.f32 %v1998, 1.0
      %v2001 = vmul.f32 %v1999, 0.5
      %v2002 = vmul.f32 %v2000, 0.5
      %v2003 = vmul.f32 %v1979, %v2001
      %v2004 = vmul.f32 %v1984, %v2002
      %v2005 = vld [vmem:[%s12] sm:$0xff]
      %v2006 = vld [vmem:[%s12 + $0x8] sm:$0xff]
      %v2007 = vld [vmem:[%s12 + $0x10] sm:$0xff]
      %v2008 = vld [vmem:[%s12 + $0x18] sm:$0xff]
      %v2009 = vld [vmem:[%s12 + $0x20] sm:$0xff]
      %v2010 = vld [vmem:[%s12 + $0x28] sm:$0xff]
      %v2011 = vld [vmem:[%s12 + $0x30] sm:$0xff]
      %v2012 = vld [vmem:[%s12 + $0x38] sm:$0xff]
      %v2013 = vld [vmem:[%s12 + $0x40] sm:$0xff]
      %v2014 = vld [vmem:[%s12 + $0x48] sm:$0xff]
      %v2015 = vld [vmem:[%s12 + $0x50] sm:$0xff]
      %v2016 = vld [vmem:[%s12 + $0x58] sm:$0xff]
      %v2017 = vld [vmem:[%s12 + $0x60] sm:$0xff]
      %v2018 = vld [vmem:[%s12 + $0x68] sm:$0xff]
      %v2019 = vld [vmem:[%s12 + $0x70] sm:$0xff]
      %v2020 = vld [vmem:[%s12 + $0x78] sm:$0xff]
      %2021 = vmatprep.subr.mxu0 0.0
      %2022 = vmatpush1.msra.mxu0 %v2005
      %2023 = vmatprep.subr.mxu0 0.0
      %2024 = vmatpush1.msra.mxu0 %v2006
      %2025 = vmatprep.subr.mxu0 0.0
      %2026 = vmatpush1.msra.mxu0 %v2007
      %2027 = vmatprep.subr.mxu0 0.0
      %2028 = vmatpush1.msra.mxu0 %v2008
      %2029 = vmatprep.subr.mxu0 0.0
      %2030 = vmatpush1.msra.mxu0 %v2009
      %2031 = vmatprep.subr.mxu0 0.0
      %2032 = vmatpush1.msra.mxu0 %v2010
      %2033 = vmatprep.subr.mxu0 0.0
      %2034 = vmatpush1.msra.mxu0 %v2011
      %2035 = vmatprep.subr.mxu0 0.0
      %2036 = vmatpush1.msra.mxu0 %v2012
      %2037 = vmatprep.subr.mxu0 0.0
      %2038 = vmatpush1.msra.mxu0 %v2013
      %2039 = vmatprep.subr.mxu0 0.0
      %2040 = vmatpush1.msra.mxu0 %v2014
      %2041 = vmatprep.subr.mxu0 0.0
      %2042 = vmatpush1.msra.mxu0 %v2015
      %2043 = vmatprep.subr.mxu0 0.0
      %2044 = vmatpush1.msra.mxu0 %v2016
      %2045 = vmatprep.subr.mxu0 0.0
      %2046 = vmatpush1.msra.mxu0 %v2017
      %2047 = vmatprep.subr.mxu0 0.0
      %2048 = vmatpush1.msra.mxu0 %v2018
      %2049 = vmatprep.subr.mxu0 0.0
      %2050 = vmatpush1.msra.mxu0 %v2019
      %2051 = vmatprep.subr.mxu0 0.0
      %2052 = vmatpush1.msra.mxu0 %v2020
      %2053 = vmatprep.subr.mxu0 0.0
      %2054 = vmatpush1.msra.mxu0 0.0
      %2055 = vmatprep.subr.mxu0 0.0
      %2056 = vmatpush1.msra.mxu0 0.0
      %2057 = vmatprep.subr.mxu0 0.0
      %2058 = vmatpush1.msra.mxu0 0.0
      %2059 = vmatprep.subr.mxu0 0.0
      %2060 = vmatpush1.msra.mxu0 0.0
      %2061 = vmatprep.subr.mxu0 0.0
      %2062 = vmatpush1.msra.mxu0 0.0
      %2063 = vmatprep.subr.mxu0 0.0
      %2064 = vmatpush1.msra.mxu0 0.0
      %2065 = vmatprep.subr.mxu0 0.0
      %2066 = vmatpush1.msra.mxu0 0.0
      %2067 = vmatprep.subr.mxu0 0.0
      %2068 = vmatpush1.msra.mxu0 0.0
      %2069 = vmatprep.subr.mxu0 0.0
      %2070 = vmatpush1.msra.mxu0 0.0
      %2071 = vmatprep.subr.mxu0 0.0
      %2072 = vmatpush1.msra.mxu0 0.0
      %2073 = vmatprep.subr.mxu0 0.0
      %2074 = vmatpush1.msra.mxu0 0.0
      %2075 = vmatprep.subr.mxu0 0.0
      %2076 = vmatpush1.msra.mxu0 0.0
      %2077 = vmatprep.subr.mxu0 0.0
      %2078 = vmatpush1.msra.mxu0 0.0
      %2079 = vmatprep.subr.mxu0 0.0
      %2080 = vmatpush1.msra.mxu0 0.0
      %2081 = vmatprep.subr.mxu0 0.0
      %2082 = vmatpush1.msra.mxu0 0.0
      %2083 = vmatprep.subr.mxu0 0.0
      %2084 = vmatpush1.msra.mxu0 0.0
      %2085 = vmatprep.mubr.f32.mxu0 0.0
      %2086 = vmatmul.mubr.f32.gmra.mrb[0].mxu0 %v2003
      %v2087 = vpop.f32.mrb[0].mxu0
      %v2088 = vadd.f32 0.0, %v2087
      %v2089 = vpop.f32.mrb[0].mxu0
      %2090 = vmatprep.mubr.f32.mxu0 0.0
      %2091 = vmatmul.mubr.f32.gmra.mrb[0].mxu0 %v2004
      %v2092 = vpop.f32.mrb[0].mxu0
      %v2093 = vadd.f32 0.0, %v2092
      %v2094 = vpop.f32.mrb[0].mxu0
      %2095 = vdwg.mxu0
      %v2096 = vadd.f32 %v1849, %v2088
      %v2097 = vadd.f32 %v1850, %v2093
      %v2098 = vld [vmem:[%s13] sm:$0x1]
      %v2100 = vlaneseq
      %v2101 = vshrl.u32 %v2100, 7
      %v2102 = vsub.s32 0, %v2101
      %v2103 = vrot.slane %v2098, %v2102
      %v2105 = vadd.f32 %v2096, %v2103
      %v2106 = vadd.f32 %v2097, %v2103
      %s2107 = scalar_lea.vmem %s2, 1
      %v2108 = vld [vmem:[%s2107] sm:$0x1]
      %s2109 = scalar_lea.vmem %s3, 1
      %v2110 = vld [vmem:[%s2109] sm:$0x1]
      %v2111 = vsel %vm556, %v2105, 0.0
      %2112 = vadd.xlane.f32.xlu0 %v2111
      %v2113 = vpop.xlane.xlu0 %2112
      %v2114 = vsel %vm556, %v2106, 0.0
      %2115 = vadd.xlane.f32.xlu0 %v2114
      %v2116 = vpop.xlane.xlu0 %2115
      %v2117 = vmul.f32 %v2113, %v563
      %v2118 = vmul.f32 %v2116, %v563
      %v2119 = vsub.f32 %v2105, %v2117
      %v2120 = vsub.f32 %v2106, %v2118
      %v2121 = vmul.f32 %v2119, %v2119
      %v2122 = vmul.f32 %v2120, %v2120
      %v2123 = vsel %vm556, %v2121, 0.0
      %2124 = vadd.xlane.f32.xlu0 %v2123
      %v2125 = vpop.xlane.xlu0 %2124
      %v2126 = vsel %vm556, %v2122, 0.0
      %2127 = vadd.xlane.f32.xlu0 %v2126
      %v2128 = vpop.xlane.xlu0 %2127
      %v2129 = vmul.f32 %v2125, %v563
      %v2130 = vmul.f32 %v2128, %v563
      %v2131 = vadd.f32 %v2129, 1e-05
      %v2132 = vadd.f32 %v2130, 1e-05
      %v2133 = vrsqrt.pop %v2131
      %v2134 = vrsqrt.pop %v2132
      %v2135 = vmul.f32 %v2119, %v2133
      %v2136 = vmul.f32 %v2120, %v2134
      %v2138 = vlaneseq
      %v2139 = vshrl.u32 %v2138, 7
      %v2140 = vsub.s32 0, %v2139
      %v2141 = vrot.slane %v2108, %v2140
      %v2143 = vmul.f32 %v2135, %v2141
      %v2144 = vmul.f32 %v2136, %v2141
      %v2146 = vlaneseq
      %v2147 = vshrl.u32 %v2146, 7
      %v2148 = vsub.s32 0, %v2147
      %v2149 = vrot.slane %v2110, %v2148
      %v2151 = vadd.f32 %v2143, %v2149
      %v2152 = vadd.f32 %v2144, %v2149
      %s2153 = scalar_lea.vmem %s4, 32
      %v2154 = vld [vmem:[%s2153] sm:$0xff]
      %v2155 = vld [vmem:[%s2153 + $0x8] sm:$0xff]
      %v2156 = vld [vmem:[%s2153 + $0x10] sm:$0xff]
      %v2157 = vld [vmem:[%s2153 + $0x18] sm:$0xff]
      %s2158 = scalar_lea.vmem %s5, 1
      %v2159 = vld [vmem:[%s2158] sm:$0x1]
      %v2161 = vlaneseq
      %v2162 = vshrl.u32 %v2161, 7
      %v2163 = vsub.s32 0, %v2162
      %v2164 = vrot.slane %v2159, %v2163
      %v2167 = vsel %vm556, %v2151, 0
      %v2170 = vsel %vm556, %v2152, 0
      %2172 = vmatprep.subr.mxu0 0.0
      %2173 = vmatpush1.msra.mxu0 %v2154
      %2174 = vmatprep.subr.mxu0 0.0
      %2175 = vmatpush1.msra.mxu0 %v2155
      %2176 = vmatprep.subr.mxu0 0.0
      %2177 = vmatpush1.msra.mxu0 %v2156
      %2178 = vmatprep.subr.mxu0 0.0
      %2179 = vmatpush1.msra.mxu0 %v2157
      %2180 = vmatprep.subr.mxu0 0.0
      %2181 = vmatpush1.msra.mxu0 0.0
      %2182 = vmatprep.subr.mxu0 0.0
      %2183 = vmatpush1.msra.mxu0 0.0
      %2184 = vmatprep.subr.mxu0 0.0
      %2185 = vmatpush1.msra.mxu0 0.0
      %2186 = vmatprep.subr.mxu0 0.0
      %2187 = vmatpush1.msra.mxu0 0.0
      %2188 = vmatprep.subr.mxu0 0.0
      %2189 = vmatpush1.msra.mxu0 0.0
      %2190 = vmatprep.subr.mxu0 0.0
      %2191 = vmatpush1.msra.mxu0 0.0
      %2192 = vmatprep.subr.mxu0 0.0
      %2193 = vmatpush1.msra.mxu0 0.0
      %2194 = vmatprep.subr.mxu0 0.0
      %2195 = vmatpush1.msra.mxu0 0.0
      %2196 = vmatprep.subr.mxu0 0.0
      %2197 = vmatpush1.msra.mxu0 0.0
      %2198 = vmatprep.subr.mxu0 0.0
      %2199 = vmatpush1.msra.mxu0 0.0
      %2200 = vmatprep.subr.mxu0 0.0
      %2201 = vmatpush1.msra.mxu0 0.0
      %2202 = vmatprep.subr.mxu0 0.0
      %2203 = vmatpush1.msra.mxu0 0.0
      %2204 = vmatprep.subr.mxu0 0.0
      %2205 = vmatpush1.msra.mxu0 0.0
      %2206 = vmatprep.subr.mxu0 0.0
      %2207 = vmatpush1.msra.mxu0 0.0
      %2208 = vmatprep.subr.mxu0 0.0
      %2209 = vmatpush1.msra.mxu0 0.0
      %2210 = vmatprep.subr.mxu0 0.0
      %2211 = vmatpush1.msra.mxu0 0.0
      %2212 = vmatprep.subr.mxu0 0.0
      %2213 = vmatpush1.msra.mxu0 0.0
      %2214 = vmatprep.subr.mxu0 0.0
      %2215 = vmatpush1.msra.mxu0 0.0
      %2216 = vmatprep.subr.mxu0 0.0
      %2217 = vmatpush1.msra.mxu0 0.0
      %2218 = vmatprep.subr.mxu0 0.0
      %2219 = vmatpush1.msra.mxu0 0.0
      %2220 = vmatprep.subr.mxu0 0.0
      %2221 = vmatpush1.msra.mxu0 0.0
      %2222 = vmatprep.subr.mxu0 0.0
      %2223 = vmatpush1.msra.mxu0 0.0
      %2224 = vmatprep.subr.mxu0 0.0
      %2225 = vmatpush1.msra.mxu0 0.0
      %2226 = vmatprep.subr.mxu0 0.0
      %2227 = vmatpush1.msra.mxu0 0.0
      %2228 = vmatprep.subr.mxu0 0.0
      %2229 = vmatpush1.msra.mxu0 0.0
      %2230 = vmatprep.subr.mxu0 0.0
      %2231 = vmatpush1.msra.mxu0 0.0
      %2232 = vmatprep.subr.mxu0 0.0
      %2233 = vmatpush1.msra.mxu0 0.0
      %2234 = vmatprep.subr.mxu0 0.0
      %2235 = vmatpush1.msra.mxu0 0.0
      %2236 = vmatprep.mubr.f32.mxu0 0.0
      %2237 = vmatmul.mubr.f32.gmra.mrb[0].mxu0 %v2167
      %v2238 = vpop.f32.mrb[0].mxu0
      %v2239 = vadd.f32 %v2164, %v2238
      %v2240 = vpop.f32.mrb[0].mxu0
      %2241 = vmatprep.mubr.f32.mxu0 0.0
      %2242 = vmatmul.mubr.f32.gmra.mrb[0].mxu0 %v2170
      %v2243 = vpop.f32.mrb[0].mxu0
      %v2244 = vadd.f32 %v2164, %v2243
      %v2245 = vpop.f32.mrb[0].mxu0
      %2246 = vdwg.mxu0
      %s2247 = scalar_lea.vmem %s6, 32
      %v2248 = vld [vmem:[%s2247] sm:$0xff]
      %v2249 = vld [vmem:[%s2247 + $0x8] sm:$0xff]
      %v2250 = vld [vmem:[%s2247 + $0x10] sm:$0xff]
      %v2251 = vld [vmem:[%s2247 + $0x18] sm:$0xff]
      %2254 = vrot.lane.b32.xlu0 %v2239, 96
      %v2255 = vpop.permute.xlu0 %2254
      %2256 = vrot.lane.b32.xlu0 %v2244, 96
      %v2257 = vpop.permute.xlu0 %2256
      %v2258 = vsel %vm702, %v2239, 0
      %v2260 = vsel %vm702, %v2244, 0
      %v2262 = vsel %vm702, %v2255, 0
      %v2264 = vsel %vm702, %v2257, 0
      %2266 = vmatprep.subr.mxu0 0.0
      %2267 = vmatpush1.xpose.msra.mxu0 %v2262
      %2268 = vmatprep.subr.mxu0 0.0
      %2269 = vmatpush1.xpose.msra.mxu0 %v2264
      %2270 = vmatprep.subr.mxu0 0.0
      %2271 = vmatpush1.xpose.msra.mxu0 0.0
      %2272 = vmatprep.subr.mxu0 0.0
      %2273 = vmatpush1.xpose.msra.mxu0 0.0
      %2274 = vmatprep.subr.mxu0 0.0
      %2275 = vmatpush1.xpose.msra.mxu0 0.0
      %2276 = vmatprep.subr.mxu0 0.0
      %2277 = vmatpush1.xpose.msra.mxu0 0.0
      %2278 = vmatprep.subr.mxu0 0.0
      %2279 = vmatpush1.xpose.msra.mxu0 0.0
      %2280 = vmatprep.subr.mxu0 0.0
      %2281 = vmatpush1.xpose.msra.mxu0 0.0
      %2282 = vmatprep.subr.mxu0 0.0
      %2283 = vmatpush1.xpose.msra.mxu0 0.0
      %2284 = vmatprep.subr.mxu0 0.0
      %2285 = vmatpush1.xpose.msra.mxu0 0.0
      %2286 = vmatprep.subr.mxu0 0.0
      %2287 = vmatpush1.xpose.msra.mxu0 0.0
      %2288 = vmatprep.subr.mxu0 0.0
      %2289 = vmatpush1.xpose.msra.mxu0 0.0
      %2290 = vmatprep.subr.mxu0 0.0
      %2291 = vmatpush1.xpose.msra.mxu0 0.0
      %2292 = vmatprep.subr.mxu0 0.0
      %2293 = vmatpush1.xpose.msra.mxu0 0.0
      %2294 = vmatprep.subr.mxu0 0.0
      %2295 = vmatpush1.xpose.msra.mxu0 0.0
      %2296 = vmatprep.subr.mxu0 0.0
      %2297 = vmatpush1.xpose.msra.mxu0 0.0
      %2298 = vmatprep.subr.mxu0 0.0
      %2299 = vmatpush1.xpose.msra.mxu0 0.0
      %2300 = vmatprep.subr.mxu0 0.0
      %2301 = vmatpush1.xpose.msra.mxu0 0.0
      %2302 = vmatprep.subr.mxu0 0.0
      %2303 = vmatpush1.xpose.msra.mxu0 0.0
      %2304 = vmatprep.subr.mxu0 0.0
      %2305 = vmatpush1.xpose.msra.mxu0 0.0
      %2306 = vmatprep.subr.mxu0 0.0
      %2307 = vmatpush1.xpose.msra.mxu0 0.0
      %2308 = vmatprep.subr.mxu0 0.0
      %2309 = vmatpush1.xpose.msra.mxu0 0.0
      %2310 = vmatprep.subr.mxu0 0.0
      %2311 = vmatpush1.xpose.msra.mxu0 0.0
      %2312 = vmatprep.subr.mxu0 0.0
      %2313 = vmatpush1.xpose.msra.mxu0 0.0
      %2314 = vmatprep.subr.mxu0 0.0
      %2315 = vmatpush1.xpose.msra.mxu0 0.0
      %2316 = vmatprep.subr.mxu0 0.0
      %2317 = vmatpush1.xpose.msra.mxu0 0.0
      %2318 = vmatprep.subr.mxu0 0.0
      %2319 = vmatpush1.xpose.msra.mxu0 0.0
      %2320 = vmatprep.subr.mxu0 0.0
      %2321 = vmatpush1.xpose.msra.mxu0 0.0
      %2322 = vmatprep.subr.mxu0 0.0
      %2323 = vmatpush1.xpose.msra.mxu0 0.0
      %2324 = vmatprep.subr.mxu0 0.0
      %2325 = vmatpush1.xpose.msra.mxu0 0.0
      %2326 = vmatprep.subr.mxu0 0.0
      %2327 = vmatpush1.xpose.msra.mxu0 0.0
      %2328 = vmatprep.subr.mxu0 0.0
      %2329 = vmatpush1.xpose.msra.mxu0 0.0
      %2330 = vmatprep.mubr.f32.mxu0 0.0
      %2331 = vmatmul.mubr.f32.gmra.mrb[0].mxu0 %v2258
      %v2332 = vpop.f32.mrb[0].mxu0
      %v2333 = vadd.f32 0.0, %v2332
      %v2334 = vpop.f32.mrb[0].mxu0
      %2335 = vmatprep.mubr.f32.mxu0 0.0
      %2336 = vmatmul.mubr.f32.gmra.mrb[0].mxu0 %v2260
      %v2337 = vpop.f32.mrb[0].mxu0
      %v2338 = vadd.f32 0.0, %v2337
      %v2339 = vpop.f32.mrb[0].mxu0
      %2340 = vdwg.mxu0
      %v2341 = vmul.f32 %v2333, 0.35355338
      %v2342 = vmul.f32 %v2338, 0.35355338
      %v2343 = vsel %vm552, %v2341, -1e+30
      %v2344 = vsel %vm553, %v2342, -1e+30
      %v2345 = vsel %vm790, %v2343, -inf
      %2346 = vmax.xlane.f32.xlu0 %v2345
      %v2347 = vpop.xlane.xlu0 %2346
      %v2348 = vsel %vm790, %v2344, -inf
      %2349 = vmax.xlane.f32.xlu0 %v2348
      %v2350 = vpop.xlane.xlu0 %2349
      %v2351 = vsub.f32 %v2343, %v2347
      %v2352 = vsub.f32 %v2344, %v2350
      %v2353 = vmul.f32 %v2351, 1.442695
      %v2354 = vpow.pop %v2353
      %v2355 = vmul.f32 %v2352, 1.442695
      %v2356 = vpow.pop %v2355
      %v2357 = vsel %vm790, %v2354, 0.0
      %2358 = vadd.xlane.f32.xlu0 %v2357
      %v2359 = vpop.xlane.xlu0 %2358
      %v2360 = vsel %vm790, %v2356, 0.0
      %2361 = vadd.xlane.f32.xlu0 %v2360
      %v2362 = vpop.xlane.xlu0 %2361
      %v2363 = vrcp.pop %v2359
      %v2364 = vrcp.pop %v2362
      %v2365 = vmul.f32 %v2354, %v2363
      %v2366 = vmul.f32 %v2356, %v2364
      %2367 = vrot.lane.b32.xlu0 %v2239, 64
      %v2368 = vpop.permute.xlu0 %2367
      %2369 = vrot.lane.b32.xlu0 %v2244, 64
      %v2370 = vpop.permute.xlu0 %2369
      %v2374 = vsel %vm790, %v2365, 0
      %v2377 = vsel %vm790, %v2366, 0
      %2379 = vmatprep.subr.mxu0 0.0
      %2380 = vmatpush1.msra.mxu0 %v2368
      %2381 = vmatprep.subr.mxu0 0.0
      %2382 = vmatpush1.msra.mxu0 %v2370
      %2383 = vmatprep.subr.mxu0 0.0
      %2384 = vmatpush1.msra.mxu0 0.0
      %2385 = vmatprep.subr.mxu0 0.0
      %2386 = vmatpush1.msra.mxu0 0.0
      %2387 = vmatprep.subr.mxu0 0.0
      %2388 = vmatpush1.msra.mxu0 0.0
      %2389 = vmatprep.subr.mxu0 0.0
      %2390 = vmatpush1.msra.mxu0 0.0
      %2391 = vmatprep.subr.mxu0 0.0
      %2392 = vmatpush1.msra.mxu0 0.0
      %2393 = vmatprep.subr.mxu0 0.0
      %2394 = vmatpush1.msra.mxu0 0.0
      %2395 = vmatprep.subr.mxu0 0.0
      %2396 = vmatpush1.msra.mxu0 0.0
      %2397 = vmatprep.subr.mxu0 0.0
      %2398 = vmatpush1.msra.mxu0 0.0
      %2399 = vmatprep.subr.mxu0 0.0
      %2400 = vmatpush1.msra.mxu0 0.0
      %2401 = vmatprep.subr.mxu0 0.0
      %2402 = vmatpush1.msra.mxu0 0.0
      %2403 = vmatprep.subr.mxu0 0.0
      %2404 = vmatpush1.msra.mxu0 0.0
      %2405 = vmatprep.subr.mxu0 0.0
      %2406 = vmatpush1.msra.mxu0 0.0
      %2407 = vmatprep.subr.mxu0 0.0
      %2408 = vmatpush1.msra.mxu0 0.0
      %2409 = vmatprep.subr.mxu0 0.0
      %2410 = vmatpush1.msra.mxu0 0.0
      %2411 = vmatprep.subr.mxu0 0.0
      %2412 = vmatpush1.msra.mxu0 0.0
      %2413 = vmatprep.subr.mxu0 0.0
      %2414 = vmatpush1.msra.mxu0 0.0
      %2415 = vmatprep.subr.mxu0 0.0
      %2416 = vmatpush1.msra.mxu0 0.0
      %2417 = vmatprep.subr.mxu0 0.0
      %2418 = vmatpush1.msra.mxu0 0.0
      %2419 = vmatprep.subr.mxu0 0.0
      %2420 = vmatpush1.msra.mxu0 0.0
      %2421 = vmatprep.subr.mxu0 0.0
      %2422 = vmatpush1.msra.mxu0 0.0
      %2423 = vmatprep.subr.mxu0 0.0
      %2424 = vmatpush1.msra.mxu0 0.0
      %2425 = vmatprep.subr.mxu0 0.0
      %2426 = vmatpush1.msra.mxu0 0.0
      %2427 = vmatprep.subr.mxu0 0.0
      %2428 = vmatpush1.msra.mxu0 0.0
      %2429 = vmatprep.subr.mxu0 0.0
      %2430 = vmatpush1.msra.mxu0 0.0
      %2431 = vmatprep.subr.mxu0 0.0
      %2432 = vmatpush1.msra.mxu0 0.0
      %2433 = vmatprep.subr.mxu0 0.0
      %2434 = vmatpush1.msra.mxu0 0.0
      %2435 = vmatprep.subr.mxu0 0.0
      %2436 = vmatpush1.msra.mxu0 0.0
      %2437 = vmatprep.subr.mxu0 0.0
      %2438 = vmatpush1.msra.mxu0 0.0
      %2439 = vmatprep.subr.mxu0 0.0
      %2440 = vmatpush1.msra.mxu0 0.0
      %2441 = vmatprep.subr.mxu0 0.0
      %2442 = vmatpush1.msra.mxu0 0.0
      %2443 = vmatprep.mubr.f32.mxu0 0.0
      %2444 = vmatmul.mubr.f32.gmra.mrb[0].mxu0 %v2374
      %v2445 = vpop.f32.mrb[0].mxu0
      %v2446 = vadd.f32 0.0, %v2445
      %v2447 = vpop.f32.mrb[0].mxu0
      %2448 = vmatprep.mubr.f32.mxu0 0.0
      %2449 = vmatmul.mubr.f32.gmra.mrb[0].mxu0 %v2377
      %v2450 = vpop.f32.mrb[0].mxu0
      %v2451 = vadd.f32 0.0, %v2450
      %v2452 = vpop.f32.mrb[0].mxu0
      %2453 = vdwg.mxu0
      %2454 = vrot.lane.b32.xlu0 %v2239, 120
      %v2455 = vpop.permute.xlu0 %2454
      %2456 = vrot.lane.b32.xlu0 %v2244, 120
      %v2457 = vpop.permute.xlu0 %2456
      %2458 = vrot.lane.b32.xlu0 %v2239, 88
      %v2459 = vpop.permute.xlu0 %2458
      %2460 = vrot.lane.b32.xlu0 %v2244, 88
      %v2461 = vpop.permute.xlu0 %2460
      %v2462 = vsel %vm702, %v2455, 0
      %v2464 = vsel %vm702, %v2457, 0
      %v2466 = vsel %vm702, %v2459, 0
      %v2468 = vsel %vm702, %v2461, 0
      %2470 = vmatprep.subr.mxu0 0.0
      %2471 = vmatpush1.xpose.msra.mxu0 %v2466
      %2472 = vmatprep.subr.mxu0 0.0
      %2473 = vmatpush1.xpose.msra.mxu0 %v2468
      %2474 = vmatprep.subr.mxu0 0.0
      %2475 = vmatpush1.xpose.msra.mxu0 0.0
      %2476 = vmatprep.subr.mxu0 0.0
      %2477 = vmatpush1.xpose.msra.mxu0 0.0
      %2478 = vmatprep.subr.mxu0 0.0
      %2479 = vmatpush1.xpose.msra.mxu0 0.0
      %2480 = vmatprep.subr.mxu0 0.0
      %2481 = vmatpush1.xpose.msra.mxu0 0.0
      %2482 = vmatprep.subr.mxu0 0.0
      %2483 = vmatpush1.xpose.msra.mxu0 0.0
      %2484 = vmatprep.subr.mxu0 0.0
      %2485 = vmatpush1.xpose.msra.mxu0 0.0
      %2486 = vmatprep.subr.mxu0 0.0
      %2487 = vmatpush1.xpose.msra.mxu0 0.0
      %2488 = vmatprep.subr.mxu0 0.0
      %2489 = vmatpush1.xpose.msra.mxu0 0.0
      %2490 = vmatprep.subr.mxu0 0.0
      %2491 = vmatpush1.xpose.msra.mxu0 0.0
      %2492 = vmatprep.subr.mxu0 0.0
      %2493 = vmatpush1.xpose.msra.mxu0 0.0
      %2494 = vmatprep.subr.mxu0 0.0
      %2495 = vmatpush1.xpose.msra.mxu0 0.0
      %2496 = vmatprep.subr.mxu0 0.0
      %2497 = vmatpush1.xpose.msra.mxu0 0.0
      %2498 = vmatprep.subr.mxu0 0.0
      %2499 = vmatpush1.xpose.msra.mxu0 0.0
      %2500 = vmatprep.subr.mxu0 0.0
      %2501 = vmatpush1.xpose.msra.mxu0 0.0
      %2502 = vmatprep.subr.mxu0 0.0
      %2503 = vmatpush1.xpose.msra.mxu0 0.0
      %2504 = vmatprep.subr.mxu0 0.0
      %2505 = vmatpush1.xpose.msra.mxu0 0.0
      %2506 = vmatprep.subr.mxu0 0.0
      %2507 = vmatpush1.xpose.msra.mxu0 0.0
      %2508 = vmatprep.subr.mxu0 0.0
      %2509 = vmatpush1.xpose.msra.mxu0 0.0
      %2510 = vmatprep.subr.mxu0 0.0
      %2511 = vmatpush1.xpose.msra.mxu0 0.0
      %2512 = vmatprep.subr.mxu0 0.0
      %2513 = vmatpush1.xpose.msra.mxu0 0.0
      %2514 = vmatprep.subr.mxu0 0.0
      %2515 = vmatpush1.xpose.msra.mxu0 0.0
      %2516 = vmatprep.subr.mxu0 0.0
      %2517 = vmatpush1.xpose.msra.mxu0 0.0
      %2518 = vmatprep.subr.mxu0 0.0
      %2519 = vmatpush1.xpose.msra.mxu0 0.0
      %2520 = vmatprep.subr.mxu0 0.0
      %2521 = vmatpush1.xpose.msra.mxu0 0.0
      %2522 = vmatprep.subr.mxu0 0.0
      %2523 = vmatpush1.xpose.msra.mxu0 0.0
      %2524 = vmatprep.subr.mxu0 0.0
      %2525 = vmatpush1.xpose.msra.mxu0 0.0
      %2526 = vmatprep.subr.mxu0 0.0
      %2527 = vmatpush1.xpose.msra.mxu0 0.0
      %2528 = vmatprep.subr.mxu0 0.0
      %2529 = vmatpush1.xpose.msra.mxu0 0.0
      %2530 = vmatprep.subr.mxu0 0.0
      %2531 = vmatpush1.xpose.msra.mxu0 0.0
      %2532 = vmatprep.subr.mxu0 0.0
      %2533 = vmatpush1.xpose.msra.mxu0 0.0
      %2534 = vmatprep.mubr.f32.mxu0 0.0
      %2535 = vmatmul.mubr.f32.gmra.mrb[0].mxu0 %v2462
      %v2536 = vpop.f32.mrb[0].mxu0
      %v2537 = vadd.f32 0.0, %v2536
      %v2538 = vpop.f32.mrb[0].mxu0
      %2539 = vmatprep.mubr.f32.mxu0 0.0
      %2540 = vmatmul.mubr.f32.gmra.mrb[0].mxu0 %v2464
      %v2541 = vpop.f32.mrb[0].mxu0
      %v2542 = vadd.f32 0.0, %v2541
      %v2543 = vpop.f32.mrb[0].mxu0
      %2544 = vdwg.mxu0
      %v2545 = vmul.f32 %v2537, 0.35355338
      %v2546 = vmul.f32 %v2542, 0.35355338
      %v2547 = vsel %vm552, %v2545, -1e+30
      %v2548 = vsel %vm553, %v2546, -1e+30
      %v2549 = vsel %vm790, %v2547, -inf
      %2550 = vmax.xlane.f32.xlu0 %v2549
      %v2551 = vpop.xlane.xlu0 %2550
      %v2552 = vsel %vm790, %v2548, -inf
      %2553 = vmax.xlane.f32.xlu0 %v2552
      %v2554 = vpop.xlane.xlu0 %2553
      %v2555 = vsub.f32 %v2547, %v2551
      %v2556 = vsub.f32 %v2548, %v2554
      %v2557 = vmul.f32 %v2555, 1.442695
      %v2558 = vpow.pop %v2557
      %v2559 = vmul.f32 %v2556, 1.442695
      %v2560 = vpow.pop %v2559
      %v2561 = vsel %vm790, %v2558, 0.0
      %2562 = vadd.xlane.f32.xlu0 %v2561
      %v2563 = vpop.xlane.xlu0 %2562
      %v2564 = vsel %vm790, %v2560, 0.0
      %2565 = vadd.xlane.f32.xlu0 %v2564
      %v2566 = vpop.xlane.xlu0 %2565
      %v2567 = vrcp.pop %v2563
      %v2568 = vrcp.pop %v2566
      %v2569 = vmul.f32 %v2558, %v2567
      %v2570 = vmul.f32 %v2560, %v2568
      %2571 = vrot.lane.b32.xlu0 %v2239, 56
      %v2572 = vpop.permute.xlu0 %2571
      %2573 = vrot.lane.b32.xlu0 %v2244, 56
      %v2574 = vpop.permute.xlu0 %2573
      %v2578 = vsel %vm790, %v2569, 0
      %v2581 = vsel %vm790, %v2570, 0
      %2583 = vmatprep.subr.mxu0 0.0
      %2584 = vmatpush1.msra.mxu0 %v2572
      %2585 = vmatprep.subr.mxu0 0.0
      %2586 = vmatpush1.msra.mxu0 %v2574
      %2587 = vmatprep.subr.mxu0 0.0
      %2588 = vmatpush1.msra.mxu0 0.0
      %2589 = vmatprep.subr.mxu0 0.0
      %2590 = vmatpush1.msra.mxu0 0.0
      %2591 = vmatprep.subr.mxu0 0.0
      %2592 = vmatpush1.msra.mxu0 0.0
      %2593 = vmatprep.subr.mxu0 0.0
      %2594 = vmatpush1.msra.mxu0 0.0
      %2595 = vmatprep.subr.mxu0 0.0
      %2596 = vmatpush1.msra.mxu0 0.0
      %2597 = vmatprep.subr.mxu0 0.0
      %2598 = vmatpush1.msra.mxu0 0.0
      %2599 = vmatprep.subr.mxu0 0.0
      %2600 = vmatpush1.msra.mxu0 0.0
      %2601 = vmatprep.subr.mxu0 0.0
      %2602 = vmatpush1.msra.mxu0 0.0
      %2603 = vmatprep.subr.mxu0 0.0
      %2604 = vmatpush1.msra.mxu0 0.0
      %2605 = vmatprep.subr.mxu0 0.0
      %2606 = vmatpush1.msra.mxu0 0.0
      %2607 = vmatprep.subr.mxu0 0.0
      %2608 = vmatpush1.msra.mxu0 0.0
      %2609 = vmatprep.subr.mxu0 0.0
      %2610 = vmatpush1.msra.mxu0 0.0
      %2611 = vmatprep.subr.mxu0 0.0
      %2612 = vmatpush1.msra.mxu0 0.0
      %2613 = vmatprep.subr.mxu0 0.0
      %2614 = vmatpush1.msra.mxu0 0.0
      %2615 = vmatprep.subr.mxu0 0.0
      %2616 = vmatpush1.msra.mxu0 0.0
      %2617 = vmatprep.subr.mxu0 0.0
      %2618 = vmatpush1.msra.mxu0 0.0
      %2619 = vmatprep.subr.mxu0 0.0
      %2620 = vmatpush1.msra.mxu0 0.0
      %2621 = vmatprep.subr.mxu0 0.0
      %2622 = vmatpush1.msra.mxu0 0.0
      %2623 = vmatprep.subr.mxu0 0.0
      %2624 = vmatpush1.msra.mxu0 0.0
      %2625 = vmatprep.subr.mxu0 0.0
      %2626 = vmatpush1.msra.mxu0 0.0
      %2627 = vmatprep.subr.mxu0 0.0
      %2628 = vmatpush1.msra.mxu0 0.0
      %2629 = vmatprep.subr.mxu0 0.0
      %2630 = vmatpush1.msra.mxu0 0.0
      %2631 = vmatprep.subr.mxu0 0.0
      %2632 = vmatpush1.msra.mxu0 0.0
      %2633 = vmatprep.subr.mxu0 0.0
      %2634 = vmatpush1.msra.mxu0 0.0
      %2635 = vmatprep.subr.mxu0 0.0
      %2636 = vmatpush1.msra.mxu0 0.0
      %2637 = vmatprep.subr.mxu0 0.0
      %2638 = vmatpush1.msra.mxu0 0.0
      %2639 = vmatprep.subr.mxu0 0.0
      %2640 = vmatpush1.msra.mxu0 0.0
      %2641 = vmatprep.subr.mxu0 0.0
      %2642 = vmatpush1.msra.mxu0 0.0
      %2643 = vmatprep.subr.mxu0 0.0
      %2644 = vmatpush1.msra.mxu0 0.0
      %2645 = vmatprep.subr.mxu0 0.0
      %2646 = vmatpush1.msra.mxu0 0.0
      %2647 = vmatprep.mubr.f32.mxu0 0.0
      %2648 = vmatmul.mubr.f32.gmra.mrb[0].mxu0 %v2578
      %v2649 = vpop.f32.mrb[0].mxu0
      %v2650 = vadd.f32 0.0, %v2649
      %v2651 = vpop.f32.mrb[0].mxu0
      %2652 = vmatprep.mubr.f32.mxu0 0.0
      %2653 = vmatmul.mubr.f32.gmra.mrb[0].mxu0 %v2581
      %v2654 = vpop.f32.mrb[0].mxu0
      %v2655 = vadd.f32 0.0, %v2654
      %v2656 = vpop.f32.mrb[0].mxu0
      %2657 = vdwg.mxu0
      %v2659 = vsel %vm702, %v2650, 0
      %v2662 = vsel %vm702, %v2655, 0
      %2664 = vmatprep.subr.mxu0 0.0
      %2665 = vmatpush1.msra.mxu0 %v2249
      %2666 = vmatprep.subr.mxu0 0.0
      %2667 = vmatpush1.msra.mxu0 0.0
      %2668 = vmatprep.subr.mxu0 0.0
      %2669 = vmatpush1.msra.mxu0 0.0
      %2670 = vmatprep.subr.mxu0 0.0
      %2671 = vmatpush1.msra.mxu0 0.0
      %2672 = vmatprep.subr.mxu0 0.0
      %2673 = vmatpush1.msra.mxu0 0.0
      %2674 = vmatprep.subr.mxu0 0.0
      %2675 = vmatpush1.msra.mxu0 0.0
      %2676 = vmatprep.subr.mxu0 0.0
      %2677 = vmatpush1.msra.mxu0 0.0
      %2678 = vmatprep.subr.mxu0 0.0
      %2679 = vmatpush1.msra.mxu0 0.0
      %2680 = vmatprep.subr.mxu0 0.0
      %2681 = vmatpush1.msra.mxu0 0.0
      %2682 = vmatprep.subr.mxu0 0.0
      %2683 = vmatpush1.msra.mxu0 0.0
      %2684 = vmatprep.subr.mxu0 0.0
      %2685 = vmatpush1.msra.mxu0 0.0
      %2686 = vmatprep.subr.mxu0 0.0
      %2687 = vmatpush1.msra.mxu0 0.0
      %2688 = vmatprep.subr.mxu0 0.0
      %2689 = vmatpush1.msra.mxu0 0.0
      %2690 = vmatprep.subr.mxu0 0.0
      %2691 = vmatpush1.msra.mxu0 0.0
      %2692 = vmatprep.subr.mxu0 0.0
      %2693 = vmatpush1.msra.mxu0 0.0
      %2694 = vmatprep.subr.mxu0 0.0
      %2695 = vmatpush1.msra.mxu0 0.0
      %2696 = vmatprep.subr.mxu0 0.0
      %2697 = vmatpush1.msra.mxu0 0.0
      %2698 = vmatprep.subr.mxu0 0.0
      %2699 = vmatpush1.msra.mxu0 0.0
      %2700 = vmatprep.subr.mxu0 0.0
      %2701 = vmatpush1.msra.mxu0 0.0
      %2702 = vmatprep.subr.mxu0 0.0
      %2703 = vmatpush1.msra.mxu0 0.0
      %2704 = vmatprep.subr.mxu0 0.0
      %2705 = vmatpush1.msra.mxu0 0.0
      %2706 = vmatprep.subr.mxu0 0.0
      %2707 = vmatpush1.msra.mxu0 0.0
      %2708 = vmatprep.subr.mxu0 0.0
      %2709 = vmatpush1.msra.mxu0 0.0
      %2710 = vmatprep.subr.mxu0 0.0
      %2711 = vmatpush1.msra.mxu0 0.0
      %2712 = vmatprep.subr.mxu0 0.0
      %2713 = vmatpush1.msra.mxu0 0.0
      %2714 = vmatprep.subr.mxu0 0.0
      %2715 = vmatpush1.msra.mxu0 0.0
      %2716 = vmatprep.subr.mxu0 0.0
      %2717 = vmatpush1.msra.mxu0 0.0
      %2718 = vmatprep.subr.mxu0 0.0
      %2719 = vmatpush1.msra.mxu0 0.0
      %2720 = vmatprep.subr.mxu0 0.0
      %2721 = vmatpush1.msra.mxu0 0.0
      %2722 = vmatprep.subr.mxu0 0.0
      %2723 = vmatpush1.msra.mxu0 0.0
      %2724 = vmatprep.subr.mxu0 0.0
      %2725 = vmatpush1.msra.mxu0 0.0
      %2726 = vmatprep.subr.mxu0 0.0
      %2727 = vmatpush1.msra.mxu0 0.0
      %2728 = vmatprep.mubr.f32.mxu0 0.0
      %2729 = vmatmul.mubr.f32.gmra.mrb[0].mxu0 %v2659
      %v2730 = vpop.f32.mrb[0].mxu0
      %v2731 = vadd.f32 0.0, %v2730
      %v2732 = vpop.f32.mrb[0].mxu0
      %2733 = vmatprep.mubr.f32.mxu0 0.0
      %2734 = vmatmul.mubr.f32.gmra.mrb[0].mxu0 %v2662
      %v2735 = vpop.f32.mrb[0].mxu0
      %v2736 = vadd.f32 0.0, %v2735
      %v2737 = vpop.f32.mrb[0].mxu0
      %2738 = vdwg.mxu0
      %v2740 = vsel %vm702, %v2446, 0
      %v2743 = vsel %vm702, %v2451, 0
      %2745 = vmatprep.subr.mxu0 0.0
      %2746 = vmatpush1.msra.mxu0 %v2248
      %2747 = vmatprep.subr.mxu0 0.0
      %2748 = vmatpush1.msra.mxu0 0.0
      %2749 = vmatprep.subr.mxu0 0.0
      %2750 = vmatpush1.msra.mxu0 0.0
      %2751 = vmatprep.subr.mxu0 0.0
      %2752 = vmatpush1.msra.mxu0 0.0
      %2753 = vmatprep.subr.mxu0 0.0
      %2754 = vmatpush1.msra.mxu0 0.0
      %2755 = vmatprep.subr.mxu0 0.0
      %2756 = vmatpush1.msra.mxu0 0.0
      %2757 = vmatprep.subr.mxu0 0.0
      %2758 = vmatpush1.msra.mxu0 0.0
      %2759 = vmatprep.subr.mxu0 0.0
      %2760 = vmatpush1.msra.mxu0 0.0
      %2761 = vmatprep.subr.mxu0 0.0
      %2762 = vmatpush1.msra.mxu0 0.0
      %2763 = vmatprep.subr.mxu0 0.0
      %2764 = vmatpush1.msra.mxu0 0.0
      %2765 = vmatprep.subr.mxu0 0.0
      %2766 = vmatpush1.msra.mxu0 0.0
      %2767 = vmatprep.subr.mxu0 0.0
      %2768 = vmatpush1.msra.mxu0 0.0
      %2769 = vmatprep.subr.mxu0 0.0
      %2770 = vmatpush1.msra.mxu0 0.0
      %2771 = vmatprep.subr.mxu0 0.0
      %2772 = vmatpush1.msra.mxu0 0.0
      %2773 = vmatprep.subr.mxu0 0.0
      %2774 = vmatpush1.msra.mxu0 0.0
      %2775 = vmatprep.subr.mxu0 0.0
      %2776 = vmatpush1.msra.mxu0 0.0
      %2777 = vmatprep.subr.mxu0 0.0
      %2778 = vmatpush1.msra.mxu0 0.0
      %2779 = vmatprep.subr.mxu0 0.0
      %2780 = vmatpush1.msra.mxu0 0.0
      %2781 = vmatprep.subr.mxu0 0.0
      %2782 = vmatpush1.msra.mxu0 0.0
      %2783 = vmatprep.subr.mxu0 0.0
      %2784 = vmatpush1.msra.mxu0 0.0
      %2785 = vmatprep.subr.mxu0 0.0
      %2786 = vmatpush1.msra.mxu0 0.0
      %2787 = vmatprep.subr.mxu0 0.0
      %2788 = vmatpush1.msra.mxu0 0.0
      %2789 = vmatprep.subr.mxu0 0.0
      %2790 = vmatpush1.msra.mxu0 0.0
      %2791 = vmatprep.subr.mxu0 0.0
      %2792 = vmatpush1.msra.mxu0 0.0
      %2793 = vmatprep.subr.mxu0 0.0
      %2794 = vmatpush1.msra.mxu0 0.0
      %2795 = vmatprep.subr.mxu0 0.0
      %2796 = vmatpush1.msra.mxu0 0.0
      %2797 = vmatprep.subr.mxu0 0.0
      %2798 = vmatpush1.msra.mxu0 0.0
      %2799 = vmatprep.subr.mxu0 0.0
      %2800 = vmatpush1.msra.mxu0 0.0
      %2801 = vmatprep.subr.mxu0 0.0
      %2802 = vmatpush1.msra.mxu0 0.0
      %2803 = vmatprep.subr.mxu0 0.0
      %2804 = vmatpush1.msra.mxu0 0.0
      %2805 = vmatprep.subr.mxu0 0.0
      %2806 = vmatpush1.msra.mxu0 0.0
      %2807 = vmatprep.subr.mxu0 0.0
      %2808 = vmatpush1.msra.mxu0 0.0
      %2809 = vmatprep.mubr.f32.mxu0 0.0
      %2810 = vmatmul.mubr.f32.gmra.mrb[0].mxu0 %v2740
      %v2811 = vpop.f32.mrb[0].mxu0
      %v2812 = vadd.f32 %v2731, %v2811
      %v2813 = vpop.f32.mrb[0].mxu0
      %2814 = vmatprep.mubr.f32.mxu0 0.0
      %2815 = vmatmul.mubr.f32.gmra.mrb[0].mxu0 %v2743
      %v2816 = vpop.f32.mrb[0].mxu0
      %v2817 = vadd.f32 %v2736, %v2816
      %v2818 = vpop.f32.mrb[0].mxu0
      %2819 = vdwg.mxu0
      %2820 = vrot.lane.b32.xlu0 %v2239, 112
      %v2821 = vpop.permute.xlu0 %2820
      %2822 = vrot.lane.b32.xlu0 %v2244, 112
      %v2823 = vpop.permute.xlu0 %2822
      %2824 = vrot.lane.b32.xlu0 %v2239, 80
      %v2825 = vpop.permute.xlu0 %2824
      %2826 = vrot.lane.b32.xlu0 %v2244, 80
      %v2827 = vpop.permute.xlu0 %2826
      %v2828 = vsel %vm702, %v2821, 0
      %v2830 = vsel %vm702, %v2823, 0
      %v2832 = vsel %vm702, %v2825, 0
      %v2834 = vsel %vm702, %v2827, 0
      %2836 = vmatprep.subr.mxu0 0.0
      %2837 = vmatpush1.xpose.msra.mxu0 %v2832
      %2838 = vmatprep.subr.mxu0 0.0
      %2839 = vmatpush1.xpose.msra.mxu0 %v2834
      %2840 = vmatprep.subr.mxu0 0.0
      %2841 = vmatpush1.xpose.msra.mxu0 0.0
      %2842 = vmatprep.subr.mxu0 0.0
      %2843 = vmatpush1.xpose.msra.mxu0 0.0
      %2844 = vmatprep.subr.mxu0 0.0
      %2845 = vmatpush1.xpose.msra.mxu0 0.0
      %2846 = vmatprep.subr.mxu0 0.0
      %2847 = vmatpush1.xpose.msra.mxu0 0.0
      %2848 = vmatprep.subr.mxu0 0.0
      %2849 = vmatpush1.xpose.msra.mxu0 0.0
      %2850 = vmatprep.subr.mxu0 0.0
      %2851 = vmatpush1.xpose.msra.mxu0 0.0
      %2852 = vmatprep.subr.mxu0 0.0
      %2853 = vmatpush1.xpose.msra.mxu0 0.0
      %2854 = vmatprep.subr.mxu0 0.0
      %2855 = vmatpush1.xpose.msra.mxu0 0.0
      %2856 = vmatprep.subr.mxu0 0.0
      %2857 = vmatpush1.xpose.msra.mxu0 0.0
      %2858 = vmatprep.subr.mxu0 0.0
      %2859 = vmatpush1.xpose.msra.mxu0 0.0
      %2860 = vmatprep.subr.mxu0 0.0
      %2861 = vmatpush1.xpose.msra.mxu0 0.0
      %2862 = vmatprep.subr.mxu0 0.0
      %2863 = vmatpush1.xpose.msra.mxu0 0.0
      %2864 = vmatprep.subr.mxu0 0.0
      %2865 = vmatpush1.xpose.msra.mxu0 0.0
      %2866 = vmatprep.subr.mxu0 0.0
      %2867 = vmatpush1.xpose.msra.mxu0 0.0
      %2868 = vmatprep.subr.mxu0 0.0
      %2869 = vmatpush1.xpose.msra.mxu0 0.0
      %2870 = vmatprep.subr.mxu0 0.0
      %2871 = vmatpush1.xpose.msra.mxu0 0.0
      %2872 = vmatprep.subr.mxu0 0.0
      %2873 = vmatpush1.xpose.msra.mxu0 0.0
      %2874 = vmatprep.subr.mxu0 0.0
      %2875 = vmatpush1.xpose.msra.mxu0 0.0
      %2876 = vmatprep.subr.mxu0 0.0
      %2877 = vmatpush1.xpose.msra.mxu0 0.0
      %2878 = vmatprep.subr.mxu0 0.0
      %2879 = vmatpush1.xpose.msra.mxu0 0.0
      %2880 = vmatprep.subr.mxu0 0.0
      %2881 = vmatpush1.xpose.msra.mxu0 0.0
      %2882 = vmatprep.subr.mxu0 0.0
      %2883 = vmatpush1.xpose.msra.mxu0 0.0
      %2884 = vmatprep.subr.mxu0 0.0
      %2885 = vmatpush1.xpose.msra.mxu0 0.0
      %2886 = vmatprep.subr.mxu0 0.0
      %2887 = vmatpush1.xpose.msra.mxu0 0.0
      %2888 = vmatprep.subr.mxu0 0.0
      %2889 = vmatpush1.xpose.msra.mxu0 0.0
      %2890 = vmatprep.subr.mxu0 0.0
      %2891 = vmatpush1.xpose.msra.mxu0 0.0
      %2892 = vmatprep.subr.mxu0 0.0
      %2893 = vmatpush1.xpose.msra.mxu0 0.0
      %2894 = vmatprep.subr.mxu0 0.0
      %2895 = vmatpush1.xpose.msra.mxu0 0.0
      %2896 = vmatprep.subr.mxu0 0.0
      %2897 = vmatpush1.xpose.msra.mxu0 0.0
      %2898 = vmatprep.subr.mxu0 0.0
      %2899 = vmatpush1.xpose.msra.mxu0 0.0
      %2900 = vmatprep.mubr.f32.mxu0 0.0
      %2901 = vmatmul.mubr.f32.gmra.mrb[0].mxu0 %v2828
      %v2902 = vpop.f32.mrb[0].mxu0
      %v2903 = vadd.f32 0.0, %v2902
      %v2904 = vpop.f32.mrb[0].mxu0
      %2905 = vmatprep.mubr.f32.mxu0 0.0
      %2906 = vmatmul.mubr.f32.gmra.mrb[0].mxu0 %v2830
      %v2907 = vpop.f32.mrb[0].mxu0
      %v2908 = vadd.f32 0.0, %v2907
      %v2909 = vpop.f32.mrb[0].mxu0
      %2910 = vdwg.mxu0
      %v2911 = vmul.f32 %v2903, 0.35355338
      %v2912 = vmul.f32 %v2908, 0.35355338
      %v2913 = vsel %vm552, %v2911, -1e+30
      %v2914 = vsel %vm553, %v2912, -1e+30
      %v2915 = vsel %vm790, %v2913, -inf
      %2916 = vmax.xlane.f32.xlu0 %v2915
      %v2917 = vpop.xlane.xlu0 %2916
      %v2918 = vsel %vm790, %v2914, -inf
      %2919 = vmax.xlane.f32.xlu0 %v2918
      %v2920 = vpop.xlane.xlu0 %2919
      %v2921 = vsub.f32 %v2913, %v2917
      %v2922 = vsub.f32 %v2914, %v2920
      %v2923 = vmul.f32 %v2921, 1.442695
      %v2924 = vpow.pop %v2923
      %v2925 = vmul.f32 %v2922, 1.442695
      %v2926 = vpow.pop %v2925
      %v2927 = vsel %vm790, %v2924, 0.0
      %2928 = vadd.xlane.f32.xlu0 %v2927
      %v2929 = vpop.xlane.xlu0 %2928
      %v2930 = vsel %vm790, %v2926, 0.0
      %2931 = vadd.xlane.f32.xlu0 %v2930
      %v2932 = vpop.xlane.xlu0 %2931
      %v2933 = vrcp.pop %v2929
      %v2934 = vrcp.pop %v2932
      %v2935 = vmul.f32 %v2924, %v2933
      %v2936 = vmul.f32 %v2926, %v2934
      %2937 = vrot.lane.b32.xlu0 %v2239, 48
      %v2938 = vpop.permute.xlu0 %2937
      %2939 = vrot.lane.b32.xlu0 %v2244, 48
      %v2940 = vpop.permute.xlu0 %2939
      %v2944 = vsel %vm790, %v2935, 0
      %v2947 = vsel %vm790, %v2936, 0
      %2949 = vmatprep.subr.mxu0 0.0
      %2950 = vmatpush1.msra.mxu0 %v2938
      %2951 = vmatprep.subr.mxu0 0.0
      %2952 = vmatpush1.msra.mxu0 %v2940
      %2953 = vmatprep.subr.mxu0 0.0
      %2954 = vmatpush1.msra.mxu0 0.0
      %2955 = vmatprep.subr.mxu0 0.0
      %2956 = vmatpush1.msra.mxu0 0.0
      %2957 = vmatprep.subr.mxu0 0.0
      %2958 = vmatpush1.msra.mxu0 0.0
      %2959 = vmatprep.subr.mxu0 0.0
      %2960 = vmatpush1.msra.mxu0 0.0
      %2961 = vmatprep.subr.mxu0 0.0
      %2962 = vmatpush1.msra.mxu0 0.0
      %2963 = vmatprep.subr.mxu0 0.0
      %2964 = vmatpush1.msra.mxu0 0.0
      %2965 = vmatprep.subr.mxu0 0.0
      %2966 = vmatpush1.msra.mxu0 0.0
      %2967 = vmatprep.subr.mxu0 0.0
      %2968 = vmatpush1.msra.mxu0 0.0
      %2969 = vmatprep.subr.mxu0 0.0
      %2970 = vmatpush1.msra.mxu0 0.0
      %2971 = vmatprep.subr.mxu0 0.0
      %2972 = vmatpush1.msra.mxu0 0.0
      %2973 = vmatprep.subr.mxu0 0.0
      %2974 = vmatpush1.msra.mxu0 0.0
      %2975 = vmatprep.subr.mxu0 0.0
      %2976 = vmatpush1.msra.mxu0 0.0
      %2977 = vmatprep.subr.mxu0 0.0
      %2978 = vmatpush1.msra.mxu0 0.0
      %2979 = vmatprep.subr.mxu0 0.0
      %2980 = vmatpush1.msra.mxu0 0.0
      %2981 = vmatprep.subr.mxu0 0.0
      %2982 = vmatpush1.msra.mxu0 0.0
      %2983 = vmatprep.subr.mxu0 0.0
      %2984 = vmatpush1.msra.mxu0 0.0
      %2985 = vmatprep.subr.mxu0 0.0
      %2986 = vmatpush1.msra.mxu0 0.0
      %2987 = vmatprep.subr.mxu0 0.0
      %2988 = vmatpush1.msra.mxu0 0.0
      %2989 = vmatprep.subr.mxu0 0.0
      %2990 = vmatpush1.msra.mxu0 0.0
      %2991 = vmatprep.subr.mxu0 0.0
      %2992 = vmatpush1.msra.mxu0 0.0
      %2993 = vmatprep.subr.mxu0 0.0
      %2994 = vmatpush1.msra.mxu0 0.0
      %2995 = vmatprep.subr.mxu0 0.0
      %2996 = vmatpush1.msra.mxu0 0.0
      %2997 = vmatprep.subr.mxu0 0.0
      %2998 = vmatpush1.msra.mxu0 0.0
      %2999 = vmatprep.subr.mxu0 0.0
      %3000 = vmatpush1.msra.mxu0 0.0
      %3001 = vmatprep.subr.mxu0 0.0
      %3002 = vmatpush1.msra.mxu0 0.0
      %3003 = vmatprep.subr.mxu0 0.0
      %3004 = vmatpush1.msra.mxu0 0.0
      %3005 = vmatprep.subr.mxu0 0.0
      %3006 = vmatpush1.msra.mxu0 0.0
      %3007 = vmatprep.subr.mxu0 0.0
      %3008 = vmatpush1.msra.mxu0 0.0
      %3009 = vmatprep.subr.mxu0 0.0
      %3010 = vmatpush1.msra.mxu0 0.0
      %3011 = vmatprep.subr.mxu0 0.0
      %3012 = vmatpush1.msra.mxu0 0.0
      %3013 = vmatprep.mubr.f32.mxu0 0.0
      %3014 = vmatmul.mubr.f32.gmra.mrb[0].mxu0 %v2944
      %v3015 = vpop.f32.mrb[0].mxu0
      %v3016 = vadd.f32 0.0, %v3015
      %v3017 = vpop.f32.mrb[0].mxu0
      %3018 = vmatprep.mubr.f32.mxu0 0.0
      %3019 = vmatmul.mubr.f32.gmra.mrb[0].mxu0 %v2947
      %v3020 = vpop.f32.mrb[0].mxu0
      %v3021 = vadd.f32 0.0, %v3020
      %v3022 = vpop.f32.mrb[0].mxu0
      %3023 = vdwg.mxu0
      %v3025 = vsel %vm702, %v3016, 0
      %v3028 = vsel %vm702, %v3021, 0
      %3030 = vmatprep.subr.mxu0 0.0
      %3031 = vmatpush1.msra.mxu0 %v2250
      %3032 = vmatprep.subr.mxu0 0.0
      %3033 = vmatpush1.msra.mxu0 0.0
      %3034 = vmatprep.subr.mxu0 0.0
      %3035 = vmatpush1.msra.mxu0 0.0
      %3036 = vmatprep.subr.mxu0 0.0
      %3037 = vmatpush1.msra.mxu0 0.0
      %3038 = vmatprep.subr.mxu0 0.0
      %3039 = vmatpush1.msra.mxu0 0.0
      %3040 = vmatprep.subr.mxu0 0.0
      %3041 = vmatpush1.msra.mxu0 0.0
      %3042 = vmatprep.subr.mxu0 0.0
      %3043 = vmatpush1.msra.mxu0 0.0
      %3044 = vmatprep.subr.mxu0 0.0
      %3045 = vmatpush1.msra.mxu0 0.0
      %3046 = vmatprep.subr.mxu0 0.0
      %3047 = vmatpush1.msra.mxu0 0.0
      %3048 = vmatprep.subr.mxu0 0.0
      %3049 = vmatpush1.msra.mxu0 0.0
      %3050 = vmatprep.subr.mxu0 0.0
      %3051 = vmatpush1.msra.mxu0 0.0
      %3052 = vmatprep.subr.mxu0 0.0
      %3053 = vmatpush1.msra.mxu0 0.0
      %3054 = vmatprep.subr.mxu0 0.0
      %3055 = vmatpush1.msra.mxu0 0.0
      %3056 = vmatprep.subr.mxu0 0.0
      %3057 = vmatpush1.msra.mxu0 0.0
      %3058 = vmatprep.subr.mxu0 0.0
      %3059 = vmatpush1.msra.mxu0 0.0
      %3060 = vmatprep.subr.mxu0 0.0
      %3061 = vmatpush1.msra.mxu0 0.0
      %3062 = vmatprep.subr.mxu0 0.0
      %3063 = vmatpush1.msra.mxu0 0.0
      %3064 = vmatprep.subr.mxu0 0.0
      %3065 = vmatpush1.msra.mxu0 0.0
      %3066 = vmatprep.subr.mxu0 0.0
      %3067 = vmatpush1.msra.mxu0 0.0
      %3068 = vmatprep.subr.mxu0 0.0
      %3069 = vmatpush1.msra.mxu0 0.0
      %3070 = vmatprep.subr.mxu0 0.0
      %3071 = vmatpush1.msra.mxu0 0.0
      %3072 = vmatprep.subr.mxu0 0.0
      %3073 = vmatpush1.msra.mxu0 0.0
      %3074 = vmatprep.subr.mxu0 0.0
      %3075 = vmatpush1.msra.mxu0 0.0
      %3076 = vmatprep.subr.mxu0 0.0
      %3077 = vmatpush1.msra.mxu0 0.0
      %3078 = vmatprep.subr.mxu0 0.0
      %3079 = vmatpush1.msra.mxu0 0.0
      %3080 = vmatprep.subr.mxu0 0.0
      %3081 = vmatpush1.msra.mxu0 0.0
      %3082 = vmatprep.subr.mxu0 0.0
      %3083 = vmatpush1.msra.mxu0 0.0
      %3084 = vmatprep.subr.mxu0 0.0
      %3085 = vmatpush1.msra.mxu0 0.0
      %3086 = vmatprep.subr.mxu0 0.0
      %3087 = vmatpush1.msra.mxu0 0.0
      %3088 = vmatprep.subr.mxu0 0.0
      %3089 = vmatpush1.msra.mxu0 0.0
      %3090 = vmatprep.subr.mxu0 0.0
      %3091 = vmatpush1.msra.mxu0 0.0
      %3092 = vmatprep.subr.mxu0 0.0
      %3093 = vmatpush1.msra.mxu0 0.0
      %3094 = vmatprep.mubr.f32.mxu0 0.0
      %3095 = vmatmul.mubr.f32.gmra.mrb[0].mxu0 %v3025
      %v3096 = vpop.f32.mrb[0].mxu0
      %v3097 = vadd.f32 0.0, %v3096
      %v3098 = vpop.f32.mrb[0].mxu0
      %3099 = vmatprep.mubr.f32.mxu0 0.0
      %3100 = vmatmul.mubr.f32.gmra.mrb[0].mxu0 %v3028
      %v3101 = vpop.f32.mrb[0].mxu0
      %v3102 = vadd.f32 0.0, %v3101
      %v3103 = vpop.f32.mrb[0].mxu0
      %3104 = vdwg.mxu0
      %v3105 = vadd.f32 %v2812, %v3097
      %v3106 = vadd.f32 %v2817, %v3102
      %3107 = vrot.lane.b32.xlu0 %v2239, 104
      %v3108 = vpop.permute.xlu0 %3107
      %3109 = vrot.lane.b32.xlu0 %v2244, 104
      %v3110 = vpop.permute.xlu0 %3109
      %3111 = vrot.lane.b32.xlu0 %v2239, 72
      %v3112 = vpop.permute.xlu0 %3111
      %3113 = vrot.lane.b32.xlu0 %v2244, 72
      %v3114 = vpop.permute.xlu0 %3113
      %v3115 = vsel %vm702, %v3108, 0
      %v3117 = vsel %vm702, %v3110, 0
      %v3119 = vsel %vm702, %v3112, 0
      %v3121 = vsel %vm702, %v3114, 0
      %3123 = vmatprep.subr.mxu0 0.0
      %3124 = vmatpush1.xpose.msra.mxu0 %v3119
      %3125 = vmatprep.subr.mxu0 0.0
      %3126 = vmatpush1.xpose.msra.mxu0 %v3121
      %3127 = vmatprep.subr.mxu0 0.0
      %3128 = vmatpush1.xpose.msra.mxu0 0.0
      %3129 = vmatprep.subr.mxu0 0.0
      %3130 = vmatpush1.xpose.msra.mxu0 0.0
      %3131 = vmatprep.subr.mxu0 0.0
      %3132 = vmatpush1.xpose.msra.mxu0 0.0
      %3133 = vmatprep.subr.mxu0 0.0
      %3134 = vmatpush1.xpose.msra.mxu0 0.0
      %3135 = vmatprep.subr.mxu0 0.0
      %3136 = vmatpush1.xpose.msra.mxu0 0.0
      %3137 = vmatprep.subr.mxu0 0.0
      %3138 = vmatpush1.xpose.msra.mxu0 0.0
      %3139 = vmatprep.subr.mxu0 0.0
      %3140 = vmatpush1.xpose.msra.mxu0 0.0
      %3141 = vmatprep.subr.mxu0 0.0
      %3142 = vmatpush1.xpose.msra.mxu0 0.0
      %3143 = vmatprep.subr.mxu0 0.0
      %3144 = vmatpush1.xpose.msra.mxu0 0.0
      %3145 = vmatprep.subr.mxu0 0.0
      %3146 = vmatpush1.xpose.msra.mxu0 0.0
      %3147 = vmatprep.subr.mxu0 0.0
      %3148 = vmatpush1.xpose.msra.mxu0 0.0
      %3149 = vmatprep.subr.mxu0 0.0
      %3150 = vmatpush1.xpose.msra.mxu0 0.0
      %3151 = vmatprep.subr.mxu0 0.0
      %3152 = vmatpush1.xpose.msra.mxu0 0.0
      %3153 = vmatprep.subr.mxu0 0.0
      %3154 = vmatpush1.xpose.msra.mxu0 0.0
      %3155 = vmatprep.subr.mxu0 0.0
      %3156 = vmatpush1.xpose.msra.mxu0 0.0
      %3157 = vmatprep.subr.mxu0 0.0
      %3158 = vmatpush1.xpose.msra.mxu0 0.0
      %3159 = vmatprep.subr.mxu0 0.0
      %3160 = vmatpush1.xpose.msra.mxu0 0.0
      %3161 = vmatprep.subr.mxu0 0.0
      %3162 = vmatpush1.xpose.msra.mxu0 0.0
      %3163 = vmatprep.subr.mxu0 0.0
      %3164 = vmatpush1.xpose.msra.mxu0 0.0
      %3165 = vmatprep.subr.mxu0 0.0
      %3166 = vmatpush1.xpose.msra.mxu0 0.0
      %3167 = vmatprep.subr.mxu0 0.0
      %3168 = vmatpush1.xpose.msra.mxu0 0.0
      %3169 = vmatprep.subr.mxu0 0.0
      %3170 = vmatpush1.xpose.msra.mxu0 0.0
      %3171 = vmatprep.subr.mxu0 0.0
      %3172 = vmatpush1.xpose.msra.mxu0 0.0
      %3173 = vmatprep.subr.mxu0 0.0
      %3174 = vmatpush1.xpose.msra.mxu0 0.0
      %3175 = vmatprep.subr.mxu0 0.0
      %3176 = vmatpush1.xpose.msra.mxu0 0.0
      %3177 = vmatprep.subr.mxu0 0.0
      %3178 = vmatpush1.xpose.msra.mxu0 0.0
      %3179 = vmatprep.subr.mxu0 0.0
      %3180 = vmatpush1.xpose.msra.mxu0 0.0
      %3181 = vmatprep.subr.mxu0 0.0
      %3182 = vmatpush1.xpose.msra.mxu0 0.0
      %3183 = vmatprep.subr.mxu0 0.0
      %3184 = vmatpush1.xpose.msra.mxu0 0.0
      %3185 = vmatprep.subr.mxu0 0.0
      %3186 = vmatpush1.xpose.msra.mxu0 0.0
      %3187 = vmatprep.mubr.f32.mxu0 0.0
      %3188 = vmatmul.mubr.f32.gmra.mrb[0].mxu0 %v3115
      %v3189 = vpop.f32.mrb[0].mxu0
      %v3190 = vadd.f32 0.0, %v3189
      %v3191 = vpop.f32.mrb[0].mxu0
      %3192 = vmatprep.mubr.f32.mxu0 0.0
      %3193 = vmatmul.mubr.f32.gmra.mrb[0].mxu0 %v3117
      %v3194 = vpop.f32.mrb[0].mxu0
      %v3195 = vadd.f32 0.0, %v3194
      %v3196 = vpop.f32.mrb[0].mxu0
      %3197 = vdwg.mxu0
      %v3198 = vmul.f32 %v3190, 0.35355338
      %v3199 = vmul.f32 %v3195, 0.35355338
      %v3200 = vsel %vm552, %v3198, -1e+30
      %v3201 = vsel %vm553, %v3199, -1e+30
      %v3202 = vsel %vm790, %v3200, -inf
      %3203 = vmax.xlane.f32.xlu0 %v3202
      %v3204 = vpop.xlane.xlu0 %3203
      %v3205 = vsel %vm790, %v3201, -inf
      %3206 = vmax.xlane.f32.xlu0 %v3205
      %v3207 = vpop.xlane.xlu0 %3206
      %v3208 = vsub.f32 %v3200, %v3204
      %v3209 = vsub.f32 %v3201, %v3207
      %v3210 = vmul.f32 %v3208, 1.442695
      %v3211 = vpow.pop %v3210
      %v3212 = vmul.f32 %v3209, 1.442695
      %v3213 = vpow.pop %v3212
      %v3214 = vsel %vm790, %v3211, 0.0
      %3215 = vadd.xlane.f32.xlu0 %v3214
      %v3216 = vpop.xlane.xlu0 %3215
      %v3217 = vsel %vm790, %v3213, 0.0
      %3218 = vadd.xlane.f32.xlu0 %v3217
      %v3219 = vpop.xlane.xlu0 %3218
      %v3220 = vrcp.pop %v3216
      %v3221 = vrcp.pop %v3219
      %v3222 = vmul.f32 %v3211, %v3220
      %v3223 = vmul.f32 %v3213, %v3221
      %3224 = vrot.lane.b32.xlu0 %v2239, 40
      %v3225 = vpop.permute.xlu0 %3224
      %3226 = vrot.lane.b32.xlu0 %v2244, 40
      %v3227 = vpop.permute.xlu0 %3226
      %v3231 = vsel %vm790, %v3222, 0
      %v3234 = vsel %vm790, %v3223, 0
      %3236 = vmatprep.subr.mxu0 0.0
      %3237 = vmatpush1.msra.mxu0 %v3225
      %3238 = vmatprep.subr.mxu0 0.0
      %3239 = vmatpush1.msra.mxu0 %v3227
      %3240 = vmatprep.subr.mxu0 0.0
      %3241 = vmatpush1.msra.mxu0 0.0
      %3242 = vmatprep.subr.mxu0 0.0
      %3243 = vmatpush1.msra.mxu0 0.0
      %3244 = vmatprep.subr.mxu0 0.0
      %3245 = vmatpush1.msra.mxu0 0.0
      %3246 = vmatprep.subr.mxu0 0.0
      %3247 = vmatpush1.msra.mxu0 0.0
      %3248 = vmatprep.subr.mxu0 0.0
      %3249 = vmatpush1.msra.mxu0 0.0
      %3250 = vmatprep.subr.mxu0 0.0
      %3251 = vmatpush1.msra.mxu0 0.0
      %3252 = vmatprep.subr.mxu0 0.0
      %3253 = vmatpush1.msra.mxu0 0.0
      %3254 = vmatprep.subr.mxu0 0.0
      %3255 = vmatpush1.msra.mxu0 0.0
      %3256 = vmatprep.subr.mxu0 0.0
      %3257 = vmatpush1.msra.mxu0 0.0
      %3258 = vmatprep.subr.mxu0 0.0
      %3259 = vmatpush1.msra.mxu0 0.0
      %3260 = vmatprep.subr.mxu0 0.0
      %3261 = vmatpush1.msra.mxu0 0.0
      %3262 = vmatprep.subr.mxu0 0.0
      %3263 = vmatpush1.msra.mxu0 0.0
      %3264 = vmatprep.subr.mxu0 0.0
      %3265 = vmatpush1.msra.mxu0 0.0
      %3266 = vmatprep.subr.mxu0 0.0
      %3267 = vmatpush1.msra.mxu0 0.0
      %3268 = vmatprep.subr.mxu0 0.0
      %3269 = vmatpush1.msra.mxu0 0.0
      %3270 = vmatprep.subr.mxu0 0.0
      %3271 = vmatpush1.msra.mxu0 0.0
      %3272 = vmatprep.subr.mxu0 0.0
      %3273 = vmatpush1.msra.mxu0 0.0
      %3274 = vmatprep.subr.mxu0 0.0
      %3275 = vmatpush1.msra.mxu0 0.0
      %3276 = vmatprep.subr.mxu0 0.0
      %3277 = vmatpush1.msra.mxu0 0.0
      %3278 = vmatprep.subr.mxu0 0.0
      %3279 = vmatpush1.msra.mxu0 0.0
      %3280 = vmatprep.subr.mxu0 0.0
      %3281 = vmatpush1.msra.mxu0 0.0
      %3282 = vmatprep.subr.mxu0 0.0
      %3283 = vmatpush1.msra.mxu0 0.0
      %3284 = vmatprep.subr.mxu0 0.0
      %3285 = vmatpush1.msra.mxu0 0.0
      %3286 = vmatprep.subr.mxu0 0.0
      %3287 = vmatpush1.msra.mxu0 0.0
      %3288 = vmatprep.subr.mxu0 0.0
      %3289 = vmatpush1.msra.mxu0 0.0
      %3290 = vmatprep.subr.mxu0 0.0
      %3291 = vmatpush1.msra.mxu0 0.0
      %3292 = vmatprep.subr.mxu0 0.0
      %3293 = vmatpush1.msra.mxu0 0.0
      %3294 = vmatprep.subr.mxu0 0.0
      %3295 = vmatpush1.msra.mxu0 0.0
      %3296 = vmatprep.subr.mxu0 0.0
      %3297 = vmatpush1.msra.mxu0 0.0
      %3298 = vmatprep.subr.mxu0 0.0
      %3299 = vmatpush1.msra.mxu0 0.0
      %3300 = vmatprep.mubr.f32.mxu0 0.0
      %3301 = vmatmul.mubr.f32.gmra.mrb[0].mxu0 %v3231
      %v3302 = vpop.f32.mrb[0].mxu0
      %v3303 = vadd.f32 0.0, %v3302
      %v3304 = vpop.f32.mrb[0].mxu0
      %3305 = vmatprep.mubr.f32.mxu0 0.0
      %3306 = vmatmul.mubr.f32.gmra.mrb[0].mxu0 %v3234
      %v3307 = vpop.f32.mrb[0].mxu0
      %v3308 = vadd.f32 0.0, %v3307
      %v3309 = vpop.f32.mrb[0].mxu0
      %3310 = vdwg.mxu0
      %v3312 = vsel %vm702, %v3303, 0
      %v3315 = vsel %vm702, %v3308, 0
      %3317 = vmatprep.subr.mxu0 0.0
      %3318 = vmatpush1.msra.mxu0 %v2251
      %3319 = vmatprep.subr.mxu0 0.0
      %3320 = vmatpush1.msra.mxu0 0.0
      %3321 = vmatprep.subr.mxu0 0.0
      %3322 = vmatpush1.msra.mxu0 0.0
      %3323 = vmatprep.subr.mxu0 0.0
      %3324 = vmatpush1.msra.mxu0 0.0
      %3325 = vmatprep.subr.mxu0 0.0
      %3326 = vmatpush1.msra.mxu0 0.0
      %3327 = vmatprep.subr.mxu0 0.0
      %3328 = vmatpush1.msra.mxu0 0.0
      %3329 = vmatprep.subr.mxu0 0.0
      %3330 = vmatpush1.msra.mxu0 0.0
      %3331 = vmatprep.subr.mxu0 0.0
      %3332 = vmatpush1.msra.mxu0 0.0
      %3333 = vmatprep.subr.mxu0 0.0
      %3334 = vmatpush1.msra.mxu0 0.0
      %3335 = vmatprep.subr.mxu0 0.0
      %3336 = vmatpush1.msra.mxu0 0.0
      %3337 = vmatprep.subr.mxu0 0.0
      %3338 = vmatpush1.msra.mxu0 0.0
      %3339 = vmatprep.subr.mxu0 0.0
      %3340 = vmatpush1.msra.mxu0 0.0
      %3341 = vmatprep.subr.mxu0 0.0
      %3342 = vmatpush1.msra.mxu0 0.0
      %3343 = vmatprep.subr.mxu0 0.0
      %3344 = vmatpush1.msra.mxu0 0.0
      %3345 = vmatprep.subr.mxu0 0.0
      %3346 = vmatpush1.msra.mxu0 0.0
      %3347 = vmatprep.subr.mxu0 0.0
      %3348 = vmatpush1.msra.mxu0 0.0
      %3349 = vmatprep.subr.mxu0 0.0
      %3350 = vmatpush1.msra.mxu0 0.0
      %3351 = vmatprep.subr.mxu0 0.0
      %3352 = vmatpush1.msra.mxu0 0.0
      %3353 = vmatprep.subr.mxu0 0.0
      %3354 = vmatpush1.msra.mxu0 0.0
      %3355 = vmatprep.subr.mxu0 0.0
      %3356 = vmatpush1.msra.mxu0 0.0
      %3357 = vmatprep.subr.mxu0 0.0
      %3358 = vmatpush1.msra.mxu0 0.0
      %3359 = vmatprep.subr.mxu0 0.0
      %3360 = vmatpush1.msra.mxu0 0.0
      %3361 = vmatprep.subr.mxu0 0.0
      %3362 = vmatpush1.msra.mxu0 0.0
      %3363 = vmatprep.subr.mxu0 0.0
      %3364 = vmatpush1.msra.mxu0 0.0
      %3365 = vmatprep.subr.mxu0 0.0
      %3366 = vmatpush1.msra.mxu0 0.0
      %3367 = vmatprep.subr.mxu0 0.0
      %3368 = vmatpush1.msra.mxu0 0.0
      %3369 = vmatprep.subr.mxu0 0.0
      %3370 = vmatpush1.msra.mxu0 0.0
      %3371 = vmatprep.subr.mxu0 0.0
      %3372 = vmatpush1.msra.mxu0 0.0
      %3373 = vmatprep.subr.mxu0 0.0
      %3374 = vmatpush1.msra.mxu0 0.0
      %3375 = vmatprep.subr.mxu0 0.0
      %3376 = vmatpush1.msra.mxu0 0.0
      %3377 = vmatprep.subr.mxu0 0.0
      %3378 = vmatpush1.msra.mxu0 0.0
      %3379 = vmatprep.subr.mxu0 0.0
      %3380 = vmatpush1.msra.mxu0 0.0
      %3381 = vmatprep.mubr.f32.mxu0 0.0
      %3382 = vmatmul.mubr.f32.gmra.mrb[0].mxu0 %v3312
      %v3383 = vpop.f32.mrb[0].mxu0
      %v3384 = vadd.f32 0.0, %v3383
      %v3385 = vpop.f32.mrb[0].mxu0
      %3386 = vmatprep.mubr.f32.mxu0 0.0
      %3387 = vmatmul.mubr.f32.gmra.mrb[0].mxu0 %v3315
      %v3388 = vpop.f32.mrb[0].mxu0
      %v3389 = vadd.f32 0.0, %v3388
      %v3390 = vpop.f32.mrb[0].mxu0
      %3391 = vdwg.mxu0
      %v3392 = vadd.f32 %v3105, %v3384
      %v3393 = vadd.f32 %v3106, %v3389
      %v3394 = vadd.f32 %v2105, %v3392
      %v3395 = vadd.f32 %v2106, %v3393
      %s3396 = scalar_lea.vmem %s7, 1
      %v3397 = vld [vmem:[%s3396] sm:$0x1]
      %v3399 = vlaneseq
      %v3400 = vshrl.u32 %v3399, 7
      %v3401 = vsub.s32 0, %v3400
      %v3402 = vrot.slane %v3397, %v3401
      %v3404 = vadd.f32 %v3394, %v3402
      %v3405 = vadd.f32 %v3395, %v3402
      %s3406 = scalar_lea.vmem %s8, 1
      %v3407 = vld [vmem:[%s3406] sm:$0x1]
      %s3408 = scalar_lea.vmem %s9, 1
      %v3409 = vld [vmem:[%s3408] sm:$0x1]
      %v3410 = vsel %vm556, %v3404, 0.0
      %3411 = vadd.xlane.f32.xlu0 %v3410
      %v3412 = vpop.xlane.xlu0 %3411
      %v3413 = vsel %vm556, %v3405, 0.0
      %3414 = vadd.xlane.f32.xlu0 %v3413
      %v3415 = vpop.xlane.xlu0 %3414
      %v3416 = vmul.f32 %v3412, %v563
      %v3417 = vmul.f32 %v3415, %v563
      %v3418 = vsub.f32 %v3404, %v3416
      %v3419 = vsub.f32 %v3405, %v3417
      %v3420 = vmul.f32 %v3418, %v3418
      %v3421 = vmul.f32 %v3419, %v3419
      %v3422 = vsel %vm556, %v3420, 0.0
      %3423 = vadd.xlane.f32.xlu0 %v3422
      %v3424 = vpop.xlane.xlu0 %3423
      %v3425 = vsel %vm556, %v3421, 0.0
      %3426 = vadd.xlane.f32.xlu0 %v3425
      %v3427 = vpop.xlane.xlu0 %3426
      %v3428 = vmul.f32 %v3424, %v563
      %v3429 = vmul.f32 %v3427, %v563
      %v3430 = vadd.f32 %v3428, 1e-05
      %v3431 = vadd.f32 %v3429, 1e-05
      %v3432 = vrsqrt.pop %v3430
      %v3433 = vrsqrt.pop %v3431
      %v3434 = vmul.f32 %v3418, %v3432
      %v3435 = vmul.f32 %v3419, %v3433
      %v3437 = vlaneseq
      %v3438 = vshrl.u32 %v3437, 7
      %v3439 = vsub.s32 0, %v3438
      %v3440 = vrot.slane %v3407, %v3439
      %v3442 = vmul.f32 %v3434, %v3440
      %v3443 = vmul.f32 %v3435, %v3440
      %v3445 = vlaneseq
      %v3446 = vshrl.u32 %v3445, 7
      %v3447 = vsub.s32 0, %v3446
      %v3448 = vrot.slane %v3409, %v3447
      %v3450 = vadd.f32 %v3442, %v3448
      %v3451 = vadd.f32 %v3443, %v3448
      %s3452 = scalar_lea.vmem %s10, 32
      %v3453 = vld [vmem:[%s3452] sm:$0xff]
      %v3454 = vld [vmem:[%s3452 + $0x8] sm:$0xff]
      %v3455 = vld [vmem:[%s3452 + $0x10] sm:$0xff]
      %v3456 = vld [vmem:[%s3452 + $0x18] sm:$0xff]
      %s3457 = scalar_lea.vmem %s11, 1
      %v3458 = vld [vmem:[%s3457] sm:$0x1]
      %v3460 = vlaneseq
      %v3461 = vshrl.u32 %v3460, 7
      %v3462 = vsub.s32 0, %v3461
      %v3463 = vrot.slane %v3458, %v3462
      %v3466 = vsel %vm556, %v3450, 0
      %v3469 = vsel %vm556, %v3451, 0
      %3471 = vmatprep.subr.mxu0 0.0
      %3472 = vmatpush1.msra.mxu0 %v3453
      %3473 = vmatprep.subr.mxu0 0.0
      %3474 = vmatpush1.msra.mxu0 %v3454
      %3475 = vmatprep.subr.mxu0 0.0
      %3476 = vmatpush1.msra.mxu0 %v3455
      %3477 = vmatprep.subr.mxu0 0.0
      %3478 = vmatpush1.msra.mxu0 %v3456
      %3479 = vmatprep.subr.mxu0 0.0
      %3480 = vmatpush1.msra.mxu0 0.0
      %3481 = vmatprep.subr.mxu0 0.0
      %3482 = vmatpush1.msra.mxu0 0.0
      %3483 = vmatprep.subr.mxu0 0.0
      %3484 = vmatpush1.msra.mxu0 0.0
      %3485 = vmatprep.subr.mxu0 0.0
      %3486 = vmatpush1.msra.mxu0 0.0
      %3487 = vmatprep.subr.mxu0 0.0
      %3488 = vmatpush1.msra.mxu0 0.0
      %3489 = vmatprep.subr.mxu0 0.0
      %3490 = vmatpush1.msra.mxu0 0.0
      %3491 = vmatprep.subr.mxu0 0.0
      %3492 = vmatpush1.msra.mxu0 0.0
      %3493 = vmatprep.subr.mxu0 0.0
      %3494 = vmatpush1.msra.mxu0 0.0
      %3495 = vmatprep.subr.mxu0 0.0
      %3496 = vmatpush1.msra.mxu0 0.0
      %3497 = vmatprep.subr.mxu0 0.0
      %3498 = vmatpush1.msra.mxu0 0.0
      %3499 = vmatprep.subr.mxu0 0.0
      %3500 = vmatpush1.msra.mxu0 0.0
      %3501 = vmatprep.subr.mxu0 0.0
      %3502 = vmatpush1.msra.mxu0 0.0
      %3503 = vmatprep.subr.mxu0 0.0
      %3504 = vmatpush1.msra.mxu0 0.0
      %3505 = vmatprep.subr.mxu0 0.0
      %3506 = vmatpush1.msra.mxu0 0.0
      %3507 = vmatprep.subr.mxu0 0.0
      %3508 = vmatpush1.msra.mxu0 0.0
      %3509 = vmatprep.subr.mxu0 0.0
      %3510 = vmatpush1.msra.mxu0 0.0
      %3511 = vmatprep.subr.mxu0 0.0
      %3512 = vmatpush1.msra.mxu0 0.0
      %3513 = vmatprep.subr.mxu0 0.0
      %3514 = vmatpush1.msra.mxu0 0.0
      %3515 = vmatprep.subr.mxu0 0.0
      %3516 = vmatpush1.msra.mxu0 0.0
      %3517 = vmatprep.subr.mxu0 0.0
      %3518 = vmatpush1.msra.mxu0 0.0
      %3519 = vmatprep.subr.mxu0 0.0
      %3520 = vmatpush1.msra.mxu0 0.0
      %3521 = vmatprep.subr.mxu0 0.0
      %3522 = vmatpush1.msra.mxu0 0.0
      %3523 = vmatprep.subr.mxu0 0.0
      %3524 = vmatpush1.msra.mxu0 0.0
      %3525 = vmatprep.subr.mxu0 0.0
      %3526 = vmatpush1.msra.mxu0 0.0
      %3527 = vmatprep.subr.mxu0 0.0
      %3528 = vmatpush1.msra.mxu0 0.0
      %3529 = vmatprep.subr.mxu0 0.0
      %3530 = vmatpush1.msra.mxu0 0.0
      %3531 = vmatprep.subr.mxu0 0.0
      %3532 = vmatpush1.msra.mxu0 0.0
      %3533 = vmatprep.subr.mxu0 0.0
      %3534 = vmatpush1.msra.mxu0 0.0
      %3535 = vmatprep.mubr.f32.mxu0 0.0
      %3536 = vmatmul.mubr.f32.gmra.mrb[0].mxu0 %v3466
      %v3537 = vpop.f32.mrb[0].mxu0
      %v3538 = vadd.f32 %v3463, %v3537
      %v3539 = vpop.f32.mrb[0].mxu0
      %3540 = vmatprep.mubr.f32.mxu0 0.0
      %3541 = vmatmul.mubr.f32.gmra.mrb[0].mxu0 %v3469
      %v3542 = vpop.f32.mrb[0].mxu0
      %v3543 = vadd.f32 %v3463, %v3542
      %v3544 = vpop.f32.mrb[0].mxu0
      %3545 = vdwg.mxu0
      %v3546 = vmul.f32 %v3538, %v3538
      %v3547 = vmul.f32 %v3543, %v3543
      %v3548 = vmul.f32 %v3538, %v3546
      %v3549 = vmul.f32 %v3543, %v3547
      %v3550 = vmul.f32 %v3548, 0.044715
      %v3551 = vmul.f32 %v3549, 0.044715
      %v3552 = vadd.f32 %v3538, %v3550
      %v3553 = vadd.f32 %v3543, %v3551
      %v3554 = vmul.f32 %v3552, 0.7978846
      %v3555 = vmul.f32 %v3553, 0.7978846
      %v3556 = vtanh.pop %v3554
      %v3557 = vtanh.pop %v3555
      %v3558 = vadd.f32 %v3556, 1.0
      %v3559 = vadd.f32 %v3557, 1.0
      %v3560 = vmul.f32 %v3558, 0.5
      %v3561 = vmul.f32 %v3559, 0.5
      %v3562 = vmul.f32 %v3538, %v3560
      %v3563 = vmul.f32 %v3543, %v3561
      %s3564 = scalar_lea.vmem %s12, 128
      %v3565 = vld [vmem:[%s3564] sm:$0xff]
      %v3566 = vld [vmem:[%s3564 + $0x8] sm:$0xff]
      %v3567 = vld [vmem:[%s3564 + $0x10] sm:$0xff]
      %v3568 = vld [vmem:[%s3564 + $0x18] sm:$0xff]
      %v3569 = vld [vmem:[%s3564 + $0x20] sm:$0xff]
      %v3570 = vld [vmem:[%s3564 + $0x28] sm:$0xff]
      %v3571 = vld [vmem:[%s3564 + $0x30] sm:$0xff]
      %v3572 = vld [vmem:[%s3564 + $0x38] sm:$0xff]
      %v3573 = vld [vmem:[%s3564 + $0x40] sm:$0xff]
      %v3574 = vld [vmem:[%s3564 + $0x48] sm:$0xff]
      %v3575 = vld [vmem:[%s3564 + $0x50] sm:$0xff]
      %v3576 = vld [vmem:[%s3564 + $0x58] sm:$0xff]
      %v3577 = vld [vmem:[%s3564 + $0x60] sm:$0xff]
      %v3578 = vld [vmem:[%s3564 + $0x68] sm:$0xff]
      %v3579 = vld [vmem:[%s3564 + $0x70] sm:$0xff]
      %v3580 = vld [vmem:[%s3564 + $0x78] sm:$0xff]
      %3581 = vmatprep.subr.mxu0 0.0
      %3582 = vmatpush1.msra.mxu0 %v3565
      %3583 = vmatprep.subr.mxu0 0.0
      %3584 = vmatpush1.msra.mxu0 %v3566
      %3585 = vmatprep.subr.mxu0 0.0
      %3586 = vmatpush1.msra.mxu0 %v3567
      %3587 = vmatprep.subr.mxu0 0.0
      %3588 = vmatpush1.msra.mxu0 %v3568
      %3589 = vmatprep.subr.mxu0 0.0
      %3590 = vmatpush1.msra.mxu0 %v3569
      %3591 = vmatprep.subr.mxu0 0.0
      %3592 = vmatpush1.msra.mxu0 %v3570
      %3593 = vmatprep.subr.mxu0 0.0
      %3594 = vmatpush1.msra.mxu0 %v3571
      %3595 = vmatprep.subr.mxu0 0.0
      %3596 = vmatpush1.msra.mxu0 %v3572
      %3597 = vmatprep.subr.mxu0 0.0
      %3598 = vmatpush1.msra.mxu0 %v3573
      %3599 = vmatprep.subr.mxu0 0.0
      %3600 = vmatpush1.msra.mxu0 %v3574
      %3601 = vmatprep.subr.mxu0 0.0
      %3602 = vmatpush1.msra.mxu0 %v3575
      %3603 = vmatprep.subr.mxu0 0.0
      %3604 = vmatpush1.msra.mxu0 %v3576
      %3605 = vmatprep.subr.mxu0 0.0
      %3606 = vmatpush1.msra.mxu0 %v3577
      %3607 = vmatprep.subr.mxu0 0.0
      %3608 = vmatpush1.msra.mxu0 %v3578
      %3609 = vmatprep.subr.mxu0 0.0
      %3610 = vmatpush1.msra.mxu0 %v3579
      %3611 = vmatprep.subr.mxu0 0.0
      %3612 = vmatpush1.msra.mxu0 %v3580
      %3613 = vmatprep.subr.mxu0 0.0
      %3614 = vmatpush1.msra.mxu0 0.0
      %3615 = vmatprep.subr.mxu0 0.0
      %3616 = vmatpush1.msra.mxu0 0.0
      %3617 = vmatprep.subr.mxu0 0.0
      %3618 = vmatpush1.msra.mxu0 0.0
      %3619 = vmatprep.subr.mxu0 0.0
      %3620 = vmatpush1.msra.mxu0 0.0
      %3621 = vmatprep.subr.mxu0 0.0
      %3622 = vmatpush1.msra.mxu0 0.0
      %3623 = vmatprep.subr.mxu0 0.0
      %3624 = vmatpush1.msra.mxu0 0.0
      %3625 = vmatprep.subr.mxu0 0.0
      %3626 = vmatpush1.msra.mxu0 0.0
      %3627 = vmatprep.subr.mxu0 0.0
      %3628 = vmatpush1.msra.mxu0 0.0
      %3629 = vmatprep.subr.mxu0 0.0
      %3630 = vmatpush1.msra.mxu0 0.0
      %3631 = vmatprep.subr.mxu0 0.0
      %3632 = vmatpush1.msra.mxu0 0.0
      %3633 = vmatprep.subr.mxu0 0.0
      %3634 = vmatpush1.msra.mxu0 0.0
      %3635 = vmatprep.subr.mxu0 0.0
      %3636 = vmatpush1.msra.mxu0 0.0
      %3637 = vmatprep.subr.mxu0 0.0
      %3638 = vmatpush1.msra.mxu0 0.0
      %3639 = vmatprep.subr.mxu0 0.0
      %3640 = vmatpush1.msra.mxu0 0.0
      %3641 = vmatprep.subr.mxu0 0.0
      %3642 = vmatpush1.msra.mxu0 0.0
      %3643 = vmatprep.subr.mxu0 0.0
      %3644 = vmatpush1.msra.mxu0 0.0
      %3645 = vmatprep.mubr.f32.mxu0 0.0
      %3646 = vmatmul.mubr.f32.gmra.mrb[0].mxu0 %v3562
      %v3647 = vpop.f32.mrb[0].mxu0
      %v3648 = vadd.f32 0.0, %v3647
      %v3649 = vpop.f32.mrb[0].mxu0
      %3650 = vmatprep.mubr.f32.mxu0 0.0
      %3651 = vmatmul.mubr.f32.gmra.mrb[0].mxu0 %v3563
      %v3652 = vpop.f32.mrb[0].mxu0
      %v3653 = vadd.f32 0.0, %v3652
      %v3654 = vpop.f32.mrb[0].mxu0
      %3655 = vdwg.mxu0
      %v3656 = vadd.f32 %v3404, %v3648
      %v3657 = vadd.f32 %v3405, %v3653
      %s3658 = scalar_lea.vmem %s13, 1
      %v3659 = vld [vmem:[%s3658] sm:$0x1]
      %v3661 = vlaneseq
      %v3662 = vshrl.u32 %v3661, 7
      %v3663 = vsub.s32 0, %v3662
      %v3664 = vrot.slane %v3659, %v3663
      %v3666 = vadd.f32 %v3656, %v3664
      %v3667 = vadd.f32 %v3657, %v3664
      %v3668 = vld [vmem:[%s14] sm:$0x1]
      %v3669 = vld [vmem:[%s15] sm:$0x1]
      %v3670 = vsel %vm556, %v3666, 0.0
      %3671 = vadd.xlane.f32.xlu0 %v3670
      %v3672 = vpop.xlane.xlu0 %3671
      %v3673 = vsel %vm556, %v3667, 0.0
      %3674 = vadd.xlane.f32.xlu0 %v3673
      %v3675 = vpop.xlane.xlu0 %3674
      %v3676 = vmul.f32 %v3672, %v563
      %v3677 = vmul.f32 %v3675, %v563
      %v3678 = vsub.f32 %v3666, %v3676
      %v3679 = vsub.f32 %v3667, %v3677
      %v3680 = vmul.f32 %v3678, %v3678
      %v3681 = vmul.f32 %v3679, %v3679
      %v3682 = vsel %vm556, %v3680, 0.0
      %3683 = vadd.xlane.f32.xlu0 %v3682
      %v3684 = vpop.xlane.xlu0 %3683
      %v3685 = vsel %vm556, %v3681, 0.0
      %3686 = vadd.xlane.f32.xlu0 %v3685
      %v3687 = vpop.xlane.xlu0 %3686
      %v3688 = vmul.f32 %v3684, %v563
      %v3689 = vmul.f32 %v3687, %v563
      %v3690 = vadd.f32 %v3688, 1e-05
      %v3691 = vadd.f32 %v3689, 1e-05
      %v3692 = vrsqrt.pop %v3690
      %v3693 = vrsqrt.pop %v3691
      %v3694 = vmul.f32 %v3678, %v3692
      %v3695 = vmul.f32 %v3679, %v3693
      %v3697 = vlaneseq
      %v3698 = vshrl.u32 %v3697, 7
      %v3699 = vsub.s32 0, %v3698
      %v3700 = vrot.slane %v3668, %v3699
      %v3702 = vmul.f32 %v3694, %v3700
      %v3703 = vmul.f32 %v3695, %v3700
      %v3705 = vlaneseq
      %v3706 = vshrl.u32 %v3705, 7
      %v3707 = vsub.s32 0, %v3706
      %v3708 = vrot.slane %v3669, %v3707
      %v3710 = vadd.f32 %v3702, %v3708
      %v3711 = vadd.f32 %v3703, %v3708
      %v3712 = vld [vmem:[%s1] sm:$0xff]
      %v3713 = vld [vmem:[%s1 + $0x8] sm:$0xff]
      %3715 = vset.pattern.permute.xlu0 0
      %3716 = vperm.xlu0 %3715, %v3712
      %v3717 = vpop.permute.xlu0 %3716
      %3720 = vset.pattern.permute.xlu0 0
      %3721 = vperm.xlu0 %3720, %v3713
      %v3722 = vpop.permute.xlu0 %3721
      %v3724 = vmul.f32 %v3710, %v3717
      %v3725 = vmul.f32 %v3711, %v3722
      %v3726 = vsel %vm556, %v3724, 0.0
      %v3727 = vsel %vm556, %v3725, 0.0
      %v3728 = vadd.f32 %v3726, %v3727
      %v3729 = vrot.slane %v3728, 4
      %v3730 = vadd.f32 %v3728, %v3729
      %v3731 = vrot.slane %v3730, 2
      %v3732 = vadd.f32 %v3730, %v3731
      %v3733 = vrot.slane %v3732, 1
      %v3734 = vadd.f32 %v3732, %v3733
      %v3735 = vld [vmem:[%s16] sm:$0xff]
      %v3736 = vld [vmem:[%s16 + $0x8] sm:$0xff]
      %v3737 = vld [vmem:[%s16 + $0x10] sm:$0xff]
      %v3738 = vld [vmem:[%s16 + $0x18] sm:$0xff]
      %v3740 = vsel %vm556, %v3734, 0
      %3742 = vmatprep.subr.mxu0 0.0
      %3743 = vmatpush1.msra.mxu0 %v3735
      %3744 = vmatprep.subr.mxu0 0.0
      %3745 = vmatpush1.msra.mxu0 %v3736
      %3746 = vmatprep.subr.mxu0 0.0
      %3747 = vmatpush1.msra.mxu0 %v3737
      %3748 = vmatprep.subr.mxu0 0.0
      %3749 = vmatpush1.msra.mxu0 %v3738
      %3750 = vmatprep.subr.mxu0 0.0
      %3751 = vmatpush1.msra.mxu0 0.0
      %3752 = vmatprep.subr.mxu0 0.0
      %3753 = vmatpush1.msra.mxu0 0.0
      %3754 = vmatprep.subr.mxu0 0.0
      %3755 = vmatpush1.msra.mxu0 0.0
      %3756 = vmatprep.subr.mxu0 0.0
      %3757 = vmatpush1.msra.mxu0 0.0
      %3758 = vmatprep.subr.mxu0 0.0
      %3759 = vmatpush1.msra.mxu0 0.0
      %3760 = vmatprep.subr.mxu0 0.0
      %3761 = vmatpush1.msra.mxu0 0.0
      %3762 = vmatprep.subr.mxu0 0.0
      %3763 = vmatpush1.msra.mxu0 0.0
      %3764 = vmatprep.subr.mxu0 0.0
      %3765 = vmatpush1.msra.mxu0 0.0
      %3766 = vmatprep.subr.mxu0 0.0
      %3767 = vmatpush1.msra.mxu0 0.0
      %3768 = vmatprep.subr.mxu0 0.0
      %3769 = vmatpush1.msra.mxu0 0.0
      %3770 = vmatprep.subr.mxu0 0.0
      %3771 = vmatpush1.msra.mxu0 0.0
      %3772 = vmatprep.subr.mxu0 0.0
      %3773 = vmatpush1.msra.mxu0 0.0
      %3774 = vmatprep.subr.mxu0 0.0
      %3775 = vmatpush1.msra.mxu0 0.0
      %3776 = vmatprep.subr.mxu0 0.0
      %3777 = vmatpush1.msra.mxu0 0.0
      %3778 = vmatprep.subr.mxu0 0.0
      %3779 = vmatpush1.msra.mxu0 0.0
      %3780 = vmatprep.subr.mxu0 0.0
      %3781 = vmatpush1.msra.mxu0 0.0
      %3782 = vmatprep.subr.mxu0 0.0
      %3783 = vmatpush1.msra.mxu0 0.0
      %3784 = vmatprep.subr.mxu0 0.0
      %3785 = vmatpush1.msra.mxu0 0.0
      %3786 = vmatprep.subr.mxu0 0.0
      %3787 = vmatpush1.msra.mxu0 0.0
      %3788 = vmatprep.subr.mxu0 0.0
      %3789 = vmatpush1.msra.mxu0 0.0
      %3790 = vmatprep.subr.mxu0 0.0
      %3791 = vmatpush1.msra.mxu0 0.0
      %3792 = vmatprep.subr.mxu0 0.0
      %3793 = vmatpush1.msra.mxu0 0.0
      %3794 = vmatprep.subr.mxu0 0.0
      %3795 = vmatpush1.msra.mxu0 0.0
      %3796 = vmatprep.subr.mxu0 0.0
      %3797 = vmatpush1.msra.mxu0 0.0
      %3798 = vmatprep.subr.mxu0 0.0
      %3799 = vmatpush1.msra.mxu0 0.0
      %3800 = vmatprep.subr.mxu0 0.0
      %3801 = vmatpush1.msra.mxu0 0.0
      %3802 = vmatprep.subr.mxu0 0.0
      %3803 = vmatpush1.msra.mxu0 0.0
      %3804 = vmatprep.subr.mxu0 0.0
      %3805 = vmatpush1.msra.mxu0 0.0
      %3806 = vmatprep.mubr.f32.mxu0 0.0
      %3807 = vmatmul.mubr.f32.gmra.mrb[0].mxu0 %v3740
      %v3808 = vpop.f32.mrb[0].mxu0
      %v3809 = vadd.f32 0.0, %v3808
      %v3810 = vpop.f32.mrb[0].mxu0
      %3811 = vdwg.mxu0
      %3812 = vst [vmem:[%s544] sm:$0x1] %v3809
      %p3813 = scmp.lt.s32.totalorder %s28, 1
      %s3814 = scalar_select %p3813, %s28, 1
      %s3815 = scalar_lea.vmem %s17, %s3814
      // Predicated region
      $region89: #{closed_call.21} parent=87 // pred_check
        %p3816 = pneg %p408
      $region90: #{closed_call.21} parent=87 // pred_check_branch
        %3818 = sbr.rel (%p3816) target = $region92
      $region91: #{closed_call.21} parent=87 // pred_region
        _
      $region92: #{closed_call.21} parent=87 // pred_fallthru
        _
    $region88: #{closed_call.21} parent=5 // pred_fallthru
      _
    %p3819 = scmp.le.s32.totalorder 2, %s23
    // Predicated region
    $region93: #{closed_call.21} parent=5 // pred_check
      %p3820 = pneg %p3819
    $region94: #{closed_call.21} parent=5 // pred_check_branch
      %3822 = sbr.rel (%p3820) target = $region96
    $region95: #{closed_call.21} parent=5 // pred_region
      %s3823 = ssub.s32 %s23, 2
      // Predicated region
      $region97: #{closed_call.21} parent=95 // pred_check
        %p3824 = pneg %p414
      $region98: #{closed_call.21} parent=95 // pred_check_branch
        %3826 = sbr.rel (%p3824) target = $region100
      $region99: #{closed_call.21} parent=95 // pred_region
        %p3827 = scmp.lt.s32.totalorder %s29, 1
        %s3828 = scalar_select %p3827, %s29, 1
        %s3829 = scalar_lea.vmem %s17, %s3828
      $region100: #{closed_call.21} parent=95 // pred_fallthru
        _
    $region96: #{closed_call.21} parent=5 // pred_fallthru
      _
  $region6: #{closed_call.21} parent=0 // loop_footer
    %s27 = sadd.s32 1, %s23
  $region7: #{closed_call.21} parent=0 // loop_footer_branch
    %22 = sbr.rel target = $region3
  $region8: #{closed_call.21} parent=0 // loop_exit
    _

</llo_original>
